<compile_context>
chip_gen: v7x
topology: tpu7x:2x2x1
jax: 0.10.0
libtpu: 0.0.40
codegen_flags: <defaults>
</compile_context>

<pallas_src>
import jax
import jax.numpy as jnp
from jax.experimental import pallas as pl
from jax.experimental.pallas import tpu as pltpu


def output_part_kernel(x_ref, w_ref, b_ref, o_ref, acc_ref):
    # x_ref  : (TN, TK) f32  -- flattened (C*H*W) activation slab, lane-dense
    # w_ref  : (TK, Kp) f32  -- expanded fc weight K-slice (1/HW folded in)
    # b_ref  : (1,  Kp) f32  -- lane-padded bias
    # o_ref  : (TN, Kp) f32  -- lane-dense logits block
    # acc_ref: (TN, Kp) f32  -- accumulator, resident across the K grid axis
    k = pl.program_id(1)

    @pl.when(k == 0)
    def _():
        acc_ref[...] = jnp.zeros_like(acc_ref)

    acc_ref[...] += jnp.dot(x_ref[...], w_ref[...],
                            preferred_element_type=jnp.float32)

    @pl.when(k == pl.num_programs(1) - 1)
    def _():
        o_ref[...] = acc_ref[...] + b_ref[...]


def prepare_fc_params(fc_weight, fc_bias, hw, lane_pad=128):
    """One-time parameter prep (hoisted out of the per-call path).

    Builds W_exp of shape (C*HW, Kp) with W_exp[c*HW + i, k] = fc_weight[k, c]/HW,
    so that  x.reshape(N, C*HW) @ W_exp + b  ==  fc(mean_pool(x)).
    num_classes is padded to a lane-dense Kp (multiple of 128)."""
    num_classes, in_feature = fc_weight.shape
    kp = ((num_classes + lane_pad - 1) // lane_pad) * lane_pad
    w_t = fc_weight.T.astype(jnp.float32) * (1.0 / float(hw))       # (C, K)
    w_exp = jnp.repeat(w_t, hw, axis=0)                             # (C*HW, K)
    w_p = jnp.zeros((in_feature * hw, kp), jnp.float32).at[:, :num_classes].set(w_exp)
    b_p = jnp.zeros((1, kp), jnp.float32).at[0, :num_classes].set(
        fc_bias.astype(jnp.float32))
    return w_p, b_p


def _choose_tk(chw, max_tk=8192):
    """Largest multiple of 128 that exactly divides C*H*W and is <= max_tk.
    Exact divisibility keeps the K reduction free of padded-garbage rows."""
    if chw <= max_tk or chw % 128 != 0:
        return chw                      # single K step; full-dim block is always legal
    best = 128                          # chw % 128 == 0, so 128 always divides it
    for t in range(128, max_tk + 1, 128):
        if chw % t == 0:
            best = t
    return best


def _choose_tn(n, tk, kp, budget_bytes=24 << 20):
    """Batch-tile size: double-buffered f32 x tile + weight K-slice must fit a
    VMEM budget conservative enough for v7x's 64 MiB physical VMEM."""
    w_bytes = 2 * tk * kp * 4
    avail = max(budget_bytes - w_bytes, 4 << 20)
    max_tn = max(8, avail // (2 * tk * 4))
    tn = min(n, 512, max_tn)
    if tn < n:                          # partial blocks must be sublane-aligned
        tn = max(8, (tn // 8) * 8)
    return tn


def output_part_forward(x_nchw, w_p, b_p, num_classes):
    """x_nchw: (N, C, H, W); w_p: (C*H*W, Kp) expanded/prescaled; b_p: (1, Kp)."""
    N, C, H, W = x_nchw.shape
    CHW = C * H * W
    Kp = w_p.shape[1]
    assert w_p.shape[0] == CHW

    # Contiguous NCHW -> (N, C*H*W) is a free view: no transpose, no dtype pass.
    x2d = x_nchw.reshape(N, CHW).astype(jnp.float32)

    TK = _choose_tk(CHW)
    TN = _choose_tn(N, TK, Kp)
    grid = (pl.cdiv(N, TN), pl.cdiv(CHW, TK))

    # Explicit scoped-VMEM budget with headroom for double-buffering.
    x_tile_bytes = TN * TK * 4
    w_tile_bytes = TK * Kp * 4
    vmem_need = (2 * x_tile_bytes + 2 * w_tile_bytes
                 + 3 * (TN * Kp * 4) + 2 * (Kp * 4) + (2 << 20))
    vmem_limit = int(min(max(vmem_need, 8 << 20), 64 << 20))

    out_padded = pl.pallas_call(
        output_part_kernel,
        out_shape=jax.ShapeDtypeStruct((N, Kp), jnp.float32),
        grid_spec=pltpu.PrefetchScalarGridSpec(
            num_scalar_prefetch=0,
            grid=grid,
            in_specs=[
                pl.BlockSpec((TN, TK), lambda i, k: (i, k)),   # activation slab
                pl.BlockSpec((TK, Kp), lambda i, k: (k, 0)),   # expanded weight slice
                pl.BlockSpec((1, Kp), lambda i, k: (0, 0)),    # bias, resident
            ],
            out_specs=pl.BlockSpec((TN, Kp), lambda i, k: (i, 0)),
            scratch_shapes=[pltpu.VMEM((TN, Kp), jnp.float32)],
        ),
        compiler_params=pltpu.CompilerParams(
            dimension_semantics=("parallel", "arbitrary"),   # batch over cores, K reduce
            vmem_limit_bytes=vmem_limit,
        ),
    )(x2d, w_p, b_p)

    return out_padded[:, :num_classes]


if __name__ == "__main__":
    # config = 18  ->  in_feature = 512 (matches the PyTorch module)
    config = 18
    in_feature = 512 if config in (18, 34) else 2048
    num_classes = 10

    N, C, H, W = 2, in_feature, 4, 4

    key = jax.random.PRNGKey(0)
    kx, kw, kb = jax.random.split(key, 3)

    x = jax.random.normal(kx, (N, C, H, W), dtype=jnp.float32)
    bound = 1.0 / (in_feature ** 0.5)
    fc_weight = jax.random.uniform(kw, (num_classes, in_feature),
                                   minval=-bound, maxval=bound, dtype=jnp.float32)
    fc_bias = jax.random.uniform(kb, (num_classes,),
                                 minval=-bound, maxval=bound, dtype=jnp.float32)

    # One-time parameter prep (pool fold + expansion + lane padding).
    w_p, b_p = prepare_fc_params(fc_weight, fc_bias, hw=H * W)

    out = output_part_forward(x, w_p, b_p, num_classes)
    out = jax.block_until_ready(out)

    # Reference: exact f32 adaptive-avg-pool + linear.
    pooled = jnp.mean(x, axis=(2, 3))
    ref = jax.lax.dot(pooled, fc_weight.T,
                      precision=jax.lax.Precision.HIGHEST) + fc_bias

    assert out.shape == (N, num_classes)
    assert jnp.allclose(out, ref, atol=2e-2, rtol=2e-2), "mismatch vs f32 reference"

    print("KERNEL_OK")
</pallas_src>

<mosaic_0001>
module attributes {stable_mosaic.version = 11 : i64} {
  func.func @output_part_kernel(%arg0: i32, %arg1: i32, %arg2: memref<2x8192xf32, #tpu.memory_space<vmem>>, %arg3: memref<8192x128xf32, #tpu.memory_space<vmem>>, %arg4: memref<1x128xf32, #tpu.memory_space<vmem>>, %arg5: memref<2x128xf32, #tpu.memory_space<vmem>>, %arg6: memref<2x128xf32, #tpu.memory_space<vmem>>) attributes {dimension_semantics = [#tpu.dimension_semantics<parallel>, #tpu.dimension_semantics<arbitrary>], iteration_bounds = array<i64: 1, 1>, scalar_prefetch = 0 : i64, scratch_operands = 1 : i64, tpu.core_type = #tpu.core_type<tc>, window_params = [{transform_indices = @transform_0, window_bounds = array<i64: 2, 8192>}, {transform_indices = @transform_1, window_bounds = array<i64: 8192, 128>}, {pipeline_mode = #tpu.pipeline_mode<synchronous>, transform_indices = @transform_2, window_bounds = array<i64: 1, 128>}, {transform_indices = @transform_3, window_bounds = array<i64: 2, 128>}]} {
    %c0_i32 = arith.constant 0 : i32
    %0 = arith.cmpi eq, %arg1, %c0_i32 : i32
    %1 = arith.extui %0 : i1 to i32
    %c0_i32_0 = arith.constant 0 : i32
    %2 = arith.cmpi ne, %1, %c0_i32_0 : i32
    scf.if %2 {
      %cst_10 = arith.constant 0.000000e+00 : f32
      %12 = vector.broadcast %cst_10 : f32 to vector<2x128xf32>
      %c0_11 = arith.constant 0 : index
      %c0_12 = arith.constant 0 : index
      %13 = vector.load %arg6[%c0_11, %c0_12] : memref<2x128xf32, #tpu.memory_space<vmem>>, vector<2x128xf32>
      tpu.vector_store %arg6[%c0_11, %c0_12], %12 {strides = array<i32>} : memref<2x128xf32, #tpu.memory_space<vmem>>, vector<2x128xf32>,
    } else {
    }
    %c0 = arith.constant 0 : index
    %c0_1 = arith.constant 0 : index
    %3 = vector.load %arg6[%c0, %c0_1] : memref<2x128xf32, #tpu.memory_space<vmem>>, vector<2x128xf32>
    %c0_2 = arith.constant 0 : index
    %c0_3 = arith.constant 0 : index
    %4 = vector.load %arg2[%c0_2, %c0_3] : memref<2x8192xf32, #tpu.memory_space<vmem>>, vector<2x8192xf32>
    %c0_4 = arith.constant 0 : index
    %c0_5 = arith.constant 0 : index
    %5 = vector.load %arg3[%c0_4, %c0_5] : memref<8192x128xf32, #tpu.memory_space<vmem>>, vector<8192x128xf32>
    %cst = arith.constant dense<0.000000e+00> : vector<2x128xf32>
    %6 = tpu.matmul %4, %5, %cst {dimension_numbers = #tpu.dot_dimension_numbers<[1], [0], [0], [1], [0, 0, 1, 1], [], []>} : vector<2x8192xf32>, vector<8192x128xf32>, vector<2x128xf32> -> vector<2x128xf32>
    %7 = arith.addf %3, %6 : vector<2x128xf32>
    %c0_6 = arith.constant 0 : index
    %c0_7 = arith.constant 0 : index
    %8 = vector.load %arg6[%c0_6, %c0_7] : memref<2x128xf32, #tpu.memory_space<vmem>>, vector<2x128xf32>
    tpu.vector_store %arg6[%c0_6, %c0_7], %7 {strides = array<i32>} : memref<2x128xf32, #tpu.memory_space<vmem>>, vector<2x128xf32>,
    %c0_i32_8 = arith.constant 0 : i32
    %9 = arith.cmpi eq, %arg1, %c0_i32_8 : i32
    %10 = arith.extui %9 : i1 to i32
    %c0_i32_9 = arith.constant 0 : i32
    %11 = arith.cmpi ne, %10, %c0_i32_9 : i32
    scf.if %11 {
      %c0_10 = arith.constant 0 : index
      %c0_11 = arith.constant 0 : index
      %12 = vector.load %arg6[%c0_10, %c0_11] : memref<2x128xf32, #tpu.memory_space<vmem>>, vector<2x128xf32>
      %c0_12 = arith.constant 0 : index
      %c0_13 = arith.constant 0 : index
      %13 = vector.load %arg4[%c0_12, %c0_13] : memref<1x128xf32, #tpu.memory_space<vmem>>, vector<1x128xf32>
      %14 = vector.broadcast %13 : vector<1x128xf32> to vector<2x128xf32>
      %15 = arith.addf %12, %14 : vector<2x128xf32>
      %c0_14 = arith.constant 0 : index
      %c0_15 = arith.constant 0 : index
      %16 = vector.load %arg5[%c0_14, %c0_15] : memref<2x128xf32, #tpu.memory_space<vmem>>, vector<2x128xf32>
      tpu.vector_store %arg5[%c0_14, %c0_15], %15 {strides = array<i32>} : memref<2x128xf32, #tpu.memory_space<vmem>>, vector<2x128xf32>,
    } else {
    }
    return
  }
  func.func @transform_0(%arg0: i32, %arg1: i32) -> (i32, i32) {
    %c0_i32 = arith.constant 0 : i32
    return %arg0, %arg1 : i32, i32
  }
  func.func @transform_1(%arg0: i32, %arg1: i32) -> (i32, i32) {
    %c0_i32 = arith.constant 0 : i32
    %c0_i32_0 = arith.constant 0 : i32
    return %arg1, %c0_i32 : i32, i32
  }
  func.func @transform_2(%arg0: i32, %arg1: i32) -> (i32, i32) {
    %c0_i32 = arith.constant 0 : i32
    %c0_i32_0 = arith.constant 0 : i32
    %c0_i32_1 = arith.constant 0 : i32
    return %c0_i32, %c0_i32_0 : i32, i32
  }
  func.func @transform_3(%arg0: i32, %arg1: i32) -> (i32, i32) {
    %c0_i32 = arith.constant 0 : i32
    %c0_i32_0 = arith.constant 0 : i32
    return %arg0, %c0_i32 : i32, i32
  }
}

</mosaic_0001>

<llo_original>
// kernel: tpu_custom_call.1
$region0: #{tpu_custom_call.1}
  #allocation0 [shape = 'u32[]', space=smem, size = 0x4, offset = 0x4, fixed_abs, tag = 'smem constant byte address 0x4 - core index']
  #allocation1 [shape = 'u32[144,128]{1,0:T(1,128)}', space=vmem, size = 0x12000, scoped, tag = 'internal scratch']
  #allocation2 [shape = 'f32[2,128]{1,0:T(2,128)}', space=vmem, size = 0x400, scoped, tag = 'scratch operand']
  %s0 = inlined_call_operand.hbm [shape: f32[2,8192], index: 0, kind: input, shape index: {}]
  %s1 = inlined_call_operand.hbm [shape: f32[8192,128], index: 1, kind: input, shape index: {}]
  %s2 = inlined_call_operand.hbm [shape: f32[1,128], index: 2, kind: input, shape index: {}]
  %s3 = inlined_call_operand.hbm [shape: f32[2,128], index: 3, kind: output, shape index: {}]
  %s4 = sld [smem:[#allocation0]]
  $region42: #{tpu_custom_call.1} parent=0
    _
  %s6 = ssub.s32 1, %s4
  %s7 = scalar_select 0, %s6, %s4
  $region1: #{tpu_custom_call.1} parent=0
    #allocation3 [shape = 'u8[65536]{0}', space=vmem, size = 0x10000, scoped, tag = 'input window, operand 0, single buffered']
    #allocation4 [shape = 's32[1]{0}', space=sflag, size = 0x4, scoped, tag = 'scoped memory for tpu_custom_call.1']
    #allocation5 [shape = 's32[1]{0}', space=sflag, size = 0x4, scoped, tag = 'scoped memory for tpu_custom_call.1']
    #allocation6 [shape = 'u8[4194304]{0}', space=vmem, size = 0x400000, scoped, tag = 'input window, operand 1, single buffered']
    #allocation7 [shape = 's32[1]{0}', space=sflag, size = 0x4, scoped, tag = 'scoped memory for tpu_custom_call.1']
    #allocation8 [shape = 'u8[512]{0}', space=vmem, size = 0x400, scoped, tag = 'input window, operand 2, single buffered']
    #allocation9 [shape = 'u8[1024]{0}', space=vmem, size = 0x400, scoped, tag = 'output window, operand 0, single buffered']
    %8 = vsyncpa [#allocation4], 0
    %9 = vsyncpa [#allocation7], 0
    %10 = vsyncpa [#allocation5], 0
    // Predicated region
    $region2: #{tpu_custom_call.1} parent=1 // pred_check
      _
    $region3: #{tpu_custom_call.1} parent=1 // pred_check_branch
      %12 = sbr.rel (0) target = $region5
    $region4: #{tpu_custom_call.1} parent=1 // pred_region
      %s14 = ssub.s32 2048, 2048
      %15 = vsyncadd [#allocation4], %s14
      %s17 = sshll.u32 [#allocation3], 4
      %s18 = int_to_ptr.vmem [resolvable:$true] %s17
      %20 = dma.hbm_to_vmem [thread:$0]  %s0, 2048, %s18, [#allocation4]
    $region5: #{tpu_custom_call.1} parent=1 // pred_fallthru
      _
    // Predicated region
    $region6: #{tpu_custom_call.1} parent=1 // pred_check
      _
    $region7: #{tpu_custom_call.1} parent=1 // pred_check_branch
      %22 = sbr.rel (0) target = $region9
    $region8: #{tpu_custom_call.1} parent=1 // pred_region
      %s24 = ssub.s32 131072, 131072
      %25 = vsyncadd [#allocation7], %s24
      %s26 = sshll.u32 [#allocation6], 4
      %s27 = int_to_ptr.vmem [resolvable:$true] %s26
      %32 = dma.hbm_to_vmem [thread:$0]  %s1, 131072, %s27, [#allocation7], 128, 128, 8
    $region9: #{tpu_custom_call.1} parent=1 // pred_fallthru
      _
    // Predicated region
    $region10: #{tpu_custom_call.1} parent=1 // pred_check
      _
    $region11: #{tpu_custom_call.1} parent=1 // pred_check_branch
      %34 = sbr.rel (0) target = $region13
    $region12: #{tpu_custom_call.1} parent=1 // pred_region
      %s36 = ssub.s32 16, 16
      %37 = vsyncadd [#allocation7], %s36
      %s39 = sshll.u32 [#allocation8], 4
      %s40 = int_to_ptr.vmem [resolvable:$true] %s39
      %42 = dma.hbm_to_vmem [thread:$0]  %s2, 16, %s40, [#allocation7]
    $region13: #{tpu_custom_call.1} parent=1 // pred_fallthru
      _
    // Predicated region
    $region14: #{tpu_custom_call.1} parent=1 // pred_check
      _
    $region15: #{tpu_custom_call.1} parent=1 // pred_check_branch
      %44 = sbr.rel (0) target = $region17
    $region16: #{tpu_custom_call.1} parent=1 // pred_region
      %45 = dma.done [#allocation4], 2048
    $region17: #{tpu_custom_call.1} parent=1 // pred_fallthru
      _
    // Predicated region
    $region18: #{tpu_custom_call.1} parent=1 // pred_check
      _
    $region19: #{tpu_custom_call.1} parent=1 // pred_check_branch
      %47 = sbr.rel (0) target = $region21
    $region20: #{tpu_custom_call.1} parent=1 // pred_region
      %48 = dma.done [#allocation7], 131072
    $region21: #{tpu_custom_call.1} parent=1 // pred_fallthru
      _
    // Predicated region
    $region22: #{tpu_custom_call.1} parent=1 // pred_check
      _
    $region23: #{tpu_custom_call.1} parent=1 // pred_check_branch
      %50 = sbr.rel (0) target = $region25
    $region24: #{tpu_custom_call.1} parent=1 // pred_region
      %51 = dma.done [#allocation7], 16
    $region25: #{tpu_custom_call.1} parent=1 // pred_fallthru
      _
    %p52 = scmp.eq.s32.totalorder 0, 0
    // Predicated region
    $region26: #{tpu_custom_call.1} parent=1 // pred_check
      %p53 = pneg %p52
    $region27: #{tpu_custom_call.1} parent=1 // pred_check_branch
      %55 = sbr.rel (%p53) target = $region29
    $region28: #{tpu_custom_call.1} parent=1 // pred_region
      %56 = vst [vmem:[#allocation2] sm:$0x3] 0.0
    $region29: #{tpu_custom_call.1} parent=1 // pred_fallthru
      _
    %v57 = vld [vmem:[#allocation2] sm:$0x3]
    %v58 = vld [vmem:[#allocation3] sm:$0xff]
    %v59 = vld [vmem:[#allocation3 + $0x8] sm:$0xff]
    %v60 = vld [vmem:[#allocation3 + $0x10] sm:$0xff]
    %v61 = vld [vmem:[#allocation3 + $0x18] sm:$0xff]
    %v62 = vld [vmem:[#allocation3 + $0x20] sm:$0xff]
    %v63 = vld [vmem:[#allocation3 + $0x28] sm:$0xff]
    %v64 = vld [vmem:[#allocation3 + $0x30] sm:$0xff]
    %v65 = vld [vmem:[#allocation3 + $0x38] sm:$0xff]
    %v66 = vld [vmem:[#allocation3 + $0x40] sm:$0xff]
    %v67 = vld [vmem:[#allocation3 + $0x48] sm:$0xff]
    %v68 = vld [vmem:[#allocation3 + $0x50] sm:$0xff]
    %v69 = vld [vmem:[#allocation3 + $0x58] sm:$0xff]
    %v70 = vld [vmem:[#allocation3 + $0x60] sm:$0xff]
    %v71 = vld [vmem:[#allocation3 + $0x68] sm:$0xff]
    %v72 = vld [vmem:[#allocation3 + $0x70] sm:$0xff]
    %v73 = vld [vmem:[#allocation3 + $0x78] sm:$0xff]
    %v74 = vld [vmem:[#allocation6] sm:$0xff]
    %v75 = vld [vmem:[#allocation6 + $0x8] sm:$0xff]
    %v76 = vld [vmem:[#allocation6 + $0x10] sm:$0xff]
    %v77 = vld [vmem:[#allocation6 + $0x18] sm:$0xff]
    %v78 = vld [vmem:[#allocation6 + $0x20] sm:$0xff]
    %v79 = vld [vmem:[#allocation6 + $0x28] sm:$0xff]
    %v80 = vld [vmem:[#allocation6 + $0x30] sm:$0xff]
    %v81 = vld [vmem:[#allocation6 + $0x38] sm:$0xff]
    %v82 = vld [vmem:[#allocation6 + $0x40] sm:$0xff]
    %v83 = vld [vmem:[#allocation6 + $0x48] sm:$0xff]
    %v84 = vld [vmem:[#allocation6 + $0x50] sm:$0xff]
    %v85 = vld [vmem:[#allocation6 + $0x58] sm:$0xff]
    %v86 = vld [vmem:[#allocation6 + $0x60] sm:$0xff]
    %v87 = vld [vmem:[#allocation6 + $0x68] sm:$0xff]
    %v88 = vld [vmem:[#allocation6 + $0x70] sm:$0xff]
    %v89 = vld [vmem:[#allocation6 + $0x78] sm:$0xff]
    %v90 = vld [vmem:[#allocation6 + $0x80] sm:$0xff]
    %v91 = vld [vmem:[#allocation6 + $0x88] sm:$0xff]
    %v92 = vld [vmem:[#allocation6 + $0x90] sm:$0xff]
    %v93 = vld [vmem:[#allocation6 + $0x98] sm:$0xff]
    %v94 = vld [vmem:[#allocation6 + $0xa0] sm:$0xff]
    %v95 = vld [vmem:[#allocation6 + $0xa8] sm:$0xff]
    %v96 = vld [vmem:[#allocation6 + $0xb0] sm:$0xff]
    %v97 = vld [vmem:[#allocation6 + $0xb8] sm:$0xff]
    %v98 = vld [vmem:[#allocation6 + $0xc0] sm:$0xff]
    %v99 = vld [vmem:[#allocation6 + $0xc8] sm:$0xff]
    %v100 = vld [vmem:[#allocation6 + $0xd0] sm:$0xff]
    %v101 = vld [vmem:[#allocation6 + $0xd8] sm:$0xff]
    %v102 = vld [vmem:[#allocation6 + $0xe0] sm:$0xff]
    %v103 = vld [vmem:[#allocation6 + $0xe8] sm:$0xff]
    %v104 = vld [vmem:[#allocation6 + $0xf0] sm:$0xff]
    %v105 = vld [vmem:[#allocation6 + $0xf8] sm:$0xff]
    %v106 = vld [vmem:[#allocation6 + $0x100] sm:$0xff]
    %v107 = vld [vmem:[#allocation6 + $0x108] sm:$0xff]
    %v108 = vld [vmem:[#allocation6 + $0x110] sm:$0xff]
    %v109 = vld [vmem:[#allocation6 + $0x118] sm:$0xff]
    %v110 = vld [vmem:[#allocation6 + $0x120] sm:$0xff]
    %v111 = vld [vmem:[#allocation6 + $0x128] sm:$0xff]
    %v112 = vld [vmem:[#allocation6 + $0x130] sm:$0xff]
    %v113 = vld [vmem:[#allocation6 + $0x138] sm:$0xff]
    %v114 = vld [vmem:[#allocation6 + $0x140] sm:$0xff]
    %v115 = vld [vmem:[#allocation6 + $0x148] sm:$0xff]
    %v116 = vld [vmem:[#allocation6 + $0x150] sm:$0xff]
    %v117 = vld [vmem:[#allocation6 + $0x158] sm:$0xff]
    %v118 = vld [vmem:[#allocation6 + $0x160] sm:$0xff]
    %v119 = vld [vmem:[#allocation6 + $0x168] sm:$0xff]
    %v120 = vld [vmem:[#allocation6 + $0x170] sm:$0xff]
    %v121 = vld [vmem:[#allocation6 + $0x178] sm:$0xff]
    %v122 = vld [vmem:[#allocation6 + $0x180] sm:$0xff]
    %v123 = vld [vmem:[#allocation6 + $0x188] sm:$0xff]
    %v124 = vld [vmem:[#allocation6 + $0x190] sm:$0xff]
    %v125 = vld [vmem:[#allocation6 + $0x198] sm:$0xff]
    %v126 = vld [vmem:[#allocation6 + $0x1a0] sm:$0xff]
    %v127 = vld [vmem:[#allocation6 + $0x1a8] sm:$0xff]
    %v128 = vld [vmem:[#allocation6 + $0x1b0] sm:$0xff]
    %v129 = vld [vmem:[#allocation6 + $0x1b8] sm:$0xff]
    %v130 = vld [vmem:[#allocation6 + $0x1c0] sm:$0xff]
    %v131 = vld [vmem:[#allocation6 + $0x1c8] sm:$0xff]
    %v132 = vld [vmem:[#allocation6 + $0x1d0] sm:$0xff]
    %v133 = vld [vmem:[#allocation6 + $0x1d8] sm:$0xff]
    %v134 = vld [vmem:[#allocation6 + $0x1e0] sm:$0xff]
    %v135 = vld [vmem:[#allocation6 + $0x1e8] sm:$0xff]
    %v136 = vld [vmem:[#allocation6 + $0x1f0] sm:$0xff]
    %v137 = vld [vmem:[#allocation6 + $0x1f8] sm:$0xff]
    %v138 = vld [vmem:[#allocation6 + $0x200] sm:$0xff]
    %v139 = vld [vmem:[#allocation6 + $0x208] sm:$0xff]
    %v140 = vld [vmem:[#allocation6 + $0x210] sm:$0xff]
    %v141 = vld [vmem:[#allocation6 + $0x218] sm:$0xff]
    %v142 = vld [vmem:[#allocation6 + $0x220] sm:$0xff]
    %v143 = vld [vmem:[#allocation6 + $0x228] sm:$0xff]
    %v144 = vld [vmem:[#allocation6 + $0x230] sm:$0xff]
    %v145 = vld [vmem:[#allocation6 + $0x238] sm:$0xff]
    %v146 = vld [vmem:[#allocation6 + $0x240] sm:$0xff]
    %v147 = vld [vmem:[#allocation6 + $0x248] sm:$0xff]
    %v148 = vld [vmem:[#allocation6 + $0x250] sm:$0xff]
    %v149 = vld [vmem:[#allocation6 + $0x258] sm:$0xff]
    %v150 = vld [vmem:[#allocation6 + $0x260] sm:$0xff]
    %v151 = vld [vmem:[#allocation6 + $0x268] sm:$0xff]
    %v152 = vld [vmem:[#allocation6 + $0x270] sm:$0xff]
    %v153 = vld [vmem:[#allocation6 + $0x278] sm:$0xff]
    %v154 = vld [vmem:[#allocation6 + $0x280] sm:$0xff]
    %v155 = vld [vmem:[#allocation6 + $0x288] sm:$0xff]
    %v156 = vld [vmem:[#allocation6 + $0x290] sm:$0xff]
    %v157 = vld [vmem:[#allocation6 + $0x298] sm:$0xff]
    %v158 = vld [vmem:[#allocation6 + $0x2a0] sm:$0xff]
    %v159 = vld [vmem:[#allocation6 + $0x2a8] sm:$0xff]
    %v160 = vld [vmem:[#allocation6 + $0x2b0] sm:$0xff]
    %v161 = vld [vmem:[#allocation6 + $0x2b8] sm:$0xff]
    %v162 = vld [vmem:[#allocation6 + $0x2c0] sm:$0xff]
    %v163 = vld [vmem:[#allocation6 + $0x2c8] sm:$0xff]
    %v164 = vld [vmem:[#allocation6 + $0x2d0] sm:$0xff]
    %v165 = vld [vmem:[#allocation6 + $0x2d8] sm:$0xff]
    %v166 = vld [vmem:[#allocation6 + $0x2e0] sm:$0xff]
    %v167 = vld [vmem:[#allocation6 + $0x2e8] sm:$0xff]
    %v168 = vld [vmem:[#allocation6 + $0x2f0] sm:$0xff]
    %v169 = vld [vmem:[#allocation6 + $0x2f8] sm:$0xff]
    %v170 = vld [vmem:[#allocation6 + $0x300] sm:$0xff]
    %v171 = vld [vmem:[#allocation6 + $0x308] sm:$0xff]
    %v172 = vld [vmem:[#allocation6 + $0x310] sm:$0xff]
    %v173 = vld [vmem:[#allocation6 + $0x318] sm:$0xff]
    %v174 = vld [vmem:[#allocation6 + $0x320] sm:$0xff]
    %v175 = vld [vmem:[#allocation6 + $0x328] sm:$0xff]
    %v176 = vld [vmem:[#allocation6 + $0x330] sm:$0xff]
    %v177 = vld [vmem:[#allocation6 + $0x338] sm:$0xff]
    %v178 = vld [vmem:[#allocation6 + $0x340] sm:$0xff]
    %v179 = vld [vmem:[#allocation6 + $0x348] sm:$0xff]
    %v180 = vld [vmem:[#allocation6 + $0x350] sm:$0xff]
    %v181 = vld [vmem:[#allocation6 + $0x358] sm:$0xff]
    %v182 = vld [vmem:[#allocation6 + $0x360] sm:$0xff]
    %v183 = vld [vmem:[#allocation6 + $0x368] sm:$0xff]
    %v184 = vld [vmem:[#allocation6 + $0x370] sm:$0xff]
    %v185 = vld [vmem:[#allocation6 + $0x378] sm:$0xff]
    %v186 = vld [vmem:[#allocation6 + $0x380] sm:$0xff]
    %v187 = vld [vmem:[#allocation6 + $0x388] sm:$0xff]
    %v188 = vld [vmem:[#allocation6 + $0x390] sm:$0xff]
    %v189 = vld [vmem:[#allocation6 + $0x398] sm:$0xff]
    %v190 = vld [vmem:[#allocation6 + $0x3a0] sm:$0xff]
    %v191 = vld [vmem:[#allocation6 + $0x3a8] sm:$0xff]
    %v192 = vld [vmem:[#allocation6 + $0x3b0] sm:$0xff]
    %v193 = vld [vmem:[#allocation6 + $0x3b8] sm:$0xff]
    %v194 = vld [vmem:[#allocation6 + $0x3c0] sm:$0xff]
    %v195 = vld [vmem:[#allocation6 + $0x3c8] sm:$0xff]
    %v196 = vld [vmem:[#allocation6 + $0x3d0] sm:$0xff]
    %v197 = vld [vmem:[#allocation6 + $0x3d8] sm:$0xff]
    %v198 = vld [vmem:[#allocation6 + $0x3e0] sm:$0xff]
    %v199 = vld [vmem:[#allocation6 + $0x3e8] sm:$0xff]
    %v200 = vld [vmem:[#allocation6 + $0x3f0] sm:$0xff]
    %v201 = vld [vmem:[#allocation6 + $0x3f8] sm:$0xff]
    %v202 = vld [vmem:[#allocation6 + $0x400] sm:$0xff]
    %v203 = vld [vmem:[#allocation6 + $0x408] sm:$0xff]
    %v204 = vld [vmem:[#allocation6 + $0x410] sm:$0xff]
    %v205 = vld [vmem:[#allocation6 + $0x418] sm:$0xff]
    %v206 = vld [vmem:[#allocation6 + $0x420] sm:$0xff]
    %v207 = vld [vmem:[#allocation6 + $0x428] sm:$0xff]
    %v208 = vld [vmem:[#allocation6 + $0x430] sm:$0xff]
    %v209 = vld [vmem:[#allocation6 + $0x438] sm:$0xff]
    %v210 = vld [vmem:[#allocation6 + $0x440] sm:$0xff]
    %v211 = vld [vmem:[#allocation6 + $0x448] sm:$0xff]
    %v212 = vld [vmem:[#allocation6 + $0x450] sm:$0xff]
    %v213 = vld [vmem:[#allocation6 + $0x458] sm:$0xff]
    %v214 = vld [vmem:[#allocation6 + $0x460] sm:$0xff]
    %v215 = vld [vmem:[#allocation6 + $0x468] sm:$0xff]
    %v216 = vld [vmem:[#allocation6 + $0x470] sm:$0xff]
    %v217 = vld [vmem:[#allocation6 + $0x478] sm:$0xff]
    %v218 = vld [vmem:[#allocation6 + $0x480] sm:$0xff]
    %v219 = vld [vmem:[#allocation6 + $0x488] sm:$0xff]
    %v220 = vld [vmem:[#allocation6 + $0x490] sm:$0xff]
    %v221 = vld [vmem:[#allocation6 + $0x498] sm:$0xff]
    %v222 = vld [vmem:[#allocation6 + $0x4a0] sm:$0xff]
    %v223 = vld [vmem:[#allocation6 + $0x4a8] sm:$0xff]
    %v224 = vld [vmem:[#allocation6 + $0x4b0] sm:$0xff]
    %v225 = vld [vmem:[#allocation6 + $0x4b8] sm:$0xff]
    %v226 = vld [vmem:[#allocation6 + $0x4c0] sm:$0xff]
    %v227 = vld [vmem:[#allocation6 + $0x4c8] sm:$0xff]
    %v228 = vld [vmem:[#allocation6 + $0x4d0] sm:$0xff]
    %v229 = vld [vmem:[#allocation6 + $0x4d8] sm:$0xff]
    %v230 = vld [vmem:[#allocation6 + $0x4e0] sm:$0xff]
    %v231 = vld [vmem:[#allocation6 + $0x4e8] sm:$0xff]
    %v232 = vld [vmem:[#allocation6 + $0x4f0] sm:$0xff]
    %v233 = vld [vmem:[#allocation6 + $0x4f8] sm:$0xff]
    %v234 = vld [vmem:[#allocation6 + $0x500] sm:$0xff]
    %v235 = vld [vmem:[#allocation6 + $0x508] sm:$0xff]
    %v236 = vld [vmem:[#allocation6 + $0x510] sm:$0xff]
    %v237 = vld [vmem:[#allocation6 + $0x518] sm:$0xff]
    %v238 = vld [vmem:[#allocation6 + $0x520] sm:$0xff]
    %v239 = vld [vmem:[#allocation6 + $0x528] sm:$0xff]
    %v240 = vld [vmem:[#allocation6 + $0x530] sm:$0xff]
    %v241 = vld [vmem:[#allocation6 + $0x538] sm:$0xff]
    %v242 = vld [vmem:[#allocation6 + $0x540] sm:$0xff]
    %v243 = vld [vmem:[#allocation6 + $0x548] sm:$0xff]
    %v244 = vld [vmem:[#allocation6 + $0x550] sm:$0xff]
    %v245 = vld [vmem:[#allocation6 + $0x558] sm:$0xff]
    %v246 = vld [vmem:[#allocation6 + $0x560] sm:$0xff]
    %v247 = vld [vmem:[#allocation6 + $0x568] sm:$0xff]
    %v248 = vld [vmem:[#allocation6 + $0x570] sm:$0xff]
    %v249 = vld [vmem:[#allocation6 + $0x578] sm:$0xff]
    %v250 = vld [vmem:[#allocation6 + $0x580] sm:$0xff]
    %v251 = vld [vmem:[#allocation6 + $0x588] sm:$0xff]
    %v252 = vld [vmem:[#allocation6 + $0x590] sm:$0xff]
    %v253 = vld [vmem:[#allocation6 + $0x598] sm:$0xff]
    %v254 = vld [vmem:[#allocation6 + $0x5a0] sm:$0xff]
    %v255 = vld [vmem:[#allocation6 + $0x5a8] sm:$0xff]
    %v256 = vld [vmem:[#allocation6 + $0x5b0] sm:$0xff]
    %v257 = vld [vmem:[#allocation6 + $0x5b8] sm:$0xff]
    %v258 = vld [vmem:[#allocation6 + $0x5c0] sm:$0xff]
    %v259 = vld [vmem:[#allocation6 + $0x5c8] sm:$0xff]
    %v260 = vld [vmem:[#allocation6 + $0x5d0] sm:$0xff]
    %v261 = vld [vmem:[#allocation6 + $0x5d8] sm:$0xff]
    %v262 = vld [vmem:[#allocation6 + $0x5e0] sm:$0xff]
    %v263 = vld [vmem:[#allocation6 + $0x5e8] sm:$0xff]
    %v264 = vld [vmem:[#allocation6 + $0x5f0] sm:$0xff]
    %v265 = vld [vmem:[#allocation6 + $0x5f8] sm:$0xff]
    %v266 = vld [vmem:[#allocation6 + $0x600] sm:$0xff]
    %v267 = vld [vmem:[#allocation6 + $0x608] sm:$0xff]
    %v268 = vld [vmem:[#allocation6 + $0x610] sm:$0xff]
    %v269 = vld [vmem:[#allocation6 + $0x618] sm:$0xff]
    %v270 = vld [vmem:[#allocation6 + $0x620] sm:$0xff]
    %v271 = vld [vmem:[#allocation6 + $0x628] sm:$0xff]
    %v272 = vld [vmem:[#allocation6 + $0x630] sm:$0xff]
    %v273 = vld [vmem:[#allocation6 + $0x638] sm:$0xff]
    %v274 = vld [vmem:[#allocation6 + $0x640] sm:$0xff]
    %v275 = vld [vmem:[#allocation6 + $0x648] sm:$0xff]
    %v276 = vld [vmem:[#allocation6 + $0x650] sm:$0xff]
    %v277 = vld [vmem:[#allocation6 + $0x658] sm:$0xff]
    %v278 = vld [vmem:[#allocation6 + $0x660] sm:$0xff]
    %v279 = vld [vmem:[#allocation6 + $0x668] sm:$0xff]
    %v280 = vld [vmem:[#allocation6 + $0x670] sm:$0xff]
    %v281 = vld [vmem:[#allocation6 + $0x678] sm:$0xff]
    %v282 = vld [vmem:[#allocation6 + $0x680] sm:$0xff]
    %v283 = vld [vmem:[#allocation6 + $0x688] sm:$0xff]
    %v284 = vld [vmem:[#allocation6 + $0x690] sm:$0xff]
    %v285 = vld [vmem:[#allocation6 + $0x698] sm:$0xff]
    %v286 = vld [vmem:[#allocation6 + $0x6a0] sm:$0xff]
    %v287 = vld [vmem:[#allocation6 + $0x6a8] sm:$0xff]
    %v288 = vld [vmem:[#allocation6 + $0x6b0] sm:$0xff]
    %v289 = vld [vmem:[#allocation6 + $0x6b8] sm:$0xff]
    %v290 = vld [vmem:[#allocation6 + $0x6c0] sm:$0xff]
    %v291 = vld [vmem:[#allocation6 + $0x6c8] sm:$0xff]
    %v292 = vld [vmem:[#allocation6 + $0x6d0] sm:$0xff]
    %v293 = vld [vmem:[#allocation6 + $0x6d8] sm:$0xff]
    %v294 = vld [vmem:[#allocation6 + $0x6e0] sm:$0xff]
    %v295 = vld [vmem:[#allocation6 + $0x6e8] sm:$0xff]
    %v296 = vld [vmem:[#allocation6 + $0x6f0] sm:$0xff]
    %v297 = vld [vmem:[#allocation6 + $0x6f8] sm:$0xff]
    %v298 = vld [vmem:[#allocation6 + $0x700] sm:$0xff]
    %v299 = vld [vmem:[#allocation6 + $0x708] sm:$0xff]
    %v300 = vld [vmem:[#allocation6 + $0x710] sm:$0xff]
    %v301 = vld [vmem:[#allocation6 + $0x718] sm:$0xff]
    %v302 = vld [vmem:[#allocation6 + $0x720] sm:$0xff]
    %v303 = vld [vmem:[#allocation6 + $0x728] sm:$0xff]
    %v304 = vld [vmem:[#allocation6 + $0x730] sm:$0xff]
    %v305 = vld [vmem:[#allocation6 + $0x738] sm:$0xff]
    %v306 = vld [vmem:[#allocation6 + $0x740] sm:$0xff]
    %v307 = vld [vmem:[#allocation6 + $0x748] sm:$0xff]
    %v308 = vld [vmem:[#allocation6 + $0x750] sm:$0xff]
    %v309 = vld [vmem:[#allocation6 + $0x758] sm:$0xff]
    %v310 = vld [vmem:[#allocation6 + $0x760] sm:$0xff]
    %v311 = vld [vmem:[#allocation6 + $0x768] sm:$0xff]
    %v312 = vld [vmem:[#allocation6 + $0x770] sm:$0xff]
    %v313 = vld [vmem:[#allocation6 + $0x778] sm:$0xff]
    %v314 = vld [vmem:[#allocation6 + $0x780] sm:$0xff]
    %v315 = vld [vmem:[#allocation6 + $0x788] sm:$0xff]
    %v316 = vld [vmem:[#allocation6 + $0x790] sm:$0xff]
    %v317 = vld [vmem:[#allocation6 + $0x798] sm:$0xff]
    %v318 = vld [vmem:[#allocation6 + $0x7a0] sm:$0xff]
    %v319 = vld [vmem:[#allocation6 + $0x7a8] sm:$0xff]
    %v320 = vld [vmem:[#allocation6 + $0x7b0] sm:$0xff]
    %v321 = vld [vmem:[#allocation6 + $0x7b8] sm:$0xff]
    %v322 = vld [vmem:[#allocation6 + $0x7c0] sm:$0xff]
    %v323 = vld [vmem:[#allocation6 + $0x7c8] sm:$0xff]
    %v324 = vld [vmem:[#allocation6 + $0x7d0] sm:$0xff]
    %v325 = vld [vmem:[#allocation6 + $0x7d8] sm:$0xff]
    %v326 = vld [vmem:[#allocation6 + $0x7e0] sm:$0xff]
    %v327 = vld [vmem:[#allocation6 + $0x7e8] sm:$0xff]
    %v328 = vld [vmem:[#allocation6 + $0x7f0] sm:$0xff]
    %v329 = vld [vmem:[#allocation6 + $0x7f8] sm:$0xff]
    %v330 = vld [vmem:[#allocation6 + $0x800] sm:$0xff]
    %v331 = vld [vmem:[#allocation6 + $0x808] sm:$0xff]
    %v332 = vld [vmem:[#allocation6 + $0x810] sm:$0xff]
    %v333 = vld [vmem:[#allocation6 + $0x818] sm:$0xff]
    %v334 = vld [vmem:[#allocation6 + $0x820] sm:$0xff]
    %v335 = vld [vmem:[#allocation6 + $0x828] sm:$0xff]
    %v336 = vld [vmem:[#allocation6 + $0x830] sm:$0xff]
    %v337 = vld [vmem:[#allocation6 + $0x838] sm:$0xff]
    %v338 = vld [vmem:[#allocation6 + $0x840] sm:$0xff]
    %v339 = vld [vmem:[#allocation6 + $0x848] sm:$0xff]
    %v340 = vld [vmem:[#allocation6 + $0x850] sm:$0xff]
    %v341 = vld [vmem:[#allocation6 + $0x858] sm:$0xff]
    %v342 = vld [vmem:[#allocation6 + $0x860] sm:$0xff]
    %v343 = vld [vmem:[#allocation6 + $0x868] sm:$0xff]
    %v344 = vld [vmem:[#allocation6 + $0x870] sm:$0xff]
    %v345 = vld [vmem:[#allocation6 + $0x878] sm:$0xff]
    %v346 = vld [vmem:[#allocation6 + $0x880] sm:$0xff]
    %v347 = vld [vmem:[#allocation6 + $0x888] sm:$0xff]
    %v348 = vld [vmem:[#allocation6 + $0x890] sm:$0xff]
    %v349 = vld [vmem:[#allocation6 + $0x898] sm:$0xff]
    %v350 = vld [vmem:[#allocation6 + $0x8a0] sm:$0xff]
    %v351 = vld [vmem:[#allocation6 + $0x8a8] sm:$0xff]
    %v352 = vld [vmem:[#allocation6 + $0x8b0] sm:$0xff]
    %v353 = vld [vmem:[#allocation6 + $0x8b8] sm:$0xff]
    %v354 = vld [vmem:[#allocation6 + $0x8c0] sm:$0xff]
    %v355 = vld [vmem:[#allocation6 + $0x8c8] sm:$0xff]
    %v356 = vld [vmem:[#allocation6 + $0x8d0] sm:$0xff]
    %v357 = vld [vmem:[#allocation6 + $0x8d8] sm:$0xff]
    %v358 = vld [vmem:[#allocation6 + $0x8e0] sm:$0xff]
    %v359 = vld [vmem:[#allocation6 + $0x8e8] sm:$0xff]
    %v360 = vld [vmem:[#allocation6 + $0x8f0] sm:$0xff]
    %v361 = vld [vmem:[#allocation6 + $0x8f8] sm:$0xff]
    %v362 = vld [vmem:[#allocation6 + $0x900] sm:$0xff]
    %v363 = vld [vmem:[#allocation6 + $0x908] sm:$0xff]
    %v364 = vld [vmem:[#allocation6 + $0x910] sm:$0xff]
    %v365 = vld [vmem:[#allocation6 + $0x918] sm:$0xff]
    %v366 = vld [vmem:[#allocation6 + $0x920] sm:$0xff]
    %v367 = vld [vmem:[#allocation6 + $0x928] sm:$0xff]
    %v368 = vld [vmem:[#allocation6 + $0x930] sm:$0xff]
    %v369 = vld [vmem:[#allocation6 + $0x938] sm:$0xff]
    %v370 = vld [vmem:[#allocation6 + $0x940] sm:$0xff]
    %v371 = vld [vmem:[#allocation6 + $0x948] sm:$0xff]
    %v372 = vld [vmem:[#allocation6 + $0x950] sm:$0xff]
    %v373 = vld [vmem:[#allocation6 + $0x958] sm:$0xff]
    %v374 = vld [vmem:[#allocation6 + $0x960] sm:$0xff]
    %v375 = vld [vmem:[#allocation6 + $0x968] sm:$0xff]
    %v376 = vld [vmem:[#allocation6 + $0x970] sm:$0xff]
    %v377 = vld [vmem:[#allocation6 + $0x978] sm:$0xff]
    %v378 = vld [vmem:[#allocation6 + $0x980] sm:$0xff]
    %v379 = vld [vmem:[#allocation6 + $0x988] sm:$0xff]
    %v380 = vld [vmem:[#allocation6 + $0x990] sm:$0xff]
    %v381 = vld [vmem:[#allocation6 + $0x998] sm:$0xff]
    %v382 = vld [vmem:[#allocation6 + $0x9a0] sm:$0xff]
    %v383 = vld [vmem:[#allocation6 + $0x9a8] sm:$0xff]
    %v384 = vld [vmem:[#allocation6 + $0x9b0] sm:$0xff]
    %v385 = vld [vmem:[#allocation6 + $0x9b8] sm:$0xff]
    %v386 = vld [vmem:[#allocation6 + $0x9c0] sm:$0xff]
    %v387 = vld [vmem:[#allocation6 + $0x9c8] sm:$0xff]
    %v388 = vld [vmem:[#allocation6 + $0x9d0] sm:$0xff]
    %v389 = vld [vmem:[#allocation6 + $0x9d8] sm:$0xff]
    %v390 = vld [vmem:[#allocation6 + $0x9e0] sm:$0xff]
    %v391 = vld [vmem:[#allocation6 + $0x9e8] sm:$0xff]
    %v392 = vld [vmem:[#allocation6 + $0x9f0] sm:$0xff]
    %v393 = vld [vmem:[#allocation6 + $0x9f8] sm:$0xff]
    %v394 = vld [vmem:[#allocation6 + $0xa00] sm:$0xff]
    %v395 = vld [vmem:[#allocation6 + $0xa08] sm:$0xff]
    %v396 = vld [vmem:[#allocation6 + $0xa10] sm:$0xff]
    %v397 = vld [vmem:[#allocation6 + $0xa18] sm:$0xff]
    %v398 = vld [vmem:[#allocation6 + $0xa20] sm:$0xff]
    %v399 = vld [vmem:[#allocation6 + $0xa28] sm:$0xff]
    %v400 = vld [vmem:[#allocation6 + $0xa30] sm:$0xff]
    %v401 = vld [vmem:[#allocation6 + $0xa38] sm:$0xff]
    %v402 = vld [vmem:[#allocation6 + $0xa40] sm:$0xff]
    %v403 = vld [vmem:[#allocation6 + $0xa48] sm:$0xff]
    %v404 = vld [vmem:[#allocation6 + $0xa50] sm:$0xff]
    %v405 = vld [vmem:[#allocation6 + $0xa58] sm:$0xff]
    %v406 = vld [vmem:[#allocation6 + $0xa60] sm:$0xff]
    %v407 = vld [vmem:[#allocation6 + $0xa68] sm:$0xff]
    %v408 = vld [vmem:[#allocation6 + $0xa70] sm:$0xff]
    %v409 = vld [vmem:[#allocation6 + $0xa78] sm:$0xff]
    %v410 = vld [vmem:[#allocation6 + $0xa80] sm:$0xff]
    %v411 = vld [vmem:[#allocation6 + $0xa88] sm:$0xff]
    %v412 = vld [vmem:[#allocation6 + $0xa90] sm:$0xff]
    %v413 = vld [vmem:[#allocation6 + $0xa98] sm:$0xff]
    %v414 = vld [vmem:[#allocation6 + $0xaa0] sm:$0xff]
    %v415 = vld [vmem:[#allocation6 + $0xaa8] sm:$0xff]
    %v416 = vld [vmem:[#allocation6 + $0xab0] sm:$0xff]
    %v417 = vld [vmem:[#allocation6 + $0xab8] sm:$0xff]
    %v418 = vld [vmem:[#allocation6 + $0xac0] sm:$0xff]
    %v419 = vld [vmem:[#allocation6 + $0xac8] sm:$0xff]
    %v420 = vld [vmem:[#allocation6 + $0xad0] sm:$0xff]
    %v421 = vld [vmem:[#allocation6 + $0xad8] sm:$0xff]
    %v422 = vld [vmem:[#allocation6 + $0xae0] sm:$0xff]
    %v423 = vld [vmem:[#allocation6 + $0xae8] sm:$0xff]
    %v424 = vld [vmem:[#allocation6 + $0xaf0] sm:$0xff]
    %v425 = vld [vmem:[#allocation6 + $0xaf8] sm:$0xff]
    %v426 = vld [vmem:[#allocation6 + $0xb00] sm:$0xff]
    %v427 = vld [vmem:[#allocation6 + $0xb08] sm:$0xff]
    %v428 = vld [vmem:[#allocation6 + $0xb10] sm:$0xff]
    %v429 = vld [vmem:[#allocation6 + $0xb18] sm:$0xff]
    %v430 = vld [vmem:[#allocation6 + $0xb20] sm:$0xff]
    %v431 = vld [vmem:[#allocation6 + $0xb28] sm:$0xff]
    %v432 = vld [vmem:[#allocation6 + $0xb30] sm:$0xff]
    %v433 = vld [vmem:[#allocation6 + $0xb38] sm:$0xff]
    %v434 = vld [vmem:[#allocation6 + $0xb40] sm:$0xff]
    %v435 = vld [vmem:[#allocation6 + $0xb48] sm:$0xff]
    %v436 = vld [vmem:[#allocation6 + $0xb50] sm:$0xff]
    %v437 = vld [vmem:[#allocation6 + $0xb58] sm:$0xff]
    %v438 = vld [vmem:[#allocation6 + $0xb60] sm:$0xff]
    %v439 = vld [vmem:[#allocation6 + $0xb68] sm:$0xff]
    %v440 = vld [vmem:[#allocation6 + $0xb70] sm:$0xff]
    %v441 = vld [vmem:[#allocation6 + $0xb78] sm:$0xff]
    %v442 = vld [vmem:[#allocation6 + $0xb80] sm:$0xff]
    %v443 = vld [vmem:[#allocation6 + $0xb88] sm:$0xff]
    %v444 = vld [vmem:[#allocation6 + $0xb90] sm:$0xff]
    %v445 = vld [vmem:[#allocation6 + $0xb98] sm:$0xff]
    %v446 = vld [vmem:[#allocation6 + $0xba0] sm:$0xff]
    %v447 = vld [vmem:[#allocation6 + $0xba8] sm:$0xff]
    %v448 = vld [vmem:[#allocation6 + $0xbb0] sm:$0xff]
    %v449 = vld [vmem:[#allocation6 + $0xbb8] sm:$0xff]
    %v450 = vld [vmem:[#allocation6 + $0xbc0] sm:$0xff]
    %v451 = vld [vmem:[#allocation6 + $0xbc8] sm:$0xff]
    %v452 = vld [vmem:[#allocation6 + $0xbd0] sm:$0xff]
    %v453 = vld [vmem:[#allocation6 + $0xbd8] sm:$0xff]
    %v454 = vld [vmem:[#allocation6 + $0xbe0] sm:$0xff]
    %v455 = vld [vmem:[#allocation6 + $0xbe8] sm:$0xff]
    %v456 = vld [vmem:[#allocation6 + $0xbf0] sm:$0xff]
    %v457 = vld [vmem:[#allocation6 + $0xbf8] sm:$0xff]
    %v458 = vld [vmem:[#allocation6 + $0xc00] sm:$0xff]
    %v459 = vld [vmem:[#allocation6 + $0xc08] sm:$0xff]
    %v460 = vld [vmem:[#allocation6 + $0xc10] sm:$0xff]
    %v461 = vld [vmem:[#allocation6 + $0xc18] sm:$0xff]
    %v462 = vld [vmem:[#allocation6 + $0xc20] sm:$0xff]
    %v463 = vld [vmem:[#allocation6 + $0xc28] sm:$0xff]
    %v464 = vld [vmem:[#allocation6 + $0xc30] sm:$0xff]
    %v465 = vld [vmem:[#allocation6 + $0xc38] sm:$0xff]
    %v466 = vld [vmem:[#allocation6 + $0xc40] sm:$0xff]
    %v467 = vld [vmem:[#allocation6 + $0xc48] sm:$0xff]
    %v468 = vld [vmem:[#allocation6 + $0xc50] sm:$0xff]
    %v469 = vld [vmem:[#allocation6 + $0xc58] sm:$0xff]
    %v470 = vld [vmem:[#allocation6 + $0xc60] sm:$0xff]
    %v471 = vld [vmem:[#allocation6 + $0xc68] sm:$0xff]
    %v472 = vld [vmem:[#allocation6 + $0xc70] sm:$0xff]
    %v473 = vld [vmem:[#allocation6 + $0xc78] sm:$0xff]
    %v474 = vld [vmem:[#allocation6 + $0xc80] sm:$0xff]
    %v475 = vld [vmem:[#allocation6 + $0xc88] sm:$0xff]
    %v476 = vld [vmem:[#allocation6 + $0xc90] sm:$0xff]
    %v477 = vld [vmem:[#allocation6 + $0xc98] sm:$0xff]
    %v478 = vld [vmem:[#allocation6 + $0xca0] sm:$0xff]
    %v479 = vld [vmem:[#allocation6 + $0xca8] sm:$0xff]
    %v480 = vld [vmem:[#allocation6 + $0xcb0] sm:$0xff]
    %v481 = vld [vmem:[#allocation6 + $0xcb8] sm:$0xff]
    %v482 = vld [vmem:[#allocation6 + $0xcc0] sm:$0xff]
    %v483 = vld [vmem:[#allocation6 + $0xcc8] sm:$0xff]
    %v484 = vld [vmem:[#allocation6 + $0xcd0] sm:$0xff]
    %v485 = vld [vmem:[#allocation6 + $0xcd8] sm:$0xff]
    %v486 = vld [vmem:[#allocation6 + $0xce0] sm:$0xff]
    %v487 = vld [vmem:[#allocation6 + $0xce8] sm:$0xff]
    %v488 = vld [vmem:[#allocation6 + $0xcf0] sm:$0xff]
    %v489 = vld [vmem:[#allocation6 + $0xcf8] sm:$0xff]
    %v490 = vld [vmem:[#allocation6 + $0xd00] sm:$0xff]
    %v491 = vld [vmem:[#allocation6 + $0xd08] sm:$0xff]
    %v492 = vld [vmem:[#allocation6 + $0xd10] sm:$0xff]
    %v493 = vld [vmem:[#allocation6 + $0xd18] sm:$0xff]
    %v494 = vld [vmem:[#allocation6 + $0xd20] sm:$0xff]
    %v495 = vld [vmem:[#allocation6 + $0xd28] sm:$0xff]
    %v496 = vld [vmem:[#allocation6 + $0xd30] sm:$0xff]
    %v497 = vld [vmem:[#allocation6 + $0xd38] sm:$0xff]
    %v498 = vld [vmem:[#allocation6 + $0xd40] sm:$0xff]
    %v499 = vld [vmem:[#allocation6 + $0xd48] sm:$0xff]
    %v500 = vld [vmem:[#allocation6 + $0xd50] sm:$0xff]
    %v501 = vld [vmem:[#allocation6 + $0xd58] sm:$0xff]
    %v502 = vld [vmem:[#allocation6 + $0xd60] sm:$0xff]
    %v503 = vld [vmem:[#allocation6 + $0xd68] sm:$0xff]
    %v504 = vld [vmem:[#allocation6 + $0xd70] sm:$0xff]
    %v505 = vld [vmem:[#allocation6 + $0xd78] sm:$0xff]
    %v506 = vld [vmem:[#allocation6 + $0xd80] sm:$0xff]
    %v507 = vld [vmem:[#allocation6 + $0xd88] sm:$0xff]
    %v508 = vld [vmem:[#allocation6 + $0xd90] sm:$0xff]
    %v509 = vld [vmem:[#allocation6 + $0xd98] sm:$0xff]
    %v510 = vld [vmem:[#allocation6 + $0xda0] sm:$0xff]
    %v511 = vld [vmem:[#allocation6 + $0xda8] sm:$0xff]
    %v512 = vld [vmem:[#allocation6 + $0xdb0] sm:$0xff]
    %v513 = vld [vmem:[#allocation6 + $0xdb8] sm:$0xff]
    %v514 = vld [vmem:[#allocation6 + $0xdc0] sm:$0xff]
    %v515 = vld [vmem:[#allocation6 + $0xdc8] sm:$0xff]
    %v516 = vld [vmem:[#allocation6 + $0xdd0] sm:$0xff]
    %v517 = vld [vmem:[#allocation6 + $0xdd8] sm:$0xff]
    %v518 = vld [vmem:[#allocation6 + $0xde0] sm:$0xff]
    %v519 = vld [vmem:[#allocation6 + $0xde8] sm:$0xff]
    %v520 = vld [vmem:[#allocation6 + $0xdf0] sm:$0xff]
    %v521 = vld [vmem:[#allocation6 + $0xdf8] sm:$0xff]
    %v522 = vld [vmem:[#allocation6 + $0xe00] sm:$0xff]
    %v523 = vld [vmem:[#allocation6 + $0xe08] sm:$0xff]
    %v524 = vld [vmem:[#allocation6 + $0xe10] sm:$0xff]
    %v525 = vld [vmem:[#allocation6 + $0xe18] sm:$0xff]
    %v526 = vld [vmem:[#allocation6 + $0xe20] sm:$0xff]
    %v527 = vld [vmem:[#allocation6 + $0xe28] sm:$0xff]
    %v528 = vld [vmem:[#allocation6 + $0xe30] sm:$0xff]
    %v529 = vld [vmem:[#allocation6 + $0xe38] sm:$0xff]
    %v530 = vld [vmem:[#allocation6 + $0xe40] sm:$0xff]
    %v531 = vld [vmem:[#allocation6 + $0xe48] sm:$0xff]
    %v532 = vld [vmem:[#allocation6 + $0xe50] sm:$0xff]
    %v533 = vld [vmem:[#allocation6 + $0xe58] sm:$0xff]
    %v534 = vld [vmem:[#allocation6 + $0xe60] sm:$0xff]
    %v535 = vld [vmem:[#allocation6 + $0xe68] sm:$0xff]
    %v536 = vld [vmem:[#allocation6 + $0xe70] sm:$0xff]
    %v537 = vld [vmem:[#allocation6 + $0xe78] sm:$0xff]
    %v538 = vld [vmem:[#allocation6 + $0xe80] sm:$0xff]
    %v539 = vld [vmem:[#allocation6 + $0xe88] sm:$0xff]
    %v540 = vld [vmem:[#allocation6 + $0xe90] sm:$0xff]
    %v541 = vld [vmem:[#allocation6 + $0xe98] sm:$0xff]
    %v542 = vld [vmem:[#allocation6 + $0xea0] sm:$0xff]
    %v543 = vld [vmem:[#allocation6 + $0xea8] sm:$0xff]
    %v544 = vld [vmem:[#allocation6 + $0xeb0] sm:$0xff]
    %v545 = vld [vmem:[#allocation6 + $0xeb8] sm:$0xff]
    %v546 = vld [vmem:[#allocation6 + $0xec0] sm:$0xff]
    %v547 = vld [vmem:[#allocation6 + $0xec8] sm:$0xff]
    %v548 = vld [vmem:[#allocation6 + $0xed0] sm:$0xff]
    %v549 = vld [vmem:[#allocation6 + $0xed8] sm:$0xff]
    %v550 = vld [vmem:[#allocation6 + $0xee0] sm:$0xff]
    %v551 = vld [vmem:[#allocation6 + $0xee8] sm:$0xff]
    %v552 = vld [vmem:[#allocation6 + $0xef0] sm:$0xff]
    %v553 = vld [vmem:[#allocation6 + $0xef8] sm:$0xff]
    %v554 = vld [vmem:[#allocation6 + $0xf00] sm:$0xff]
    %v555 = vld [vmem:[#allocation6 + $0xf08] sm:$0xff]
    %v556 = vld [vmem:[#allocation6 + $0xf10] sm:$0xff]
    %v557 = vld [vmem:[#allocation6 + $0xf18] sm:$0xff]
    %v558 = vld [vmem:[#allocation6 + $0xf20] sm:$0xff]
    %v559 = vld [vmem:[#allocation6 + $0xf28] sm:$0xff]
    %v560 = vld [vmem:[#allocation6 + $0xf30] sm:$0xff]
    %v561 = vld [vmem:[#allocation6 + $0xf38] sm:$0xff]
    %v562 = vld [vmem:[#allocation6 + $0xf40] sm:$0xff]
    %v563 = vld [vmem:[#allocation6 + $0xf48] sm:$0xff]
    %v564 = vld [vmem:[#allocation6 + $0xf50] sm:$0xff]
    %v565 = vld [vmem:[#allocation6 + $0xf58] sm:$0xff]
    %v566 = vld [vmem:[#allocation6 + $0xf60] sm:$0xff]
    %v567 = vld [vmem:[#allocation6 + $0xf68] sm:$0xff]
    %v568 = vld [vmem:[#allocation6 + $0xf70] sm:$0xff]
    %v569 = vld [vmem:[#allocation6 + $0xf78] sm:$0xff]
    %v570 = vld [vmem:[#allocation6 + $0xf80] sm:$0xff]
    %v571 = vld [vmem:[#allocation6 + $0xf88] sm:$0xff]
    %v572 = vld [vmem:[#allocation6 + $0xf90] sm:$0xff]
    %v573 = vld [vmem:[#allocation6 + $0xf98] sm:$0xff]
    %v574 = vld [vmem:[#allocation6 + $0xfa0] sm:$0xff]
    %v575 = vld [vmem:[#allocation6 + $0xfa8] sm:$0xff]
    %v576 = vld [vmem:[#allocation6 + $0xfb0] sm:$0xff]
    %v577 = vld [vmem:[#allocation6 + $0xfb8] sm:$0xff]
    %v578 = vld [vmem:[#allocation6 + $0xfc0] sm:$0xff]
    %v579 = vld [vmem:[#allocation6 + $0xfc8] sm:$0xff]
    %v580 = vld [vmem:[#allocation6 + $0xfd0] sm:$0xff]
    %v581 = vld [vmem:[#allocation6 + $0xfd8] sm:$0xff]
    %v582 = vld [vmem:[#allocation6 + $0xfe0] sm:$0xff]
    %v583 = vld [vmem:[#allocation6 + $0xfe8] sm:$0xff]
    %v584 = vld [vmem:[#allocation6 + $0xff0] sm:$0xff]
    %v585 = vld [vmem:[#allocation6 + $0xff8] sm:$0xff]
    %v586 = vld [vmem:[#allocation6 + $0x1000] sm:$0xff]
    %v587 = vld [vmem:[#allocation6 + $0x1008] sm:$0xff]
    %v588 = vld [vmem:[#allocation6 + $0x1010] sm:$0xff]
    %v589 = vld [vmem:[#allocation6 + $0x1018] sm:$0xff]
    %v590 = vld [vmem:[#allocation6 + $0x1020] sm:$0xff]
    %v591 = vld [vmem:[#allocation6 + $0x1028] sm:$0xff]
    %v592 = vld [vmem:[#allocation6 + $0x1030] sm:$0xff]
    %v593 = vld [vmem:[#allocation6 + $0x1038] sm:$0xff]
    %v594 = vld [vmem:[#allocation6 + $0x1040] sm:$0xff]
    %v595 = vld [vmem:[#allocation6 + $0x1048] sm:$0xff]
    %v596 = vld [vmem:[#allocation6 + $0x1050] sm:$0xff]
    %v597 = vld [vmem:[#allocation6 + $0x1058] sm:$0xff]
    %v598 = vld [vmem:[#allocation6 + $0x1060] sm:$0xff]
    %v599 = vld [vmem:[#allocation6 + $0x1068] sm:$0xff]
    %v600 = vld [vmem:[#allocation6 + $0x1070] sm:$0xff]
    %v601 = vld [vmem:[#allocation6 + $0x1078] sm:$0xff]
    %v602 = vld [vmem:[#allocation6 + $0x1080] sm:$0xff]
    %v603 = vld [vmem:[#allocation6 + $0x1088] sm:$0xff]
    %v604 = vld [vmem:[#allocation6 + $0x1090] sm:$0xff]
    %v605 = vld [vmem:[#allocation6 + $0x1098] sm:$0xff]
    %v606 = vld [vmem:[#allocation6 + $0x10a0] sm:$0xff]
    %v607 = vld [vmem:[#allocation6 + $0x10a8] sm:$0xff]
    %v608 = vld [vmem:[#allocation6 + $0x10b0] sm:$0xff]
    %v609 = vld [vmem:[#allocation6 + $0x10b8] sm:$0xff]
    %v610 = vld [vmem:[#allocation6 + $0x10c0] sm:$0xff]
    %v611 = vld [vmem:[#allocation6 + $0x10c8] sm:$0xff]
    %v612 = vld [vmem:[#allocation6 + $0x10d0] sm:$0xff]
    %v613 = vld [vmem:[#allocation6 + $0x10d8] sm:$0xff]
    %v614 = vld [vmem:[#allocation6 + $0x10e0] sm:$0xff]
    %v615 = vld [vmem:[#allocation6 + $0x10e8] sm:$0xff]
    %v616 = vld [vmem:[#allocation6 + $0x10f0] sm:$0xff]
    %v617 = vld [vmem:[#allocation6 + $0x10f8] sm:$0xff]
    %v618 = vld [vmem:[#allocation6 + $0x1100] sm:$0xff]
    %v619 = vld [vmem:[#allocation6 + $0x1108] sm:$0xff]
    %v620 = vld [vmem:[#allocation6 + $0x1110] sm:$0xff]
    %v621 = vld [vmem:[#allocation6 + $0x1118] sm:$0xff]
    %v622 = vld [vmem:[#allocation6 + $0x1120] sm:$0xff]
    %v623 = vld [vmem:[#allocation6 + $0x1128] sm:$0xff]
    %v624 = vld [vmem:[#allocation6 + $0x1130] sm:$0xff]
    %v625 = vld [vmem:[#allocation6 + $0x1138] sm:$0xff]
    %v626 = vld [vmem:[#allocation6 + $0x1140] sm:$0xff]
    %v627 = vld [vmem:[#allocation6 + $0x1148] sm:$0xff]
    %v628 = vld [vmem:[#allocation6 + $0x1150] sm:$0xff]
    %v629 = vld [vmem:[#allocation6 + $0x1158] sm:$0xff]
    %v630 = vld [vmem:[#allocation6 + $0x1160] sm:$0xff]
    %v631 = vld [vmem:[#allocation6 + $0x1168] sm:$0xff]
    %v632 = vld [vmem:[#allocation6 + $0x1170] sm:$0xff]
    %v633 = vld [vmem:[#allocation6 + $0x1178] sm:$0xff]
    %v634 = vld [vmem:[#allocation6 + $0x1180] sm:$0xff]
    %v635 = vld [vmem:[#allocation6 + $0x1188] sm:$0xff]
    %v636 = vld [vmem:[#allocation6 + $0x1190] sm:$0xff]
    %v637 = vld [vmem:[#allocation6 + $0x1198] sm:$0xff]
    %v638 = vld [vmem:[#allocation6 + $0x11a0] sm:$0xff]
    %v639 = vld [vmem:[#allocation6 + $0x11a8] sm:$0xff]
    %v640 = vld [vmem:[#allocation6 + $0x11b0] sm:$0xff]
    %v641 = vld [vmem:[#allocation6 + $0x11b8] sm:$0xff]
    %v642 = vld [vmem:[#allocation6 + $0x11c0] sm:$0xff]
    %v643 = vld [vmem:[#allocation6 + $0x11c8] sm:$0xff]
    %v644 = vld [vmem:[#allocation6 + $0x11d0] sm:$0xff]
    %v645 = vld [vmem:[#allocation6 + $0x11d8] sm:$0xff]
    %v646 = vld [vmem:[#allocation6 + $0x11e0] sm:$0xff]
    %v647 = vld [vmem:[#allocation6 + $0x11e8] sm:$0xff]
    %v648 = vld [vmem:[#allocation6 + $0x11f0] sm:$0xff]
    %v649 = vld [vmem:[#allocation6 + $0x11f8] sm:$0xff]
    %v650 = vld [vmem:[#allocation6 + $0x1200] sm:$0xff]
    %v651 = vld [vmem:[#allocation6 + $0x1208] sm:$0xff]
    %v652 = vld [vmem:[#allocation6 + $0x1210] sm:$0xff]
    %v653 = vld [vmem:[#allocation6 + $0x1218] sm:$0xff]
    %v654 = vld [vmem:[#allocation6 + $0x1220] sm:$0xff]
    %v655 = vld [vmem:[#allocation6 + $0x1228] sm:$0xff]
    %v656 = vld [vmem:[#allocation6 + $0x1230] sm:$0xff]
    %v657 = vld [vmem:[#allocation6 + $0x1238] sm:$0xff]
    %v658 = vld [vmem:[#allocation6 + $0x1240] sm:$0xff]
    %v659 = vld [vmem:[#allocation6 + $0x1248] sm:$0xff]
    %v660 = vld [vmem:[#allocation6 + $0x1250] sm:$0xff]
    %v661 = vld [vmem:[#allocation6 + $0x1258] sm:$0xff]
    %v662 = vld [vmem:[#allocation6 + $0x1260] sm:$0xff]
    %v663 = vld [vmem:[#allocation6 + $0x1268] sm:$0xff]
    %v664 = vld [vmem:[#allocation6 + $0x1270] sm:$0xff]
    %v665 = vld [vmem:[#allocation6 + $0x1278] sm:$0xff]
    %v666 = vld [vmem:[#allocation6 + $0x1280] sm:$0xff]
    %v667 = vld [vmem:[#allocation6 + $0x1288] sm:$0xff]
    %v668 = vld [vmem:[#allocation6 + $0x1290] sm:$0xff]
    %v669 = vld [vmem:[#allocation6 + $0x1298] sm:$0xff]
    %v670 = vld [vmem:[#allocation6 + $0x12a0] sm:$0xff]
    %v671 = vld [vmem:[#allocation6 + $0x12a8] sm:$0xff]
    %v672 = vld [vmem:[#allocation6 + $0x12b0] sm:$0xff]
    %v673 = vld [vmem:[#allocation6 + $0x12b8] sm:$0xff]
    %v674 = vld [vmem:[#allocation6 + $0x12c0] sm:$0xff]
    %v675 = vld [vmem:[#allocation6 + $0x12c8] sm:$0xff]
    %v676 = vld [vmem:[#allocation6 + $0x12d0] sm:$0xff]
    %v677 = vld [vmem:[#allocation6 + $0x12d8] sm:$0xff]
    %v678 = vld [vmem:[#allocation6 + $0x12e0] sm:$0xff]
    %v679 = vld [vmem:[#allocation6 + $0x12e8] sm:$0xff]
    %v680 = vld [vmem:[#allocation6 + $0x12f0] sm:$0xff]
    %v681 = vld [vmem:[#allocation6 + $0x12f8] sm:$0xff]
    %v682 = vld [vmem:[#allocation6 + $0x1300] sm:$0xff]
    %v683 = vld [vmem:[#allocation6 + $0x1308] sm:$0xff]
    %v684 = vld [vmem:[#allocation6 + $0x1310] sm:$0xff]
    %v685 = vld [vmem:[#allocation6 + $0x1318] sm:$0xff]
    %v686 = vld [vmem:[#allocation6 + $0x1320] sm:$0xff]
    %v687 = vld [vmem:[#allocation6 + $0x1328] sm:$0xff]
    %v688 = vld [vmem:[#allocation6 + $0x1330] sm:$0xff]
    %v689 = vld [vmem:[#allocation6 + $0x1338] sm:$0xff]
    %v690 = vld [vmem:[#allocation6 + $0x1340] sm:$0xff]
    %v691 = vld [vmem:[#allocation6 + $0x1348] sm:$0xff]
    %v692 = vld [vmem:[#allocation6 + $0x1350] sm:$0xff]
    %v693 = vld [vmem:[#allocation6 + $0x1358] sm:$0xff]
    %v694 = vld [vmem:[#allocation6 + $0x1360] sm:$0xff]
    %v695 = vld [vmem:[#allocation6 + $0x1368] sm:$0xff]
    %v696 = vld [vmem:[#allocation6 + $0x1370] sm:$0xff]
    %v697 = vld [vmem:[#allocation6 + $0x1378] sm:$0xff]
    %v698 = vld [vmem:[#allocation6 + $0x1380] sm:$0xff]
    %v699 = vld [vmem:[#allocation6 + $0x1388] sm:$0xff]
    %v700 = vld [vmem:[#allocation6 + $0x1390] sm:$0xff]
    %v701 = vld [vmem:[#allocation6 + $0x1398] sm:$0xff]
    %v702 = vld [vmem:[#allocation6 + $0x13a0] sm:$0xff]
    %v703 = vld [vmem:[#allocation6 + $0x13a8] sm:$0xff]
    %v704 = vld [vmem:[#allocation6 + $0x13b0] sm:$0xff]
    %v705 = vld [vmem:[#allocation6 + $0x13b8] sm:$0xff]
    %v706 = vld [vmem:[#allocation6 + $0x13c0] sm:$0xff]
    %v707 = vld [vmem:[#allocation6 + $0x13c8] sm:$0xff]
    %v708 = vld [vmem:[#allocation6 + $0x13d0] sm:$0xff]
    %v709 = vld [vmem:[#allocation6 + $0x13d8] sm:$0xff]
    %v710 = vld [vmem:[#allocation6 + $0x13e0] sm:$0xff]
    %v711 = vld [vmem:[#allocation6 + $0x13e8] sm:$0xff]
    %v712 = vld [vmem:[#allocation6 + $0x13f0] sm:$0xff]
    %v713 = vld [vmem:[#allocation6 + $0x13f8] sm:$0xff]
    %v714 = vld [vmem:[#allocation6 + $0x1400] sm:$0xff]
    %v715 = vld [vmem:[#allocation6 + $0x1408] sm:$0xff]
    %v716 = vld [vmem:[#allocation6 + $0x1410] sm:$0xff]
    %v717 = vld [vmem:[#allocation6 + $0x1418] sm:$0xff]
    %v718 = vld [vmem:[#allocation6 + $0x1420] sm:$0xff]
    %v719 = vld [vmem:[#allocation6 + $0x1428] sm:$0xff]
    %v720 = vld [vmem:[#allocation6 + $0x1430] sm:$0xff]
    %v721 = vld [vmem:[#allocation6 + $0x1438] sm:$0xff]
    %v722 = vld [vmem:[#allocation6 + $0x1440] sm:$0xff]
    %v723 = vld [vmem:[#allocation6 + $0x1448] sm:$0xff]
    %v724 = vld [vmem:[#allocation6 + $0x1450] sm:$0xff]
    %v725 = vld [vmem:[#allocation6 + $0x1458] sm:$0xff]
    %v726 = vld [vmem:[#allocation6 + $0x1460] sm:$0xff]
    %v727 = vld [vmem:[#allocation6 + $0x1468] sm:$0xff]
    %v728 = vld [vmem:[#allocation6 + $0x1470] sm:$0xff]
    %v729 = vld [vmem:[#allocation6 + $0x1478] sm:$0xff]
    %v730 = vld [vmem:[#allocation6 + $0x1480] sm:$0xff]
    %v731 = vld [vmem:[#allocation6 + $0x1488] sm:$0xff]
    %v732 = vld [vmem:[#allocation6 + $0x1490] sm:$0xff]
    %v733 = vld [vmem:[#allocation6 + $0x1498] sm:$0xff]
    %v734 = vld [vmem:[#allocation6 + $0x14a0] sm:$0xff]
    %v735 = vld [vmem:[#allocation6 + $0x14a8] sm:$0xff]
    %v736 = vld [vmem:[#allocation6 + $0x14b0] sm:$0xff]
    %v737 = vld [vmem:[#allocation6 + $0x14b8] sm:$0xff]
    %v738 = vld [vmem:[#allocation6 + $0x14c0] sm:$0xff]
    %v739 = vld [vmem:[#allocation6 + $0x14c8] sm:$0xff]
    %v740 = vld [vmem:[#allocation6 + $0x14d0] sm:$0xff]
    %v741 = vld [vmem:[#allocation6 + $0x14d8] sm:$0xff]
    %v742 = vld [vmem:[#allocation6 + $0x14e0] sm:$0xff]
    %v743 = vld [vmem:[#allocation6 + $0x14e8] sm:$0xff]
    %v744 = vld [vmem:[#allocation6 + $0x14f0] sm:$0xff]
    %v745 = vld [vmem:[#allocation6 + $0x14f8] sm:$0xff]
    %v746 = vld [vmem:[#allocation6 + $0x1500] sm:$0xff]
    %v747 = vld [vmem:[#allocation6 + $0x1508] sm:$0xff]
    %v748 = vld [vmem:[#allocation6 + $0x1510] sm:$0xff]
    %v749 = vld [vmem:[#allocation6 + $0x1518] sm:$0xff]
    %v750 = vld [vmem:[#allocation6 + $0x1520] sm:$0xff]
    %v751 = vld [vmem:[#allocation6 + $0x1528] sm:$0xff]
    %v752 = vld [vmem:[#allocation6 + $0x1530] sm:$0xff]
    %v753 = vld [vmem:[#allocation6 + $0x1538] sm:$0xff]
    %v754 = vld [vmem:[#allocation6 + $0x1540] sm:$0xff]
    %v755 = vld [vmem:[#allocation6 + $0x1548] sm:$0xff]
    %v756 = vld [vmem:[#allocation6 + $0x1550] sm:$0xff]
    %v757 = vld [vmem:[#allocation6 + $0x1558] sm:$0xff]
    %v758 = vld [vmem:[#allocation6 + $0x1560] sm:$0xff]
    %v759 = vld [vmem:[#allocation6 + $0x1568] sm:$0xff]
    %v760 = vld [vmem:[#allocation6 + $0x1570] sm:$0xff]
    %v761 = vld [vmem:[#allocation6 + $0x1578] sm:$0xff]
    %v762 = vld [vmem:[#allocation6 + $0x1580] sm:$0xff]
    %v763 = vld [vmem:[#allocation6 + $0x1588] sm:$0xff]
    %v764 = vld [vmem:[#allocation6 + $0x1590] sm:$0xff]
    %v765 = vld [vmem:[#allocation6 + $0x1598] sm:$0xff]
    %v766 = vld [vmem:[#allocation6 + $0x15a0] sm:$0xff]
    %v767 = vld [vmem:[#allocation6 + $0x15a8] sm:$0xff]
    %v768 = vld [vmem:[#allocation6 + $0x15b0] sm:$0xff]
    %v769 = vld [vmem:[#allocation6 + $0x15b8] sm:$0xff]
    %v770 = vld [vmem:[#allocation6 + $0x15c0] sm:$0xff]
    %v771 = vld [vmem:[#allocation6 + $0x15c8] sm:$0xff]
    %v772 = vld [vmem:[#allocation6 + $0x15d0] sm:$0xff]
    %v773 = vld [vmem:[#allocation6 + $0x15d8] sm:$0xff]
    %v774 = vld [vmem:[#allocation6 + $0x15e0] sm:$0xff]
    %v775 = vld [vmem:[#allocation6 + $0x15e8] sm:$0xff]
    %v776 = vld [vmem:[#allocation6 + $0x15f0] sm:$0xff]
    %v777 = vld [vmem:[#allocation6 + $0x15f8] sm:$0xff]
    %v778 = vld [vmem:[#allocation6 + $0x1600] sm:$0xff]
    %v779 = vld [vmem:[#allocation6 + $0x1608] sm:$0xff]
    %v780 = vld [vmem:[#allocation6 + $0x1610] sm:$0xff]
    %v781 = vld [vmem:[#allocation6 + $0x1618] sm:$0xff]
    %v782 = vld [vmem:[#allocation6 + $0x1620] sm:$0xff]
    %v783 = vld [vmem:[#allocation6 + $0x1628] sm:$0xff]
    %v784 = vld [vmem:[#allocation6 + $0x1630] sm:$0xff]
    %v785 = vld [vmem:[#allocation6 + $0x1638] sm:$0xff]
    %v786 = vld [vmem:[#allocation6 + $0x1640] sm:$0xff]
    %v787 = vld [vmem:[#allocation6 + $0x1648] sm:$0xff]
    %v788 = vld [vmem:[#allocation6 + $0x1650] sm:$0xff]
    %v789 = vld [vmem:[#allocation6 + $0x1658] sm:$0xff]
    %v790 = vld [vmem:[#allocation6 + $0x1660] sm:$0xff]
    %v791 = vld [vmem:[#allocation6 + $0x1668] sm:$0xff]
    %v792 = vld [vmem:[#allocation6 + $0x1670] sm:$0xff]
    %v793 = vld [vmem:[#allocation6 + $0x1678] sm:$0xff]
    %v794 = vld [vmem:[#allocation6 + $0x1680] sm:$0xff]
    %v795 = vld [vmem:[#allocation6 + $0x1688] sm:$0xff]
    %v796 = vld [vmem:[#allocation6 + $0x1690] sm:$0xff]
    %v797 = vld [vmem:[#allocation6 + $0x1698] sm:$0xff]
    %v798 = vld [vmem:[#allocation6 + $0x16a0] sm:$0xff]
    %v799 = vld [vmem:[#allocation6 + $0x16a8] sm:$0xff]
    %v800 = vld [vmem:[#allocation6 + $0x16b0] sm:$0xff]
    %v801 = vld [vmem:[#allocation6 + $0x16b8] sm:$0xff]
    %v802 = vld [vmem:[#allocation6 + $0x16c0] sm:$0xff]
    %v803 = vld [vmem:[#allocation6 + $0x16c8] sm:$0xff]
    %v804 = vld [vmem:[#allocation6 + $0x16d0] sm:$0xff]
    %v805 = vld [vmem:[#allocation6 + $0x16d8] sm:$0xff]
    %v806 = vld [vmem:[#allocation6 + $0x16e0] sm:$0xff]
    %v807 = vld [vmem:[#allocation6 + $0x16e8] sm:$0xff]
    %v808 = vld [vmem:[#allocation6 + $0x16f0] sm:$0xff]
    %v809 = vld [vmem:[#allocation6 + $0x16f8] sm:$0xff]
    %v810 = vld [vmem:[#allocation6 + $0x1700] sm:$0xff]
    %v811 = vld [vmem:[#allocation6 + $0x1708] sm:$0xff]
    %v812 = vld [vmem:[#allocation6 + $0x1710] sm:$0xff]
    %v813 = vld [vmem:[#allocation6 + $0x1718] sm:$0xff]
    %v814 = vld [vmem:[#allocation6 + $0x1720] sm:$0xff]
    %v815 = vld [vmem:[#allocation6 + $0x1728] sm:$0xff]
    %v816 = vld [vmem:[#allocation6 + $0x1730] sm:$0xff]
    %v817 = vld [vmem:[#allocation6 + $0x1738] sm:$0xff]
    %v818 = vld [vmem:[#allocation6 + $0x1740] sm:$0xff]
    %v819 = vld [vmem:[#allocation6 + $0x1748] sm:$0xff]
    %v820 = vld [vmem:[#allocation6 + $0x1750] sm:$0xff]
    %v821 = vld [vmem:[#allocation6 + $0x1758] sm:$0xff]
    %v822 = vld [vmem:[#allocation6 + $0x1760] sm:$0xff]
    %v823 = vld [vmem:[#allocation6 + $0x1768] sm:$0xff]
    %v824 = vld [vmem:[#allocation6 + $0x1770] sm:$0xff]
    %v825 = vld [vmem:[#allocation6 + $0x1778] sm:$0xff]
    %v826 = vld [vmem:[#allocation6 + $0x1780] sm:$0xff]
    %v827 = vld [vmem:[#allocation6 + $0x1788] sm:$0xff]
    %v828 = vld [vmem:[#allocation6 + $0x1790] sm:$0xff]
    %v829 = vld [vmem:[#allocation6 + $0x1798] sm:$0xff]
    %v830 = vld [vmem:[#allocation6 + $0x17a0] sm:$0xff]
    %v831 = vld [vmem:[#allocation6 + $0x17a8] sm:$0xff]
    %v832 = vld [vmem:[#allocation6 + $0x17b0] sm:$0xff]
    %v833 = vld [vmem:[#allocation6 + $0x17b8] sm:$0xff]
    %v834 = vld [vmem:[#allocation6 + $0x17c0] sm:$0xff]
    %v835 = vld [vmem:[#allocation6 + $0x17c8] sm:$0xff]
    %v836 = vld [vmem:[#allocation6 + $0x17d0] sm:$0xff]
    %v837 = vld [vmem:[#allocation6 + $0x17d8] sm:$0xff]
    %v838 = vld [vmem:[#allocation6 + $0x17e0] sm:$0xff]
    %v839 = vld [vmem:[#allocation6 + $0x17e8] sm:$0xff]
    %v840 = vld [vmem:[#allocation6 + $0x17f0] sm:$0xff]
    %v841 = vld [vmem:[#allocation6 + $0x17f8] sm:$0xff]
    %v842 = vld [vmem:[#allocation6 + $0x1800] sm:$0xff]
    %v843 = vld [vmem:[#allocation6 + $0x1808] sm:$0xff]
    %v844 = vld [vmem:[#allocation6 + $0x1810] sm:$0xff]
    %v845 = vld [vmem:[#allocation6 + $0x1818] sm:$0xff]
    %v846 = vld [vmem:[#allocation6 + $0x1820] sm:$0xff]
    %v847 = vld [vmem:[#allocation6 + $0x1828] sm:$0xff]
    %v848 = vld [vmem:[#allocation6 + $0x1830] sm:$0xff]
    %v849 = vld [vmem:[#allocation6 + $0x1838] sm:$0xff]
    %v850 = vld [vmem:[#allocation6 + $0x1840] sm:$0xff]
    %v851 = vld [vmem:[#allocation6 + $0x1848] sm:$0xff]
    %v852 = vld [vmem:[#allocation6 + $0x1850] sm:$0xff]
    %v853 = vld [vmem:[#allocation6 + $0x1858] sm:$0xff]
    %v854 = vld [vmem:[#allocation6 + $0x1860] sm:$0xff]
    %v855 = vld [vmem:[#allocation6 + $0x1868] sm:$0xff]
    %v856 = vld [vmem:[#allocation6 + $0x1870] sm:$0xff]
    %v857 = vld [vmem:[#allocation6 + $0x1878] sm:$0xff]
    %v858 = vld [vmem:[#allocation6 + $0x1880] sm:$0xff]
    %v859 = vld [vmem:[#allocation6 + $0x1888] sm:$0xff]
    %v860 = vld [vmem:[#allocation6 + $0x1890] sm:$0xff]
    %v861 = vld [vmem:[#allocation6 + $0x1898] sm:$0xff]
    %v862 = vld [vmem:[#allocation6 + $0x18a0] sm:$0xff]
    %v863 = vld [vmem:[#allocation6 + $0x18a8] sm:$0xff]
    %v864 = vld [vmem:[#allocation6 + $0x18b0] sm:$0xff]
    %v865 = vld [vmem:[#allocation6 + $0x18b8] sm:$0xff]
    %v866 = vld [vmem:[#allocation6 + $0x18c0] sm:$0xff]
    %v867 = vld [vmem:[#allocation6 + $0x18c8] sm:$0xff]
    %v868 = vld [vmem:[#allocation6 + $0x18d0] sm:$0xff]
    %v869 = vld [vmem:[#allocation6 + $0x18d8] sm:$0xff]
    %v870 = vld [vmem:[#allocation6 + $0x18e0] sm:$0xff]
    %v871 = vld [vmem:[#allocation6 + $0x18e8] sm:$0xff]
    %v872 = vld [vmem:[#allocation6 + $0x18f0] sm:$0xff]
    %v873 = vld [vmem:[#allocation6 + $0x18f8] sm:$0xff]
    %v874 = vld [vmem:[#allocation6 + $0x1900] sm:$0xff]
    %v875 = vld [vmem:[#allocation6 + $0x1908] sm:$0xff]
    %v876 = vld [vmem:[#allocation6 + $0x1910] sm:$0xff]
    %v877 = vld [vmem:[#allocation6 + $0x1918] sm:$0xff]
    %v878 = vld [vmem:[#allocation6 + $0x1920] sm:$0xff]
    %v879 = vld [vmem:[#allocation6 + $0x1928] sm:$0xff]
    %v880 = vld [vmem:[#allocation6 + $0x1930] sm:$0xff]
    %v881 = vld [vmem:[#allocation6 + $0x1938] sm:$0xff]
    %v882 = vld [vmem:[#allocation6 + $0x1940] sm:$0xff]
    %v883 = vld [vmem:[#allocation6 + $0x1948] sm:$0xff]
    %v884 = vld [vmem:[#allocation6 + $0x1950] sm:$0xff]
    %v885 = vld [vmem:[#allocation6 + $0x1958] sm:$0xff]
    %v886 = vld [vmem:[#allocation6 + $0x1960] sm:$0xff]
    %v887 = vld [vmem:[#allocation6 + $0x1968] sm:$0xff]
    %v888 = vld [vmem:[#allocation6 + $0x1970] sm:$0xff]
    %v889 = vld [vmem:[#allocation6 + $0x1978] sm:$0xff]
    %v890 = vld [vmem:[#allocation6 + $0x1980] sm:$0xff]
    %v891 = vld [vmem:[#allocation6 + $0x1988] sm:$0xff]
    %v892 = vld [vmem:[#allocation6 + $0x1990] sm:$0xff]
    %v893 = vld [vmem:[#allocation6 + $0x1998] sm:$0xff]
    %v894 = vld [vmem:[#allocation6 + $0x19a0] sm:$0xff]
    %v895 = vld [vmem:[#allocation6 + $0x19a8] sm:$0xff]
    %v896 = vld [vmem:[#allocation6 + $0x19b0] sm:$0xff]
    %v897 = vld [vmem:[#allocation6 + $0x19b8] sm:$0xff]
    %v898 = vld [vmem:[#allocation6 + $0x19c0] sm:$0xff]
    %v899 = vld [vmem:[#allocation6 + $0x19c8] sm:$0xff]
    %v900 = vld [vmem:[#allocation6 + $0x19d0] sm:$0xff]
    %v901 = vld [vmem:[#allocation6 + $0x19d8] sm:$0xff]
    %v902 = vld [vmem:[#allocation6 + $0x19e0] sm:$0xff]
    %v903 = vld [vmem:[#allocation6 + $0x19e8] sm:$0xff]
    %v904 = vld [vmem:[#allocation6 + $0x19f0] sm:$0xff]
    %v905 = vld [vmem:[#allocation6 + $0x19f8] sm:$0xff]
    %v906 = vld [vmem:[#allocation6 + $0x1a00] sm:$0xff]
    %v907 = vld [vmem:[#allocation6 + $0x1a08] sm:$0xff]
    %v908 = vld [vmem:[#allocation6 + $0x1a10] sm:$0xff]
    %v909 = vld [vmem:[#allocation6 + $0x1a18] sm:$0xff]
    %v910 = vld [vmem:[#allocation6 + $0x1a20] sm:$0xff]
    %v911 = vld [vmem:[#allocation6 + $0x1a28] sm:$0xff]
    %v912 = vld [vmem:[#allocation6 + $0x1a30] sm:$0xff]
    %v913 = vld [vmem:[#allocation6 + $0x1a38] sm:$0xff]
    %v914 = vld [vmem:[#allocation6 + $0x1a40] sm:$0xff]
    %v915 = vld [vmem:[#allocation6 + $0x1a48] sm:$0xff]
    %v916 = vld [vmem:[#allocation6 + $0x1a50] sm:$0xff]
    %v917 = vld [vmem:[#allocation6 + $0x1a58] sm:$0xff]
    %v918 = vld [vmem:[#allocation6 + $0x1a60] sm:$0xff]
    %v919 = vld [vmem:[#allocation6 + $0x1a68] sm:$0xff]
    %v920 = vld [vmem:[#allocation6 + $0x1a70] sm:$0xff]
    %v921 = vld [vmem:[#allocation6 + $0x1a78] sm:$0xff]
    %v922 = vld [vmem:[#allocation6 + $0x1a80] sm:$0xff]
    %v923 = vld [vmem:[#allocation6 + $0x1a88] sm:$0xff]
    %v924 = vld [vmem:[#allocation6 + $0x1a90] sm:$0xff]
    %v925 = vld [vmem:[#allocation6 + $0x1a98] sm:$0xff]
    %v926 = vld [vmem:[#allocation6 + $0x1aa0] sm:$0xff]
    %v927 = vld [vmem:[#allocation6 + $0x1aa8] sm:$0xff]
    %v928 = vld [vmem:[#allocation6 + $0x1ab0] sm:$0xff]
    %v929 = vld [vmem:[#allocation6 + $0x1ab8] sm:$0xff]
    %v930 = vld [vmem:[#allocation6 + $0x1ac0] sm:$0xff]
    %v931 = vld [vmem:[#allocation6 + $0x1ac8] sm:$0xff]
    %v932 = vld [vmem:[#allocation6 + $0x1ad0] sm:$0xff]
    %v933 = vld [vmem:[#allocation6 + $0x1ad8] sm:$0xff]
    %v934 = vld [vmem:[#allocation6 + $0x1ae0] sm:$0xff]
    %v935 = vld [vmem:[#allocation6 + $0x1ae8] sm:$0xff]
    %v936 = vld [vmem:[#allocation6 + $0x1af0] sm:$0xff]
    %v937 = vld [vmem:[#allocation6 + $0x1af8] sm:$0xff]
    %v938 = vld [vmem:[#allocation6 + $0x1b00] sm:$0xff]
    %v939 = vld [vmem:[#allocation6 + $0x1b08] sm:$0xff]
    %v940 = vld [vmem:[#allocation6 + $0x1b10] sm:$0xff]
    %v941 = vld [vmem:[#allocation6 + $0x1b18] sm:$0xff]
    %v942 = vld [vmem:[#allocation6 + $0x1b20] sm:$0xff]
    %v943 = vld [vmem:[#allocation6 + $0x1b28] sm:$0xff]
    %v944 = vld [vmem:[#allocation6 + $0x1b30] sm:$0xff]
    %v945 = vld [vmem:[#allocation6 + $0x1b38] sm:$0xff]
    %v946 = vld [vmem:[#allocation6 + $0x1b40] sm:$0xff]
    %v947 = vld [vmem:[#allocation6 + $0x1b48] sm:$0xff]
    %v948 = vld [vmem:[#allocation6 + $0x1b50] sm:$0xff]
    %v949 = vld [vmem:[#allocation6 + $0x1b58] sm:$0xff]
    %v950 = vld [vmem:[#allocation6 + $0x1b60] sm:$0xff]
    %v951 = vld [vmem:[#allocation6 + $0x1b68] sm:$0xff]
    %v952 = vld [vmem:[#allocation6 + $0x1b70] sm:$0xff]
    %v953 = vld [vmem:[#allocation6 + $0x1b78] sm:$0xff]
    %v954 = vld [vmem:[#allocation6 + $0x1b80] sm:$0xff]
    %v955 = vld [vmem:[#allocation6 + $0x1b88] sm:$0xff]
    %v956 = vld [vmem:[#allocation6 + $0x1b90] sm:$0xff]
    %v957 = vld [vmem:[#allocation6 + $0x1b98] sm:$0xff]
    %v958 = vld [vmem:[#allocation6 + $0x1ba0] sm:$0xff]
    %v959 = vld [vmem:[#allocation6 + $0x1ba8] sm:$0xff]
    %v960 = vld [vmem:[#allocation6 + $0x1bb0] sm:$0xff]
    %v961 = vld [vmem:[#allocation6 + $0x1bb8] sm:$0xff]
    %v962 = vld [vmem:[#allocation6 + $0x1bc0] sm:$0xff]
    %v963 = vld [vmem:[#allocation6 + $0x1bc8] sm:$0xff]
    %v964 = vld [vmem:[#allocation6 + $0x1bd0] sm:$0xff]
    %v965 = vld [vmem:[#allocation6 + $0x1bd8] sm:$0xff]
    %v966 = vld [vmem:[#allocation6 + $0x1be0] sm:$0xff]
    %v967 = vld [vmem:[#allocation6 + $0x1be8] sm:$0xff]
    %v968 = vld [vmem:[#allocation6 + $0x1bf0] sm:$0xff]
    %v969 = vld [vmem:[#allocation6 + $0x1bf8] sm:$0xff]
    %v970 = vld [vmem:[#allocation6 + $0x1c00] sm:$0xff]
    %v971 = vld [vmem:[#allocation6 + $0x1c08] sm:$0xff]
    %v972 = vld [vmem:[#allocation6 + $0x1c10] sm:$0xff]
    %v973 = vld [vmem:[#allocation6 + $0x1c18] sm:$0xff]
    %v974 = vld [vmem:[#allocation6 + $0x1c20] sm:$0xff]
    %v975 = vld [vmem:[#allocation6 + $0x1c28] sm:$0xff]
    %v976 = vld [vmem:[#allocation6 + $0x1c30] sm:$0xff]
    %v977 = vld [vmem:[#allocation6 + $0x1c38] sm:$0xff]
    %v978 = vld [vmem:[#allocation6 + $0x1c40] sm:$0xff]
    %v979 = vld [vmem:[#allocation6 + $0x1c48] sm:$0xff]
    %v980 = vld [vmem:[#allocation6 + $0x1c50] sm:$0xff]
    %v981 = vld [vmem:[#allocation6 + $0x1c58] sm:$0xff]
    %v982 = vld [vmem:[#allocation6 + $0x1c60] sm:$0xff]
    %v983 = vld [vmem:[#allocation6 + $0x1c68] sm:$0xff]
    %v984 = vld [vmem:[#allocation6 + $0x1c70] sm:$0xff]
    %v985 = vld [vmem:[#allocation6 + $0x1c78] sm:$0xff]
    %v986 = vld [vmem:[#allocation6 + $0x1c80] sm:$0xff]
    %v987 = vld [vmem:[#allocation6 + $0x1c88] sm:$0xff]
    %v988 = vld [vmem:[#allocation6 + $0x1c90] sm:$0xff]
    %v989 = vld [vmem:[#allocation6 + $0x1c98] sm:$0xff]
    %v990 = vld [vmem:[#allocation6 + $0x1ca0] sm:$0xff]
    %v991 = vld [vmem:[#allocation6 + $0x1ca8] sm:$0xff]
    %v992 = vld [vmem:[#allocation6 + $0x1cb0] sm:$0xff]
    %v993 = vld [vmem:[#allocation6 + $0x1cb8] sm:$0xff]
    %v994 = vld [vmem:[#allocation6 + $0x1cc0] sm:$0xff]
    %v995 = vld [vmem:[#allocation6 + $0x1cc8] sm:$0xff]
    %v996 = vld [vmem:[#allocation6 + $0x1cd0] sm:$0xff]
    %v997 = vld [vmem:[#allocation6 + $0x1cd8] sm:$0xff]
    %v998 = vld [vmem:[#allocation6 + $0x1ce0] sm:$0xff]
    %v999 = vld [vmem:[#allocation6 + $0x1ce8] sm:$0xff]
    %v1000 = vld [vmem:[#allocation6 + $0x1cf0] sm:$0xff]
    %v1001 = vld [vmem:[#allocation6 + $0x1cf8] sm:$0xff]
    %v1002 = vld [vmem:[#allocation6 + $0x1d00] sm:$0xff]
    %v1003 = vld [vmem:[#allocation6 + $0x1d08] sm:$0xff]
    %v1004 = vld [vmem:[#allocation6 + $0x1d10] sm:$0xff]
    %v1005 = vld [vmem:[#allocation6 + $0x1d18] sm:$0xff]
    %v1006 = vld [vmem:[#allocation6 + $0x1d20] sm:$0xff]
    %v1007 = vld [vmem:[#allocation6 + $0x1d28] sm:$0xff]
    %v1008 = vld [vmem:[#allocation6 + $0x1d30] sm:$0xff]
    %v1009 = vld [vmem:[#allocation6 + $0x1d38] sm:$0xff]
    %v1010 = vld [vmem:[#allocation6 + $0x1d40] sm:$0xff]
    %v1011 = vld [vmem:[#allocation6 + $0x1d48] sm:$0xff]
    %v1012 = vld [vmem:[#allocation6 + $0x1d50] sm:$0xff]
    %v1013 = vld [vmem:[#allocation6 + $0x1d58] sm:$0xff]
    %v1014 = vld [vmem:[#allocation6 + $0x1d60] sm:$0xff]
    %v1015 = vld [vmem:[#allocation6 + $0x1d68] sm:$0xff]
    %v1016 = vld [vmem:[#allocation6 + $0x1d70] sm:$0xff]
    %v1017 = vld [vmem:[#allocation6 + $0x1d78] sm:$0xff]
    %v1018 = vld [vmem:[#allocation6 + $0x1d80] sm:$0xff]
    %v1019 = vld [vmem:[#allocation6 + $0x1d88] sm:$0xff]
    %v1020 = vld [vmem:[#allocation6 + $0x1d90] sm:$0xff]
    %v1021 = vld [vmem:[#allocation6 + $0x1d98] sm:$0xff]
    %v1022 = vld [vmem:[#allocation6 + $0x1da0] sm:$0xff]
    %v1023 = vld [vmem:[#allocation6 + $0x1da8] sm:$0xff]
    %v1024 = vld [vmem:[#allocation6 + $0x1db0] sm:$0xff]
    %v1025 = vld [vmem:[#allocation6 + $0x1db8] sm:$0xff]
    %v1026 = vld [vmem:[#allocation6 + $0x1dc0] sm:$0xff]
    %v1027 = vld [vmem:[#allocation6 + $0x1dc8] sm:$0xff]
    %v1028 = vld [vmem:[#allocation6 + $0x1dd0] sm:$0xff]
    %v1029 = vld [vmem:[#allocation6 + $0x1dd8] sm:$0xff]
    %v1030 = vld [vmem:[#allocation6 + $0x1de0] sm:$0xff]
    %v1031 = vld [vmem:[#allocation6 + $0x1de8] sm:$0xff]
    %v1032 = vld [vmem:[#allocation6 + $0x1df0] sm:$0xff]
    %v1033 = vld [vmem:[#allocation6 + $0x1df8] sm:$0xff]
    %v1034 = vld [vmem:[#allocation6 + $0x1e00] sm:$0xff]
    %v1035 = vld [vmem:[#allocation6 + $0x1e08] sm:$0xff]
    %v1036 = vld [vmem:[#allocation6 + $0x1e10] sm:$0xff]
    %v1037 = vld [vmem:[#allocation6 + $0x1e18] sm:$0xff]
    %v1038 = vld [vmem:[#allocation6 + $0x1e20] sm:$0xff]
    %v1039 = vld [vmem:[#allocation6 + $0x1e28] sm:$0xff]
    %v1040 = vld [vmem:[#allocation6 + $0x1e30] sm:$0xff]
    %v1041 = vld [vmem:[#allocation6 + $0x1e38] sm:$0xff]
    %v1042 = vld [vmem:[#allocation6 + $0x1e40] sm:$0xff]
    %v1043 = vld [vmem:[#allocation6 + $0x1e48] sm:$0xff]
    %v1044 = vld [vmem:[#allocation6 + $0x1e50] sm:$0xff]
    %v1045 = vld [vmem:[#allocation6 + $0x1e58] sm:$0xff]
    %v1046 = vld [vmem:[#allocation6 + $0x1e60] sm:$0xff]
    %v1047 = vld [vmem:[#allocation6 + $0x1e68] sm:$0xff]
    %v1048 = vld [vmem:[#allocation6 + $0x1e70] sm:$0xff]
    %v1049 = vld [vmem:[#allocation6 + $0x1e78] sm:$0xff]
    %v1050 = vld [vmem:[#allocation6 + $0x1e80] sm:$0xff]
    %v1051 = vld [vmem:[#allocation6 + $0x1e88] sm:$0xff]
    %v1052 = vld [vmem:[#allocation6 + $0x1e90] sm:$0xff]
    %v1053 = vld [vmem:[#allocation6 + $0x1e98] sm:$0xff]
    %v1054 = vld [vmem:[#allocation6 + $0x1ea0] sm:$0xff]
    %v1055 = vld [vmem:[#allocation6 + $0x1ea8] sm:$0xff]
    %v1056 = vld [vmem:[#allocation6 + $0x1eb0] sm:$0xff]
    %v1057 = vld [vmem:[#allocation6 + $0x1eb8] sm:$0xff]
    %v1058 = vld [vmem:[#allocation6 + $0x1ec0] sm:$0xff]
    %v1059 = vld [vmem:[#allocation6 + $0x1ec8] sm:$0xff]
    %v1060 = vld [vmem:[#allocation6 + $0x1ed0] sm:$0xff]
    %v1061 = vld [vmem:[#allocation6 + $0x1ed8] sm:$0xff]
    %v1062 = vld [vmem:[#allocation6 + $0x1ee0] sm:$0xff]
    %v1063 = vld [vmem:[#allocation6 + $0x1ee8] sm:$0xff]
    %v1064 = vld [vmem:[#allocation6 + $0x1ef0] sm:$0xff]
    %v1065 = vld [vmem:[#allocation6 + $0x1ef8] sm:$0xff]
    %v1066 = vld [vmem:[#allocation6 + $0x1f00] sm:$0xff]
    %v1067 = vld [vmem:[#allocation6 + $0x1f08] sm:$0xff]
    %v1068 = vld [vmem:[#allocation6 + $0x1f10] sm:$0xff]
    %v1069 = vld [vmem:[#allocation6 + $0x1f18] sm:$0xff]
    %v1070 = vld [vmem:[#allocation6 + $0x1f20] sm:$0xff]
    %v1071 = vld [vmem:[#allocation6 + $0x1f28] sm:$0xff]
    %v1072 = vld [vmem:[#allocation6 + $0x1f30] sm:$0xff]
    %v1073 = vld [vmem:[#allocation6 + $0x1f38] sm:$0xff]
    %v1074 = vld [vmem:[#allocation6 + $0x1f40] sm:$0xff]
    %v1075 = vld [vmem:[#allocation6 + $0x1f48] sm:$0xff]
    %v1076 = vld [vmem:[#allocation6 + $0x1f50] sm:$0xff]
    %v1077 = vld [vmem:[#allocation6 + $0x1f58] sm:$0xff]
    %v1078 = vld [vmem:[#allocation6 + $0x1f60] sm:$0xff]
    %v1079 = vld [vmem:[#allocation6 + $0x1f68] sm:$0xff]
    %v1080 = vld [vmem:[#allocation6 + $0x1f70] sm:$0xff]
    %v1081 = vld [vmem:[#allocation6 + $0x1f78] sm:$0xff]
    %v1082 = vld [vmem:[#allocation6 + $0x1f80] sm:$0xff]
    %v1083 = vld [vmem:[#allocation6 + $0x1f88] sm:$0xff]
    %v1084 = vld [vmem:[#allocation6 + $0x1f90] sm:$0xff]
    %v1085 = vld [vmem:[#allocation6 + $0x1f98] sm:$0xff]
    %v1086 = vld [vmem:[#allocation6 + $0x1fa0] sm:$0xff]
    %v1087 = vld [vmem:[#allocation6 + $0x1fa8] sm:$0xff]
    %v1088 = vld [vmem:[#allocation6 + $0x1fb0] sm:$0xff]
    %v1089 = vld [vmem:[#allocation6 + $0x1fb8] sm:$0xff]
    %v1090 = vld [vmem:[#allocation6 + $0x1fc0] sm:$0xff]
    %v1091 = vld [vmem:[#allocation6 + $0x1fc8] sm:$0xff]
    %v1092 = vld [vmem:[#allocation6 + $0x1fd0] sm:$0xff]
    %v1093 = vld [vmem:[#allocation6 + $0x1fd8] sm:$0xff]
    %v1094 = vld [vmem:[#allocation6 + $0x1fe0] sm:$0xff]
    %v1095 = vld [vmem:[#allocation6 + $0x1fe8] sm:$0xff]
    %v1096 = vld [vmem:[#allocation6 + $0x1ff0] sm:$0xff]
    %v1097 = vld [vmem:[#allocation6 + $0x1ff8] sm:$0xff]
    %v1114 = vcombine.high %v58, %v58
    %v1116 = vunpack.c.l.s4 1983009808
    %v1117 = vunpack.c.0.s8 %v1116
    %v1118 = vlaneseq
    %v1119 = vshrl.u32 %v1118, 7
    %v1120 = vsub.s32 %v1117, %v1119
    %v1121 = vrot.slane %v58, %v1120
    %v1123 = vunpack.c.l.s4 1983009808
    %v1124 = vunpack.c.0.s8 %v1123
    %v1125 = vlaneseq
    %v1126 = vshrl.u32 %v1125, 7
    %v1127 = vsub.s32 %v1124, %v1126
    %v1128 = vrot.slane %v1114, %v1127
    %v1129 = vcombine.high %v1121, %v1121
    %v1130 = vcombine.high %v1128, %v1128
    %v1131 = vcombine.high %v59, %v59
    %v1133 = vunpack.c.l.s4 1983009808
    %v1134 = vunpack.c.0.s8 %v1133
    %v1135 = vlaneseq
    %v1136 = vshrl.u32 %v1135, 7
    %v1137 = vsub.s32 %v1134, %v1136
    %v1138 = vrot.slane %v59, %v1137
    %v1140 = vunpack.c.l.s4 1983009808
    %v1141 = vunpack.c.0.s8 %v1140
    %v1142 = vlaneseq
    %v1143 = vshrl.u32 %v1142, 7
    %v1144 = vsub.s32 %v1141, %v1143
    %v1145 = vrot.slane %v1131, %v1144
    %v1146 = vcombine.high %v1138, %v1138
    %v1147 = vcombine.high %v1145, %v1145
    %v1148 = vcombine.high %v60, %v60
    %v1150 = vunpack.c.l.s4 1983009808
    %v1151 = vunpack.c.0.s8 %v1150
    %v1152 = vlaneseq
    %v1153 = vshrl.u32 %v1152, 7
    %v1154 = vsub.s32 %v1151, %v1153
    %v1155 = vrot.slane %v60, %v1154
    %v1157 = vunpack.c.l.s4 1983009808
    %v1158 = vunpack.c.0.s8 %v1157
    %v1159 = vlaneseq
    %v1160 = vshrl.u32 %v1159, 7
    %v1161 = vsub.s32 %v1158, %v1160
    %v1162 = vrot.slane %v1148, %v1161
    %v1163 = vcombine.high %v1155, %v1155
    %v1164 = vcombine.high %v1162, %v1162
    %v1165 = vcombine.high %v61, %v61
    %v1167 = vunpack.c.l.s4 1983009808
    %v1168 = vunpack.c.0.s8 %v1167
    %v1169 = vlaneseq
    %v1170 = vshrl.u32 %v1169, 7
    %v1171 = vsub.s32 %v1168, %v1170
    %v1172 = vrot.slane %v61, %v1171
    %v1174 = vunpack.c.l.s4 1983009808
    %v1175 = vunpack.c.0.s8 %v1174
    %v1176 = vlaneseq
    %v1177 = vshrl.u32 %v1176, 7
    %v1178 = vsub.s32 %v1175, %v1177
    %v1179 = vrot.slane %v1165, %v1178
    %v1180 = vcombine.high %v1172, %v1172
    %v1181 = vcombine.high %v1179, %v1179
    %v1182 = vcombine.high %v62, %v62
    %v1184 = vunpack.c.l.s4 1983009808
    %v1185 = vunpack.c.0.s8 %v1184
    %v1186 = vlaneseq
    %v1187 = vshrl.u32 %v1186, 7
    %v1188 = vsub.s32 %v1185, %v1187
    %v1189 = vrot.slane %v62, %v1188
    %v1191 = vunpack.c.l.s4 1983009808
    %v1192 = vunpack.c.0.s8 %v1191
    %v1193 = vlaneseq
    %v1194 = vshrl.u32 %v1193, 7
    %v1195 = vsub.s32 %v1192, %v1194
    %v1196 = vrot.slane %v1182, %v1195
    %v1197 = vcombine.high %v1189, %v1189
    %v1198 = vcombine.high %v1196, %v1196
    %v1199 = vcombine.high %v63, %v63
    %v1201 = vunpack.c.l.s4 1983009808
    %v1202 = vunpack.c.0.s8 %v1201
    %v1203 = vlaneseq
    %v1204 = vshrl.u32 %v1203, 7
    %v1205 = vsub.s32 %v1202, %v1204
    %v1206 = vrot.slane %v63, %v1205
    %v1208 = vunpack.c.l.s4 1983009808
    %v1209 = vunpack.c.0.s8 %v1208
    %v1210 = vlaneseq
    %v1211 = vshrl.u32 %v1210, 7
    %v1212 = vsub.s32 %v1209, %v1211
    %v1213 = vrot.slane %v1199, %v1212
    %v1214 = vcombine.high %v1206, %v1206
    %v1215 = vcombine.high %v1213, %v1213
    %v1216 = vcombine.high %v64, %v64
    %v1218 = vunpack.c.l.s4 1983009808
    %v1219 = vunpack.c.0.s8 %v1218
    %v1220 = vlaneseq
    %v1221 = vshrl.u32 %v1220, 7
    %v1222 = vsub.s32 %v1219, %v1221
    %v1223 = vrot.slane %v64, %v1222
    %v1225 = vunpack.c.l.s4 1983009808
    %v1226 = vunpack.c.0.s8 %v1225
    %v1227 = vlaneseq
    %v1228 = vshrl.u32 %v1227, 7
    %v1229 = vsub.s32 %v1226, %v1228
    %v1230 = vrot.slane %v1216, %v1229
    %v1231 = vcombine.high %v1223, %v1223
    %v1232 = vcombine.high %v1230, %v1230
    %v1233 = vcombine.high %v65, %v65
    %v1235 = vunpack.c.l.s4 1983009808
    %v1236 = vunpack.c.0.s8 %v1235
    %v1237 = vlaneseq
    %v1238 = vshrl.u32 %v1237, 7
    %v1239 = vsub.s32 %v1236, %v1238
    %v1240 = vrot.slane %v65, %v1239
    %v1242 = vunpack.c.l.s4 1983009808
    %v1243 = vunpack.c.0.s8 %v1242
    %v1244 = vlaneseq
    %v1245 = vshrl.u32 %v1244, 7
    %v1246 = vsub.s32 %v1243, %v1245
    %v1247 = vrot.slane %v1233, %v1246
    %v1248 = vcombine.high %v1240, %v1240
    %v1249 = vcombine.high %v1247, %v1247
    %v1250 = vcombine.high %v66, %v66
    %v1252 = vunpack.c.l.s4 1983009808
    %v1253 = vunpack.c.0.s8 %v1252
    %v1254 = vlaneseq
    %v1255 = vshrl.u32 %v1254, 7
    %v1256 = vsub.s32 %v1253, %v1255
    %v1257 = vrot.slane %v66, %v1256
    %v1259 = vunpack.c.l.s4 1983009808
    %v1260 = vunpack.c.0.s8 %v1259
    %v1261 = vlaneseq
    %v1262 = vshrl.u32 %v1261, 7
    %v1263 = vsub.s32 %v1260, %v1262
    %v1264 = vrot.slane %v1250, %v1263
    %v1265 = vcombine.high %v1257, %v1257
    %v1266 = vcombine.high %v1264, %v1264
    %v1267 = vcombine.high %v67, %v67
    %v1269 = vunpack.c.l.s4 1983009808
    %v1270 = vunpack.c.0.s8 %v1269
    %v1271 = vlaneseq
    %v1272 = vshrl.u32 %v1271, 7
    %v1273 = vsub.s32 %v1270, %v1272
    %v1274 = vrot.slane %v67, %v1273
    %v1276 = vunpack.c.l.s4 1983009808
    %v1277 = vunpack.c.0.s8 %v1276
    %v1278 = vlaneseq
    %v1279 = vshrl.u32 %v1278, 7
    %v1280 = vsub.s32 %v1277, %v1279
    %v1281 = vrot.slane %v1267, %v1280
    %v1282 = vcombine.high %v1274, %v1274
    %v1283 = vcombine.high %v1281, %v1281
    %v1284 = vcombine.high %v68, %v68
    %v1286 = vunpack.c.l.s4 1983009808
    %v1287 = vunpack.c.0.s8 %v1286
    %v1288 = vlaneseq
    %v1289 = vshrl.u32 %v1288, 7
    %v1290 = vsub.s32 %v1287, %v1289
    %v1291 = vrot.slane %v68, %v1290
    %v1293 = vunpack.c.l.s4 1983009808
    %v1294 = vunpack.c.0.s8 %v1293
    %v1295 = vlaneseq
    %v1296 = vshrl.u32 %v1295, 7
    %v1297 = vsub.s32 %v1294, %v1296
    %v1298 = vrot.slane %v1284, %v1297
    %v1299 = vcombine.high %v1291, %v1291
    %v1300 = vcombine.high %v1298, %v1298
    %v1301 = vcombine.high %v69, %v69
    %v1303 = vunpack.c.l.s4 1983009808
    %v1304 = vunpack.c.0.s8 %v1303
    %v1305 = vlaneseq
    %v1306 = vshrl.u32 %v1305, 7
    %v1307 = vsub.s32 %v1304, %v1306
    %v1308 = vrot.slane %v69, %v1307
    %v1310 = vunpack.c.l.s4 1983009808
    %v1311 = vunpack.c.0.s8 %v1310
    %v1312 = vlaneseq
    %v1313 = vshrl.u32 %v1312, 7
    %v1314 = vsub.s32 %v1311, %v1313
    %v1315 = vrot.slane %v1301, %v1314
    %v1316 = vcombine.high %v1308, %v1308
    %v1317 = vcombine.high %v1315, %v1315
    %v1318 = vcombine.high %v70, %v70
    %v1320 = vunpack.c.l.s4 1983009808
    %v1321 = vunpack.c.0.s8 %v1320
    %v1322 = vlaneseq
    %v1323 = vshrl.u32 %v1322, 7
    %v1324 = vsub.s32 %v1321, %v1323
    %v1325 = vrot.slane %v70, %v1324
    %v1327 = vunpack.c.l.s4 1983009808
    %v1328 = vunpack.c.0.s8 %v1327
    %v1329 = vlaneseq
    %v1330 = vshrl.u32 %v1329, 7
    %v1331 = vsub.s32 %v1328, %v1330
    %v1332 = vrot.slane %v1318, %v1331
    %v1333 = vcombine.high %v1325, %v1325
    %v1334 = vcombine.high %v1332, %v1332
    %v1335 = vcombine.high %v71, %v71
    %v1337 = vunpack.c.l.s4 1983009808
    %v1338 = vunpack.c.0.s8 %v1337
    %v1339 = vlaneseq
    %v1340 = vshrl.u32 %v1339, 7
    %v1341 = vsub.s32 %v1338, %v1340
    %v1342 = vrot.slane %v71, %v1341
    %v1344 = vunpack.c.l.s4 1983009808
    %v1345 = vunpack.c.0.s8 %v1344
    %v1346 = vlaneseq
    %v1347 = vshrl.u32 %v1346, 7
    %v1348 = vsub.s32 %v1345, %v1347
    %v1349 = vrot.slane %v1335, %v1348
    %v1350 = vcombine.high %v1342, %v1342
    %v1351 = vcombine.high %v1349, %v1349
    %v1352 = vcombine.high %v72, %v72
    %v1354 = vunpack.c.l.s4 1983009808
    %v1355 = vunpack.c.0.s8 %v1354
    %v1356 = vlaneseq
    %v1357 = vshrl.u32 %v1356, 7
    %v1358 = vsub.s32 %v1355, %v1357
    %v1359 = vrot.slane %v72, %v1358
    %v1361 = vunpack.c.l.s4 1983009808
    %v1362 = vunpack.c.0.s8 %v1361
    %v1363 = vlaneseq
    %v1364 = vshrl.u32 %v1363, 7
    %v1365 = vsub.s32 %v1362, %v1364
    %v1366 = vrot.slane %v1352, %v1365
    %v1367 = vcombine.high %v1359, %v1359
    %v1368 = vcombine.high %v1366, %v1366
    %v1369 = vcombine.high %v73, %v73
    %v1371 = vunpack.c.l.s4 1983009808
    %v1372 = vunpack.c.0.s8 %v1371
    %v1373 = vlaneseq
    %v1374 = vshrl.u32 %v1373, 7
    %v1375 = vsub.s32 %v1372, %v1374
    %v1376 = vrot.slane %v73, %v1375
    %v1378 = vunpack.c.l.s4 1983009808
    %v1379 = vunpack.c.0.s8 %v1378
    %v1380 = vlaneseq
    %v1381 = vshrl.u32 %v1380, 7
    %v1382 = vsub.s32 %v1379, %v1381
    %v1383 = vrot.slane %v1369, %v1382
    %v1384 = vcombine.high %v1376, %v1376
    %v1385 = vcombine.high %v1383, %v1383
    %1450 = vmatprep.subr.mxu0 0.0
    %1451 = vmatpush1.msra.mxu0 %v74
    %1452 = vmatprep.subr.mxu0 0.0
    %1453 = vmatpush1.msra.mxu0 %v75
    %1454 = vmatprep.subr.mxu0 0.0
    %1455 = vmatpush1.msra.mxu0 %v76
    %1456 = vmatprep.subr.mxu0 0.0
    %1457 = vmatpush1.msra.mxu0 %v77
    %1458 = vmatprep.subr.mxu0 0.0
    %1459 = vmatpush1.msra.mxu0 %v78
    %1460 = vmatprep.subr.mxu0 0.0
    %1461 = vmatpush1.msra.mxu0 %v79
    %1462 = vmatprep.subr.mxu0 0.0
    %1463 = vmatpush1.msra.mxu0 %v80
    %1464 = vmatprep.subr.mxu0 0.0
    %1465 = vmatpush1.msra.mxu0 %v81
    %1466 = vmatprep.subr.mxu0 0.0
    %1467 = vmatpush1.msra.mxu0 %v82
    %1468 = vmatprep.subr.mxu0 0.0
    %1469 = vmatpush1.msra.mxu0 %v83
    %1470 = vmatprep.subr.mxu0 0.0
    %1471 = vmatpush1.msra.mxu0 %v84
    %1472 = vmatprep.subr.mxu0 0.0
    %1473 = vmatpush1.msra.mxu0 %v85
    %1474 = vmatprep.subr.mxu0 0.0
    %1475 = vmatpush1.msra.mxu0 %v86
    %1476 = vmatprep.subr.mxu0 0.0
    %1477 = vmatpush1.msra.mxu0 %v87
    %1478 = vmatprep.subr.mxu0 0.0
    %1479 = vmatpush1.msra.mxu0 %v88
    %1480 = vmatprep.subr.mxu0 0.0
    %1481 = vmatpush1.msra.mxu0 %v89
    %1482 = vmatprep.subr.mxu0 0.0
    %1483 = vmatpush1.msra.mxu0 %v90
    %1484 = vmatprep.subr.mxu0 0.0
    %1485 = vmatpush1.msra.mxu0 %v91
    %1486 = vmatprep.subr.mxu0 0.0
    %1487 = vmatpush1.msra.mxu0 %v92
    %1488 = vmatprep.subr.mxu0 0.0
    %1489 = vmatpush1.msra.mxu0 %v93
    %1490 = vmatprep.subr.mxu0 0.0
    %1491 = vmatpush1.msra.mxu0 %v94
    %1492 = vmatprep.subr.mxu0 0.0
    %1493 = vmatpush1.msra.mxu0 %v95
    %1494 = vmatprep.subr.mxu0 0.0
    %1495 = vmatpush1.msra.mxu0 %v96
    %1496 = vmatprep.subr.mxu0 0.0
    %1497 = vmatpush1.msra.mxu0 %v97
    %1498 = vmatprep.subr.mxu0 0.0
    %1499 = vmatpush1.msra.mxu0 %v98
    %1500 = vmatprep.subr.mxu0 0.0
    %1501 = vmatpush1.msra.mxu0 %v99
    %1502 = vmatprep.subr.mxu0 0.0
    %1503 = vmatpush1.msra.mxu0 %v100
    %1504 = vmatprep.subr.mxu0 0.0
    %1505 = vmatpush1.msra.mxu0 %v101
    %1506 = vmatprep.subr.mxu0 0.0
    %1507 = vmatpush1.msra.mxu0 %v102
    %1508 = vmatprep.subr.mxu0 0.0
    %1509 = vmatpush1.msra.mxu0 %v103
    %1510 = vmatprep.subr.mxu0 0.0
    %1511 = vmatpush1.msra.mxu0 %v104
    %1512 = vmatprep.subr.mxu0 0.0
    %1513 = vmatpush1.msra.mxu0 %v105
    %1514 = vmatprep.mubr.f32.mxu0 %v1129
    %1515 = vmatmul.mubr.f32.gmra.mrb[0].mxu0 %v1121
    %v1516 = vpop.f32.mrb[0].mxu0
    %v1517 = vadd.f32 0.0, %v1516
    %v1518 = vpop.f32.mrb[0].mxu0
    %1519 = vdwg.mxu0
    %1520 = vmatprep.subr.mxu0 0.0
    %1521 = vmatpush1.msra.mxu0 %v106
    %1522 = vmatprep.subr.mxu0 0.0
    %1523 = vmatpush1.msra.mxu0 %v107
    %1524 = vmatprep.subr.mxu0 0.0
    %1525 = vmatpush1.msra.mxu0 %v108
    %1526 = vmatprep.subr.mxu0 0.0
    %1527 = vmatpush1.msra.mxu0 %v109
    %1528 = vmatprep.subr.mxu0 0.0
    %1529 = vmatpush1.msra.mxu0 %v110
    %1530 = vmatprep.subr.mxu0 0.0
    %1531 = vmatpush1.msra.mxu0 %v111
    %1532 = vmatprep.subr.mxu0 0.0
    %1533 = vmatpush1.msra.mxu0 %v112
    %1534 = vmatprep.subr.mxu0 0.0
    %1535 = vmatpush1.msra.mxu0 %v113
    %1536 = vmatprep.subr.mxu0 0.0
    %1537 = vmatpush1.msra.mxu0 %v114
    %1538 = vmatprep.subr.mxu0 0.0
    %1539 = vmatpush1.msra.mxu0 %v115
    %1540 = vmatprep.subr.mxu0 0.0
    %1541 = vmatpush1.msra.mxu0 %v116
    %1542 = vmatprep.subr.mxu0 0.0
    %1543 = vmatpush1.msra.mxu0 %v117
    %1544 = vmatprep.subr.mxu0 0.0
    %1545 = vmatpush1.msra.mxu0 %v118
    %1546 = vmatprep.subr.mxu0 0.0
    %1547 = vmatpush1.msra.mxu0 %v119
    %1548 = vmatprep.subr.mxu0 0.0
    %1549 = vmatpush1.msra.mxu0 %v120
    %1550 = vmatprep.subr.mxu0 0.0
    %1551 = vmatpush1.msra.mxu0 %v121
    %1552 = vmatprep.subr.mxu0 0.0
    %1553 = vmatpush1.msra.mxu0 %v122
    %1554 = vmatprep.subr.mxu0 0.0
    %1555 = vmatpush1.msra.mxu0 %v123
    %1556 = vmatprep.subr.mxu0 0.0
    %1557 = vmatpush1.msra.mxu0 %v124
    %1558 = vmatprep.subr.mxu0 0.0
    %1559 = vmatpush1.msra.mxu0 %v125
    %1560 = vmatprep.subr.mxu0 0.0
    %1561 = vmatpush1.msra.mxu0 %v126
    %1562 = vmatprep.subr.mxu0 0.0
    %1563 = vmatpush1.msra.mxu0 %v127
    %1564 = vmatprep.subr.mxu0 0.0
    %1565 = vmatpush1.msra.mxu0 %v128
    %1566 = vmatprep.subr.mxu0 0.0
    %1567 = vmatpush1.msra.mxu0 %v129
    %1568 = vmatprep.subr.mxu0 0.0
    %1569 = vmatpush1.msra.mxu0 %v130
    %1570 = vmatprep.subr.mxu0 0.0
    %1571 = vmatpush1.msra.mxu0 %v131
    %1572 = vmatprep.subr.mxu0 0.0
    %1573 = vmatpush1.msra.mxu0 %v132
    %1574 = vmatprep.subr.mxu0 0.0
    %1575 = vmatpush1.msra.mxu0 %v133
    %1576 = vmatprep.subr.mxu0 0.0
    %1577 = vmatpush1.msra.mxu0 %v134
    %1578 = vmatprep.subr.mxu0 0.0
    %1579 = vmatpush1.msra.mxu0 %v135
    %1580 = vmatprep.subr.mxu0 0.0
    %1581 = vmatpush1.msra.mxu0 %v136
    %1582 = vmatprep.subr.mxu0 0.0
    %1583 = vmatpush1.msra.mxu0 %v137
    %1584 = vmatprep.mubr.f32.mxu0 %v1130
    %1585 = vmatmul.mubr.f32.gmra.mrb[0].mxu0 %v1128
    %v1586 = vpop.f32.mrb[0].mxu0
    %v1587 = vadd.f32 %v1517, %v1586
    %v1588 = vpop.f32.mrb[0].mxu0
    %1589 = vdwg.mxu0
    %1590 = vmatprep.subr.mxu0 0.0
    %1591 = vmatpush1.msra.mxu0 %v138
    %1592 = vmatprep.subr.mxu0 0.0
    %1593 = vmatpush1.msra.mxu0 %v139
    %1594 = vmatprep.subr.mxu0 0.0
    %1595 = vmatpush1.msra.mxu0 %v140
    %1596 = vmatprep.subr.mxu0 0.0
    %1597 = vmatpush1.msra.mxu0 %v141
    %1598 = vmatprep.subr.mxu0 0.0
    %1599 = vmatpush1.msra.mxu0 %v142
    %1600 = vmatprep.subr.mxu0 0.0
    %1601 = vmatpush1.msra.mxu0 %v143
    %1602 = vmatprep.subr.mxu0 0.0
    %1603 = vmatpush1.msra.mxu0 %v144
    %1604 = vmatprep.subr.mxu0 0.0
    %1605 = vmatpush1.msra.mxu0 %v145
    %1606 = vmatprep.subr.mxu0 0.0
    %1607 = vmatpush1.msra.mxu0 %v146
    %1608 = vmatprep.subr.mxu0 0.0
    %1609 = vmatpush1.msra.mxu0 %v147
    %1610 = vmatprep.subr.mxu0 0.0
    %1611 = vmatpush1.msra.mxu0 %v148
    %1612 = vmatprep.subr.mxu0 0.0
    %1613 = vmatpush1.msra.mxu0 %v149
    %1614 = vmatprep.subr.mxu0 0.0
    %1615 = vmatpush1.msra.mxu0 %v150
    %1616 = vmatprep.subr.mxu0 0.0
    %1617 = vmatpush1.msra.mxu0 %v151
    %1618 = vmatprep.subr.mxu0 0.0
    %1619 = vmatpush1.msra.mxu0 %v152
    %1620 = vmatprep.subr.mxu0 0.0
    %1621 = vmatpush1.msra.mxu0 %v153
    %1622 = vmatprep.subr.mxu0 0.0
    %1623 = vmatpush1.msra.mxu0 %v154
    %1624 = vmatprep.subr.mxu0 0.0
    %1625 = vmatpush1.msra.mxu0 %v155
    %1626 = vmatprep.subr.mxu0 0.0
    %1627 = vmatpush1.msra.mxu0 %v156
    %1628 = vmatprep.subr.mxu0 0.0
    %1629 = vmatpush1.msra.mxu0 %v157
    %1630 = vmatprep.subr.mxu0 0.0
    %1631 = vmatpush1.msra.mxu0 %v158
    %1632 = vmatprep.subr.mxu0 0.0
    %1633 = vmatpush1.msra.mxu0 %v159
    %1634 = vmatprep.subr.mxu0 0.0
    %1635 = vmatpush1.msra.mxu0 %v160
    %1636 = vmatprep.subr.mxu0 0.0
    %1637 = vmatpush1.msra.mxu0 %v161
    %1638 = vmatprep.subr.mxu0 0.0
    %1639 = vmatpush1.msra.mxu0 %v162
    %1640 = vmatprep.subr.mxu0 0.0
    %1641 = vmatpush1.msra.mxu0 %v163
    %1642 = vmatprep.subr.mxu0 0.0
    %1643 = vmatpush1.msra.mxu0 %v164
    %1644 = vmatprep.subr.mxu0 0.0
    %1645 = vmatpush1.msra.mxu0 %v165
    %1646 = vmatprep.subr.mxu0 0.0
    %1647 = vmatpush1.msra.mxu0 %v166
    %1648 = vmatprep.subr.mxu0 0.0
    %1649 = vmatpush1.msra.mxu0 %v167
    %1650 = vmatprep.subr.mxu0 0.0
    %1651 = vmatpush1.msra.mxu0 %v168
    %1652 = vmatprep.subr.mxu0 0.0
    %1653 = vmatpush1.msra.mxu0 %v169
    %1654 = vmatprep.mubr.f32.mxu0 %v1146
    %1655 = vmatmul.mubr.f32.gmra.mrb[0].mxu0 %v1138
    %v1656 = vpop.f32.mrb[0].mxu0
    %v1657 = vadd.f32 %v1587, %v1656
    %v1658 = vpop.f32.mrb[0].mxu0
    %1659 = vdwg.mxu0
    %1660 = vmatprep.subr.mxu0 0.0
    %1661 = vmatpush1.msra.mxu0 %v170
    %1662 = vmatprep.subr.mxu0 0.0
    %1663 = vmatpush1.msra.mxu0 %v171
    %1664 = vmatprep.subr.mxu0 0.0
    %1665 = vmatpush1.msra.mxu0 %v172
    %1666 = vmatprep.subr.mxu0 0.0
    %1667 = vmatpush1.msra.mxu0 %v173
    %1668 = vmatprep.subr.mxu0 0.0
    %1669 = vmatpush1.msra.mxu0 %v174
    %1670 = vmatprep.subr.mxu0 0.0
    %1671 = vmatpush1.msra.mxu0 %v175
    %1672 = vmatprep.subr.mxu0 0.0
    %1673 = vmatpush1.msra.mxu0 %v176
    %1674 = vmatprep.subr.mxu0 0.0
    %1675 = vmatpush1.msra.mxu0 %v177
    %1676 = vmatprep.subr.mxu0 0.0
    %1677 = vmatpush1.msra.mxu0 %v178
    %1678 = vmatprep.subr.mxu0 0.0
    %1679 = vmatpush1.msra.mxu0 %v179
    %1680 = vmatprep.subr.mxu0 0.0
    %1681 = vmatpush1.msra.mxu0 %v180
    %1682 = vmatprep.subr.mxu0 0.0
    %1683 = vmatpush1.msra.mxu0 %v181
    %1684 = vmatprep.subr.mxu0 0.0
    %1685 = vmatpush1.msra.mxu0 %v182
    %1686 = vmatprep.subr.mxu0 0.0
    %1687 = vmatpush1.msra.mxu0 %v183
    %1688 = vmatprep.subr.mxu0 0.0
    %1689 = vmatpush1.msra.mxu0 %v184
    %1690 = vmatprep.subr.mxu0 0.0
    %1691 = vmatpush1.msra.mxu0 %v185
    %1692 = vmatprep.subr.mxu0 0.0
    %1693 = vmatpush1.msra.mxu0 %v186
    %1694 = vmatprep.subr.mxu0 0.0
    %1695 = vmatpush1.msra.mxu0 %v187
    %1696 = vmatprep.subr.mxu0 0.0
    %1697 = vmatpush1.msra.mxu0 %v188
    %1698 = vmatprep.subr.mxu0 0.0
    %1699 = vmatpush1.msra.mxu0 %v189
    %1700 = vmatprep.subr.mxu0 0.0
    %1701 = vmatpush1.msra.mxu0 %v190
    %1702 = vmatprep.subr.mxu0 0.0
    %1703 = vmatpush1.msra.mxu0 %v191
    %1704 = vmatprep.subr.mxu0 0.0
    %1705 = vmatpush1.msra.mxu0 %v192
    %1706 = vmatprep.subr.mxu0 0.0
    %1707 = vmatpush1.msra.mxu0 %v193
    %1708 = vmatprep.subr.mxu0 0.0
    %1709 = vmatpush1.msra.mxu0 %v194
    %1710 = vmatprep.subr.mxu0 0.0
    %1711 = vmatpush1.msra.mxu0 %v195
    %1712 = vmatprep.subr.mxu0 0.0
    %1713 = vmatpush1.msra.mxu0 %v196
    %1714 = vmatprep.subr.mxu0 0.0
    %1715 = vmatpush1.msra.mxu0 %v197
    %1716 = vmatprep.subr.mxu0 0.0
    %1717 = vmatpush1.msra.mxu0 %v198
    %1718 = vmatprep.subr.mxu0 0.0
    %1719 = vmatpush1.msra.mxu0 %v199
    %1720 = vmatprep.subr.mxu0 0.0
    %1721 = vmatpush1.msra.mxu0 %v200
    %1722 = vmatprep.subr.mxu0 0.0
    %1723 = vmatpush1.msra.mxu0 %v201
    %1724 = vmatprep.mubr.f32.mxu0 %v1147
    %1725 = vmatmul.mubr.f32.gmra.mrb[0].mxu0 %v1145
    %v1726 = vpop.f32.mrb[0].mxu0
    %v1727 = vadd.f32 %v1657, %v1726
    %v1728 = vpop.f32.mrb[0].mxu0
    %1729 = vdwg.mxu0
    %1730 = vmatprep.subr.mxu0 0.0
    %1731 = vmatpush1.msra.mxu0 %v202
    %1732 = vmatprep.subr.mxu0 0.0
    %1733 = vmatpush1.msra.mxu0 %v203
    %1734 = vmatprep.subr.mxu0 0.0
    %1735 = vmatpush1.msra.mxu0 %v204
    %1736 = vmatprep.subr.mxu0 0.0
    %1737 = vmatpush1.msra.mxu0 %v205
    %1738 = vmatprep.subr.mxu0 0.0
    %1739 = vmatpush1.msra.mxu0 %v206
    %1740 = vmatprep.subr.mxu0 0.0
    %1741 = vmatpush1.msra.mxu0 %v207
    %1742 = vmatprep.subr.mxu0 0.0
    %1743 = vmatpush1.msra.mxu0 %v208
    %1744 = vmatprep.subr.mxu0 0.0
    %1745 = vmatpush1.msra.mxu0 %v209
    %1746 = vmatprep.subr.mxu0 0.0
    %1747 = vmatpush1.msra.mxu0 %v210
    %1748 = vmatprep.subr.mxu0 0.0
    %1749 = vmatpush1.msra.mxu0 %v211
    %1750 = vmatprep.subr.mxu0 0.0
    %1751 = vmatpush1.msra.mxu0 %v212
    %1752 = vmatprep.subr.mxu0 0.0
    %1753 = vmatpush1.msra.mxu0 %v213
    %1754 = vmatprep.subr.mxu0 0.0
    %1755 = vmatpush1.msra.mxu0 %v214
    %1756 = vmatprep.subr.mxu0 0.0
    %1757 = vmatpush1.msra.mxu0 %v215
    %1758 = vmatprep.subr.mxu0 0.0
    %1759 = vmatpush1.msra.mxu0 %v216
    %1760 = vmatprep.subr.mxu0 0.0
    %1761 = vmatpush1.msra.mxu0 %v217
    %1762 = vmatprep.subr.mxu0 0.0
    %1763 = vmatpush1.msra.mxu0 %v218
    %1764 = vmatprep.subr.mxu0 0.0
    %1765 = vmatpush1.msra.mxu0 %v219
    %1766 = vmatprep.subr.mxu0 0.0
    %1767 = vmatpush1.msra.mxu0 %v220
    %1768 = vmatprep.subr.mxu0 0.0
    %1769 = vmatpush1.msra.mxu0 %v221
    %1770 = vmatprep.subr.mxu0 0.0
    %1771 = vmatpush1.msra.mxu0 %v222
    %1772 = vmatprep.subr.mxu0 0.0
    %1773 = vmatpush1.msra.mxu0 %v223
    %1774 = vmatprep.subr.mxu0 0.0
    %1775 = vmatpush1.msra.mxu0 %v224
    %1776 = vmatprep.subr.mxu0 0.0
    %1777 = vmatpush1.msra.mxu0 %v225
    %1778 = vmatprep.subr.mxu0 0.0
    %1779 = vmatpush1.msra.mxu0 %v226
    %1780 = vmatprep.subr.mxu0 0.0
    %1781 = vmatpush1.msra.mxu0 %v227
    %1782 = vmatprep.subr.mxu0 0.0
    %1783 = vmatpush1.msra.mxu0 %v228
    %1784 = vmatprep.subr.mxu0 0.0
    %1785 = vmatpush1.msra.mxu0 %v229
    %1786 = vmatprep.subr.mxu0 0.0
    %1787 = vmatpush1.msra.mxu0 %v230
    %1788 = vmatprep.subr.mxu0 0.0
    %1789 = vmatpush1.msra.mxu0 %v231
    %1790 = vmatprep.subr.mxu0 0.0
    %1791 = vmatpush1.msra.mxu0 %v232
    %1792 = vmatprep.subr.mxu0 0.0
    %1793 = vmatpush1.msra.mxu0 %v233
    %1794 = vmatprep.mubr.f32.mxu0 %v1163
    %1795 = vmatmul.mubr.f32.gmra.mrb[0].mxu0 %v1155
    %v1796 = vpop.f32.mrb[0].mxu0
    %v1797 = vadd.f32 %v1727, %v1796
    %v1798 = vpop.f32.mrb[0].mxu0
    %1799 = vdwg.mxu0
    %1800 = vmatprep.subr.mxu0 0.0
    %1801 = vmatpush1.msra.mxu0 %v234
    %1802 = vmatprep.subr.mxu0 0.0
    %1803 = vmatpush1.msra.mxu0 %v235
    %1804 = vmatprep.subr.mxu0 0.0
    %1805 = vmatpush1.msra.mxu0 %v236
    %1806 = vmatprep.subr.mxu0 0.0
    %1807 = vmatpush1.msra.mxu0 %v237
    %1808 = vmatprep.subr.mxu0 0.0
    %1809 = vmatpush1.msra.mxu0 %v238
    %1810 = vmatprep.subr.mxu0 0.0
    %1811 = vmatpush1.msra.mxu0 %v239
    %1812 = vmatprep.subr.mxu0 0.0
    %1813 = vmatpush1.msra.mxu0 %v240
    %1814 = vmatprep.subr.mxu0 0.0
    %1815 = vmatpush1.msra.mxu0 %v241
    %1816 = vmatprep.subr.mxu0 0.0
    %1817 = vmatpush1.msra.mxu0 %v242
    %1818 = vmatprep.subr.mxu0 0.0
    %1819 = vmatpush1.msra.mxu0 %v243
    %1820 = vmatprep.subr.mxu0 0.0
    %1821 = vmatpush1.msra.mxu0 %v244
    %1822 = vmatprep.subr.mxu0 0.0
    %1823 = vmatpush1.msra.mxu0 %v245
    %1824 = vmatprep.subr.mxu0 0.0
    %1825 = vmatpush1.msra.mxu0 %v246
    %1826 = vmatprep.subr.mxu0 0.0
    %1827 = vmatpush1.msra.mxu0 %v247
    %1828 = vmatprep.subr.mxu0 0.0
    %1829 = vmatpush1.msra.mxu0 %v248
    %1830 = vmatprep.subr.mxu0 0.0
    %1831 = vmatpush1.msra.mxu0 %v249
    %1832 = vmatprep.subr.mxu0 0.0
    %1833 = vmatpush1.msra.mxu0 %v250
    %1834 = vmatprep.subr.mxu0 0.0
    %1835 = vmatpush1.msra.mxu0 %v251
    %1836 = vmatprep.subr.mxu0 0.0
    %1837 = vmatpush1.msra.mxu0 %v252
    %1838 = vmatprep.subr.mxu0 0.0
    %1839 = vmatpush1.msra.mxu0 %v253
    %1840 = vmatprep.subr.mxu0 0.0
    %1841 = vmatpush1.msra.mxu0 %v254
    %1842 = vmatprep.subr.mxu0 0.0
    %1843 = vmatpush1.msra.mxu0 %v255
    %1844 = vmatprep.subr.mxu0 0.0
    %1845 = vmatpush1.msra.mxu0 %v256
    %1846 = vmatprep.subr.mxu0 0.0
    %1847 = vmatpush1.msra.mxu0 %v257
    %1848 = vmatprep.subr.mxu0 0.0
    %1849 = vmatpush1.msra.mxu0 %v258
    %1850 = vmatprep.subr.mxu0 0.0
    %1851 = vmatpush1.msra.mxu0 %v259
    %1852 = vmatprep.subr.mxu0 0.0
    %1853 = vmatpush1.msra.mxu0 %v260
    %1854 = vmatprep.subr.mxu0 0.0
    %1855 = vmatpush1.msra.mxu0 %v261
    %1856 = vmatprep.subr.mxu0 0.0
    %1857 = vmatpush1.msra.mxu0 %v262
    %1858 = vmatprep.subr.mxu0 0.0
    %1859 = vmatpush1.msra.mxu0 %v263
    %1860 = vmatprep.subr.mxu0 0.0
    %1861 = vmatpush1.msra.mxu0 %v264
    %1862 = vmatprep.subr.mxu0 0.0
    %1863 = vmatpush1.msra.mxu0 %v265
    %1864 = vmatprep.mubr.f32.mxu0 %v1164
    %1865 = vmatmul.mubr.f32.gmra.mrb[0].mxu0 %v1162
    %v1866 = vpop.f32.mrb[0].mxu0
    %v1867 = vadd.f32 %v1797, %v1866
    %v1868 = vpop.f32.mrb[0].mxu0
    %1869 = vdwg.mxu0
    %1870 = vmatprep.subr.mxu0 0.0
    %1871 = vmatpush1.msra.mxu0 %v266
    %1872 = vmatprep.subr.mxu0 0.0
    %1873 = vmatpush1.msra.mxu0 %v267
    %1874 = vmatprep.subr.mxu0 0.0
    %1875 = vmatpush1.msra.mxu0 %v268
    %1876 = vmatprep.subr.mxu0 0.0
    %1877 = vmatpush1.msra.mxu0 %v269
    %1878 = vmatprep.subr.mxu0 0.0
    %1879 = vmatpush1.msra.mxu0 %v270
    %1880 = vmatprep.subr.mxu0 0.0
    %1881 = vmatpush1.msra.mxu0 %v271
    %1882 = vmatprep.subr.mxu0 0.0
    %1883 = vmatpush1.msra.mxu0 %v272
    %1884 = vmatprep.subr.mxu0 0.0
    %1885 = vmatpush1.msra.mxu0 %v273
    %1886 = vmatprep.subr.mxu0 0.0
    %1887 = vmatpush1.msra.mxu0 %v274
    %1888 = vmatprep.subr.mxu0 0.0
    %1889 = vmatpush1.msra.mxu0 %v275
    %1890 = vmatprep.subr.mxu0 0.0
    %1891 = vmatpush1.msra.mxu0 %v276
    %1892 = vmatprep.subr.mxu0 0.0
    %1893 = vmatpush1.msra.mxu0 %v277
    %1894 = vmatprep.subr.mxu0 0.0
    %1895 = vmatpush1.msra.mxu0 %v278
    %1896 = vmatprep.subr.mxu0 0.0
    %1897 = vmatpush1.msra.mxu0 %v279
    %1898 = vmatprep.subr.mxu0 0.0
    %1899 = vmatpush1.msra.mxu0 %v280
    %1900 = vmatprep.subr.mxu0 0.0
    %1901 = vmatpush1.msra.mxu0 %v281
    %1902 = vmatprep.subr.mxu0 0.0
    %1903 = vmatpush1.msra.mxu0 %v282
    %1904 = vmatprep.subr.mxu0 0.0
    %1905 = vmatpush1.msra.mxu0 %v283
    %1906 = vmatprep.subr.mxu0 0.0
    %1907 = vmatpush1.msra.mxu0 %v284
    %1908 = vmatprep.subr.mxu0 0.0
    %1909 = vmatpush1.msra.mxu0 %v285
    %1910 = vmatprep.subr.mxu0 0.0
    %1911 = vmatpush1.msra.mxu0 %v286
    %1912 = vmatprep.subr.mxu0 0.0
    %1913 = vmatpush1.msra.mxu0 %v287
    %1914 = vmatprep.subr.mxu0 0.0
    %1915 = vmatpush1.msra.mxu0 %v288
    %1916 = vmatprep.subr.mxu0 0.0
    %1917 = vmatpush1.msra.mxu0 %v289
    %1918 = vmatprep.subr.mxu0 0.0
    %1919 = vmatpush1.msra.mxu0 %v290
    %1920 = vmatprep.subr.mxu0 0.0
    %1921 = vmatpush1.msra.mxu0 %v291
    %1922 = vmatprep.subr.mxu0 0.0
    %1923 = vmatpush1.msra.mxu0 %v292
    %1924 = vmatprep.subr.mxu0 0.0
    %1925 = vmatpush1.msra.mxu0 %v293
    %1926 = vmatprep.subr.mxu0 0.0
    %1927 = vmatpush1.msra.mxu0 %v294
    %1928 = vmatprep.subr.mxu0 0.0
    %1929 = vmatpush1.msra.mxu0 %v295
    %1930 = vmatprep.subr.mxu0 0.0
    %1931 = vmatpush1.msra.mxu0 %v296
    %1932 = vmatprep.subr.mxu0 0.0
    %1933 = vmatpush1.msra.mxu0 %v297
    %1934 = vmatprep.mubr.f32.mxu0 %v1180
    %1935 = vmatmul.mubr.f32.gmra.mrb[0].mxu0 %v1172
    %v1936 = vpop.f32.mrb[0].mxu0
    %v1937 = vadd.f32 %v1867, %v1936
    %v1938 = vpop.f32.mrb[0].mxu0
    %1939 = vdwg.mxu0
    %1940 = vmatprep.subr.mxu0 0.0
    %1941 = vmatpush1.msra.mxu0 %v298
    %1942 = vmatprep.subr.mxu0 0.0
    %1943 = vmatpush1.msra.mxu0 %v299
    %1944 = vmatprep.subr.mxu0 0.0
    %1945 = vmatpush1.msra.mxu0 %v300
    %1946 = vmatprep.subr.mxu0 0.0
    %1947 = vmatpush1.msra.mxu0 %v301
    %1948 = vmatprep.subr.mxu0 0.0
    %1949 = vmatpush1.msra.mxu0 %v302
    %1950 = vmatprep.subr.mxu0 0.0
    %1951 = vmatpush1.msra.mxu0 %v303
    %1952 = vmatprep.subr.mxu0 0.0
    %1953 = vmatpush1.msra.mxu0 %v304
    %1954 = vmatprep.subr.mxu0 0.0
    %1955 = vmatpush1.msra.mxu0 %v305
    %1956 = vmatprep.subr.mxu0 0.0
    %1957 = vmatpush1.msra.mxu0 %v306
    %1958 = vmatprep.subr.mxu0 0.0
    %1959 = vmatpush1.msra.mxu0 %v307
    %1960 = vmatprep.subr.mxu0 0.0
    %1961 = vmatpush1.msra.mxu0 %v308
    %1962 = vmatprep.subr.mxu0 0.0
    %1963 = vmatpush1.msra.mxu0 %v309
    %1964 = vmatprep.subr.mxu0 0.0
    %1965 = vmatpush1.msra.mxu0 %v310
    %1966 = vmatprep.subr.mxu0 0.0
    %1967 = vmatpush1.msra.mxu0 %v311
    %1968 = vmatprep.subr.mxu0 0.0
    %1969 = vmatpush1.msra.mxu0 %v312
    %1970 = vmatprep.subr.mxu0 0.0
    %1971 = vmatpush1.msra.mxu0 %v313
    %1972 = vmatprep.subr.mxu0 0.0
    %1973 = vmatpush1.msra.mxu0 %v314
    %1974 = vmatprep.subr.mxu0 0.0
    %1975 = vmatpush1.msra.mxu0 %v315
    %1976 = vmatprep.subr.mxu0 0.0
    %1977 = vmatpush1.msra.mxu0 %v316
    %1978 = vmatprep.subr.mxu0 0.0
    %1979 = vmatpush1.msra.mxu0 %v317
    %1980 = vmatprep.subr.mxu0 0.0
    %1981 = vmatpush1.msra.mxu0 %v318
    %1982 = vmatprep.subr.mxu0 0.0
    %1983 = vmatpush1.msra.mxu0 %v319
    %1984 = vmatprep.subr.mxu0 0.0
    %1985 = vmatpush1.msra.mxu0 %v320
    %1986 = vmatprep.subr.mxu0 0.0
    %1987 = vmatpush1.msra.mxu0 %v321
    %1988 = vmatprep.subr.mxu0 0.0
    %1989 = vmatpush1.msra.mxu0 %v322
    %1990 = vmatprep.subr.mxu0 0.0
    %1991 = vmatpush1.msra.mxu0 %v323
    %1992 = vmatprep.subr.mxu0 0.0
    %1993 = vmatpush1.msra.mxu0 %v324
    %1994 = vmatprep.subr.mxu0 0.0
    %1995 = vmatpush1.msra.mxu0 %v325
    %1996 = vmatprep.subr.mxu0 0.0
    %1997 = vmatpush1.msra.mxu0 %v326
    %1998 = vmatprep.subr.mxu0 0.0
    %1999 = vmatpush1.msra.mxu0 %v327
    %2000 = vmatprep.subr.mxu0 0.0
    %2001 = vmatpush1.msra.mxu0 %v328
    %2002 = vmatprep.subr.mxu0 0.0
    %2003 = vmatpush1.msra.mxu0 %v329
    %2004 = vmatprep.mubr.f32.mxu0 %v1181
    %2005 = vmatmul.mubr.f32.gmra.mrb[0].mxu0 %v1179
    %v2006 = vpop.f32.mrb[0].mxu0
    %v2007 = vadd.f32 %v1937, %v2006
    %v2008 = vpop.f32.mrb[0].mxu0
    %2009 = vdwg.mxu0
    %2010 = vmatprep.subr.mxu0 0.0
    %2011 = vmatpush1.msra.mxu0 %v330
    %2012 = vmatprep.subr.mxu0 0.0
    %2013 = vmatpush1.msra.mxu0 %v331
    %2014 = vmatprep.subr.mxu0 0.0
    %2015 = vmatpush1.msra.mxu0 %v332
    %2016 = vmatprep.subr.mxu0 0.0
    %2017 = vmatpush1.msra.mxu0 %v333
    %2018 = vmatprep.subr.mxu0 0.0
    %2019 = vmatpush1.msra.mxu0 %v334
    %2020 = vmatprep.subr.mxu0 0.0
    %2021 = vmatpush1.msra.mxu0 %v335
    %2022 = vmatprep.subr.mxu0 0.0
    %2023 = vmatpush1.msra.mxu0 %v336
    %2024 = vmatprep.subr.mxu0 0.0
    %2025 = vmatpush1.msra.mxu0 %v337
    %2026 = vmatprep.subr.mxu0 0.0
    %2027 = vmatpush1.msra.mxu0 %v338
    %2028 = vmatprep.subr.mxu0 0.0
    %2029 = vmatpush1.msra.mxu0 %v339
    %2030 = vmatprep.subr.mxu0 0.0
    %2031 = vmatpush1.msra.mxu0 %v340
    %2032 = vmatprep.subr.mxu0 0.0
    %2033 = vmatpush1.msra.mxu0 %v341
    %2034 = vmatprep.subr.mxu0 0.0
    %2035 = vmatpush1.msra.mxu0 %v342
    %2036 = vmatprep.subr.mxu0 0.0
    %2037 = vmatpush1.msra.mxu0 %v343
    %2038 = vmatprep.subr.mxu0 0.0
    %2039 = vmatpush1.msra.mxu0 %v344
    %2040 = vmatprep.subr.mxu0 0.0
    %2041 = vmatpush1.msra.mxu0 %v345
    %2042 = vmatprep.subr.mxu0 0.0
    %2043 = vmatpush1.msra.mxu0 %v346
    %2044 = vmatprep.subr.mxu0 0.0
    %2045 = vmatpush1.msra.mxu0 %v347
    %2046 = vmatprep.subr.mxu0 0.0
    %2047 = vmatpush1.msra.mxu0 %v348
    %2048 = vmatprep.subr.mxu0 0.0
    %2049 = vmatpush1.msra.mxu0 %v349
    %2050 = vmatprep.subr.mxu0 0.0
    %2051 = vmatpush1.msra.mxu0 %v350
    %2052 = vmatprep.subr.mxu0 0.0
    %2053 = vmatpush1.msra.mxu0 %v351
    %2054 = vmatprep.subr.mxu0 0.0
    %2055 = vmatpush1.msra.mxu0 %v352
    %2056 = vmatprep.subr.mxu0 0.0
    %2057 = vmatpush1.msra.mxu0 %v353
    %2058 = vmatprep.subr.mxu0 0.0
    %2059 = vmatpush1.msra.mxu0 %v354
    %2060 = vmatprep.subr.mxu0 0.0
    %2061 = vmatpush1.msra.mxu0 %v355
    %2062 = vmatprep.subr.mxu0 0.0
    %2063 = vmatpush1.msra.mxu0 %v356
    %2064 = vmatprep.subr.mxu0 0.0
    %2065 = vmatpush1.msra.mxu0 %v357
    %2066 = vmatprep.subr.mxu0 0.0
    %2067 = vmatpush1.msra.mxu0 %v358
    %2068 = vmatprep.subr.mxu0 0.0
    %2069 = vmatpush1.msra.mxu0 %v359
    %2070 = vmatprep.subr.mxu0 0.0
    %2071 = vmatpush1.msra.mxu0 %v360
    %2072 = vmatprep.subr.mxu0 0.0
    %2073 = vmatpush1.msra.mxu0 %v361
    %2074 = vmatprep.mubr.f32.mxu0 %v1197
    %2075 = vmatmul.mubr.f32.gmra.mrb[0].mxu0 %v1189
    %v2076 = vpop.f32.mrb[0].mxu0
    %v2077 = vadd.f32 %v2007, %v2076
    %v2078 = vpop.f32.mrb[0].mxu0
    %2079 = vdwg.mxu0
    %2080 = vmatprep.subr.mxu0 0.0
    %2081 = vmatpush1.msra.mxu0 %v362
    %2082 = vmatprep.subr.mxu0 0.0
    %2083 = vmatpush1.msra.mxu0 %v363
    %2084 = vmatprep.subr.mxu0 0.0
    %2085 = vmatpush1.msra.mxu0 %v364
    %2086 = vmatprep.subr.mxu0 0.0
    %2087 = vmatpush1.msra.mxu0 %v365
    %2088 = vmatprep.subr.mxu0 0.0
    %2089 = vmatpush1.msra.mxu0 %v366
    %2090 = vmatprep.subr.mxu0 0.0
    %2091 = vmatpush1.msra.mxu0 %v367
    %2092 = vmatprep.subr.mxu0 0.0
    %2093 = vmatpush1.msra.mxu0 %v368
    %2094 = vmatprep.subr.mxu0 0.0
    %2095 = vmatpush1.msra.mxu0 %v369
    %2096 = vmatprep.subr.mxu0 0.0
    %2097 = vmatpush1.msra.mxu0 %v370
    %2098 = vmatprep.subr.mxu0 0.0
    %2099 = vmatpush1.msra.mxu0 %v371
    %2100 = vmatprep.subr.mxu0 0.0
    %2101 = vmatpush1.msra.mxu0 %v372
    %2102 = vmatprep.subr.mxu0 0.0
    %2103 = vmatpush1.msra.mxu0 %v373
    %2104 = vmatprep.subr.mxu0 0.0
    %2105 = vmatpush1.msra.mxu0 %v374
    %2106 = vmatprep.subr.mxu0 0.0
    %2107 = vmatpush1.msra.mxu0 %v375
    %2108 = vmatprep.subr.mxu0 0.0
    %2109 = vmatpush1.msra.mxu0 %v376
    %2110 = vmatprep.subr.mxu0 0.0
    %2111 = vmatpush1.msra.mxu0 %v377
    %2112 = vmatprep.subr.mxu0 0.0
    %2113 = vmatpush1.msra.mxu0 %v378
    %2114 = vmatprep.subr.mxu0 0.0
    %2115 = vmatpush1.msra.mxu0 %v379
    %2116 = vmatprep.subr.mxu0 0.0
    %2117 = vmatpush1.msra.mxu0 %v380
    %2118 = vmatprep.subr.mxu0 0.0
    %2119 = vmatpush1.msra.mxu0 %v381
    %2120 = vmatprep.subr.mxu0 0.0
    %2121 = vmatpush1.msra.mxu0 %v382
    %2122 = vmatprep.subr.mxu0 0.0
    %2123 = vmatpush1.msra.mxu0 %v383
    %2124 = vmatprep.subr.mxu0 0.0
    %2125 = vmatpush1.msra.mxu0 %v384
    %2126 = vmatprep.subr.mxu0 0.0
    %2127 = vmatpush1.msra.mxu0 %v385
    %2128 = vmatprep.subr.mxu0 0.0
    %2129 = vmatpush1.msra.mxu0 %v386
    %2130 = vmatprep.subr.mxu0 0.0
    %2131 = vmatpush1.msra.mxu0 %v387
    %2132 = vmatprep.subr.mxu0 0.0
    %2133 = vmatpush1.msra.mxu0 %v388
    %2134 = vmatprep.subr.mxu0 0.0
    %2135 = vmatpush1.msra.mxu0 %v389
    %2136 = vmatprep.subr.mxu0 0.0
    %2137 = vmatpush1.msra.mxu0 %v390
    %2138 = vmatprep.subr.mxu0 0.0
    %2139 = vmatpush1.msra.mxu0 %v391
    %2140 = vmatprep.subr.mxu0 0.0
    %2141 = vmatpush1.msra.mxu0 %v392
    %2142 = vmatprep.subr.mxu0 0.0
    %2143 = vmatpush1.msra.mxu0 %v393
    %2144 = vmatprep.mubr.f32.mxu0 %v1198
    %2145 = vmatmul.mubr.f32.gmra.mrb[0].mxu0 %v1196
    %v2146 = vpop.f32.mrb[0].mxu0
    %v2147 = vadd.f32 %v2077, %v2146
    %v2148 = vpop.f32.mrb[0].mxu0
    %2149 = vdwg.mxu0
    %2150 = vmatprep.subr.mxu0 0.0
    %2151 = vmatpush1.msra.mxu0 %v394
    %2152 = vmatprep.subr.mxu0 0.0
    %2153 = vmatpush1.msra.mxu0 %v395
    %2154 = vmatprep.subr.mxu0 0.0
    %2155 = vmatpush1.msra.mxu0 %v396
    %2156 = vmatprep.subr.mxu0 0.0
    %2157 = vmatpush1.msra.mxu0 %v397
    %2158 = vmatprep.subr.mxu0 0.0
    %2159 = vmatpush1.msra.mxu0 %v398
    %2160 = vmatprep.subr.mxu0 0.0
    %2161 = vmatpush1.msra.mxu0 %v399
    %2162 = vmatprep.subr.mxu0 0.0
    %2163 = vmatpush1.msra.mxu0 %v400
    %2164 = vmatprep.subr.mxu0 0.0
    %2165 = vmatpush1.msra.mxu0 %v401
    %2166 = vmatprep.subr.mxu0 0.0
    %2167 = vmatpush1.msra.mxu0 %v402
    %2168 = vmatprep.subr.mxu0 0.0
    %2169 = vmatpush1.msra.mxu0 %v403
    %2170 = vmatprep.subr.mxu0 0.0
    %2171 = vmatpush1.msra.mxu0 %v404
    %2172 = vmatprep.subr.mxu0 0.0
    %2173 = vmatpush1.msra.mxu0 %v405
    %2174 = vmatprep.subr.mxu0 0.0
    %2175 = vmatpush1.msra.mxu0 %v406
    %2176 = vmatprep.subr.mxu0 0.0
    %2177 = vmatpush1.msra.mxu0 %v407
    %2178 = vmatprep.subr.mxu0 0.0
    %2179 = vmatpush1.msra.mxu0 %v408
    %2180 = vmatprep.subr.mxu0 0.0
    %2181 = vmatpush1.msra.mxu0 %v409
    %2182 = vmatprep.subr.mxu0 0.0
    %2183 = vmatpush1.msra.mxu0 %v410
    %2184 = vmatprep.subr.mxu0 0.0
    %2185 = vmatpush1.msra.mxu0 %v411
    %2186 = vmatprep.subr.mxu0 0.0
    %2187 = vmatpush1.msra.mxu0 %v412
    %2188 = vmatprep.subr.mxu0 0.0
    %2189 = vmatpush1.msra.mxu0 %v413
    %2190 = vmatprep.subr.mxu0 0.0
    %2191 = vmatpush1.msra.mxu0 %v414
    %2192 = vmatprep.subr.mxu0 0.0
    %2193 = vmatpush1.msra.mxu0 %v415
    %2194 = vmatprep.subr.mxu0 0.0
    %2195 = vmatpush1.msra.mxu0 %v416
    %2196 = vmatprep.subr.mxu0 0.0
    %2197 = vmatpush1.msra.mxu0 %v417
    %2198 = vmatprep.subr.mxu0 0.0
    %2199 = vmatpush1.msra.mxu0 %v418
    %2200 = vmatprep.subr.mxu0 0.0
    %2201 = vmatpush1.msra.mxu0 %v419
    %2202 = vmatprep.subr.mxu0 0.0
    %2203 = vmatpush1.msra.mxu0 %v420
    %2204 = vmatprep.subr.mxu0 0.0
    %2205 = vmatpush1.msra.mxu0 %v421
    %2206 = vmatprep.subr.mxu0 0.0
    %2207 = vmatpush1.msra.mxu0 %v422
    %2208 = vmatprep.subr.mxu0 0.0
    %2209 = vmatpush1.msra.mxu0 %v423
    %2210 = vmatprep.subr.mxu0 0.0
    %2211 = vmatpush1.msra.mxu0 %v424
    %2212 = vmatprep.subr.mxu0 0.0
    %2213 = vmatpush1.msra.mxu0 %v425
    %2214 = vmatprep.mubr.f32.mxu0 %v1214
    %2215 = vmatmul.mubr.f32.gmra.mrb[0].mxu0 %v1206
    %v2216 = vpop.f32.mrb[0].mxu0
    %v2217 = vadd.f32 %v2147, %v2216
    %v2218 = vpop.f32.mrb[0].mxu0
    %2219 = vdwg.mxu0
    %2220 = vmatprep.subr.mxu0 0.0
    %2221 = vmatpush1.msra.mxu0 %v426
    %2222 = vmatprep.subr.mxu0 0.0
    %2223 = vmatpush1.msra.mxu0 %v427
    %2224 = vmatprep.subr.mxu0 0.0
    %2225 = vmatpush1.msra.mxu0 %v428
    %2226 = vmatprep.subr.mxu0 0.0
    %2227 = vmatpush1.msra.mxu0 %v429
    %2228 = vmatprep.subr.mxu0 0.0
    %2229 = vmatpush1.msra.mxu0 %v430
    %2230 = vmatprep.subr.mxu0 0.0
    %2231 = vmatpush1.msra.mxu0 %v431
    %2232 = vmatprep.subr.mxu0 0.0
    %2233 = vmatpush1.msra.mxu0 %v432
    %2234 = vmatprep.subr.mxu0 0.0
    %2235 = vmatpush1.msra.mxu0 %v433
    %2236 = vmatprep.subr.mxu0 0.0
    %2237 = vmatpush1.msra.mxu0 %v434
    %2238 = vmatprep.subr.mxu0 0.0
    %2239 = vmatpush1.msra.mxu0 %v435
    %2240 = vmatprep.subr.mxu0 0.0
    %2241 = vmatpush1.msra.mxu0 %v436
    %2242 = vmatprep.subr.mxu0 0.0
    %2243 = vmatpush1.msra.mxu0 %v437
    %2244 = vmatprep.subr.mxu0 0.0
    %2245 = vmatpush1.msra.mxu0 %v438
    %2246 = vmatprep.subr.mxu0 0.0
    %2247 = vmatpush1.msra.mxu0 %v439
    %2248 = vmatprep.subr.mxu0 0.0
    %2249 = vmatpush1.msra.mxu0 %v440
    %2250 = vmatprep.subr.mxu0 0.0
    %2251 = vmatpush1.msra.mxu0 %v441
    %2252 = vmatprep.subr.mxu0 0.0
    %2253 = vmatpush1.msra.mxu0 %v442
    %2254 = vmatprep.subr.mxu0 0.0
    %2255 = vmatpush1.msra.mxu0 %v443
    %2256 = vmatprep.subr.mxu0 0.0
    %2257 = vmatpush1.msra.mxu0 %v444
    %2258 = vmatprep.subr.mxu0 0.0
    %2259 = vmatpush1.msra.mxu0 %v445
    %2260 = vmatprep.subr.mxu0 0.0
    %2261 = vmatpush1.msra.mxu0 %v446
    %2262 = vmatprep.subr.mxu0 0.0
    %2263 = vmatpush1.msra.mxu0 %v447
    %2264 = vmatprep.subr.mxu0 0.0
    %2265 = vmatpush1.msra.mxu0 %v448
    %2266 = vmatprep.subr.mxu0 0.0
    %2267 = vmatpush1.msra.mxu0 %v449
    %2268 = vmatprep.subr.mxu0 0.0
    %2269 = vmatpush1.msra.mxu0 %v450
    %2270 = vmatprep.subr.mxu0 0.0
    %2271 = vmatpush1.msra.mxu0 %v451
    %2272 = vmatprep.subr.mxu0 0.0
    %2273 = vmatpush1.msra.mxu0 %v452
    %2274 = vmatprep.subr.mxu0 0.0
    %2275 = vmatpush1.msra.mxu0 %v453
    %2276 = vmatprep.subr.mxu0 0.0
    %2277 = vmatpush1.msra.mxu0 %v454
    %2278 = vmatprep.subr.mxu0 0.0
    %2279 = vmatpush1.msra.mxu0 %v455
    %2280 = vmatprep.subr.mxu0 0.0
    %2281 = vmatpush1.msra.mxu0 %v456
    %2282 = vmatprep.subr.mxu0 0.0
    %2283 = vmatpush1.msra.mxu0 %v457
    %2284 = vmatprep.mubr.f32.mxu0 %v1215
    %2285 = vmatmul.mubr.f32.gmra.mrb[0].mxu0 %v1213
    %v2286 = vpop.f32.mrb[0].mxu0
    %v2287 = vadd.f32 %v2217, %v2286
    %v2288 = vpop.f32.mrb[0].mxu0
    %2289 = vdwg.mxu0
    %2290 = vmatprep.subr.mxu0 0.0
    %2291 = vmatpush1.msra.mxu0 %v458
    %2292 = vmatprep.subr.mxu0 0.0
    %2293 = vmatpush1.msra.mxu0 %v459
    %2294 = vmatprep.subr.mxu0 0.0
    %2295 = vmatpush1.msra.mxu0 %v460
    %2296 = vmatprep.subr.mxu0 0.0
    %2297 = vmatpush1.msra.mxu0 %v461
    %2298 = vmatprep.subr.mxu0 0.0
    %2299 = vmatpush1.msra.mxu0 %v462
    %2300 = vmatprep.subr.mxu0 0.0
    %2301 = vmatpush1.msra.mxu0 %v463
    %2302 = vmatprep.subr.mxu0 0.0
    %2303 = vmatpush1.msra.mxu0 %v464
    %2304 = vmatprep.subr.mxu0 0.0
    %2305 = vmatpush1.msra.mxu0 %v465
    %2306 = vmatprep.subr.mxu0 0.0
    %2307 = vmatpush1.msra.mxu0 %v466
    %2308 = vmatprep.subr.mxu0 0.0
    %2309 = vmatpush1.msra.mxu0 %v467
    %2310 = vmatprep.subr.mxu0 0.0
    %2311 = vmatpush1.msra.mxu0 %v468
    %2312 = vmatprep.subr.mxu0 0.0
    %2313 = vmatpush1.msra.mxu0 %v469
    %2314 = vmatprep.subr.mxu0 0.0
    %2315 = vmatpush1.msra.mxu0 %v470
    %2316 = vmatprep.subr.mxu0 0.0
    %2317 = vmatpush1.msra.mxu0 %v471
    %2318 = vmatprep.subr.mxu0 0.0
    %2319 = vmatpush1.msra.mxu0 %v472
    %2320 = vmatprep.subr.mxu0 0.0
    %2321 = vmatpush1.msra.mxu0 %v473
    %2322 = vmatprep.subr.mxu0 0.0
    %2323 = vmatpush1.msra.mxu0 %v474
    %2324 = vmatprep.subr.mxu0 0.0
    %2325 = vmatpush1.msra.mxu0 %v475
    %2326 = vmatprep.subr.mxu0 0.0
    %2327 = vmatpush1.msra.mxu0 %v476
    %2328 = vmatprep.subr.mxu0 0.0
    %2329 = vmatpush1.msra.mxu0 %v477
    %2330 = vmatprep.subr.mxu0 0.0
    %2331 = vmatpush1.msra.mxu0 %v478
    %2332 = vmatprep.subr.mxu0 0.0
    %2333 = vmatpush1.msra.mxu0 %v479
    %2334 = vmatprep.subr.mxu0 0.0
    %2335 = vmatpush1.msra.mxu0 %v480
    %2336 = vmatprep.subr.mxu0 0.0
    %2337 = vmatpush1.msra.mxu0 %v481
    %2338 = vmatprep.subr.mxu0 0.0
    %2339 = vmatpush1.msra.mxu0 %v482
    %2340 = vmatprep.subr.mxu0 0.0
    %2341 = vmatpush1.msra.mxu0 %v483
    %2342 = vmatprep.subr.mxu0 0.0
    %2343 = vmatpush1.msra.mxu0 %v484
    %2344 = vmatprep.subr.mxu0 0.0
    %2345 = vmatpush1.msra.mxu0 %v485
    %2346 = vmatprep.subr.mxu0 0.0
    %2347 = vmatpush1.msra.mxu0 %v486
    %2348 = vmatprep.subr.mxu0 0.0
    %2349 = vmatpush1.msra.mxu0 %v487
    %2350 = vmatprep.subr.mxu0 0.0
    %2351 = vmatpush1.msra.mxu0 %v488
    %2352 = vmatprep.subr.mxu0 0.0
    %2353 = vmatpush1.msra.mxu0 %v489
    %2354 = vmatprep.mubr.f32.mxu0 %v1231
    %2355 = vmatmul.mubr.f32.gmra.mrb[0].mxu0 %v1223
    %v2356 = vpop.f32.mrb[0].mxu0
    %v2357 = vadd.f32 %v2287, %v2356
    %v2358 = vpop.f32.mrb[0].mxu0
    %2359 = vdwg.mxu0
    %2360 = vmatprep.subr.mxu0 0.0
    %2361 = vmatpush1.msra.mxu0 %v490
    %2362 = vmatprep.subr.mxu0 0.0
    %2363 = vmatpush1.msra.mxu0 %v491
    %2364 = vmatprep.subr.mxu0 0.0
    %2365 = vmatpush1.msra.mxu0 %v492
    %2366 = vmatprep.subr.mxu0 0.0
    %2367 = vmatpush1.msra.mxu0 %v493
    %2368 = vmatprep.subr.mxu0 0.0
    %2369 = vmatpush1.msra.mxu0 %v494
    %2370 = vmatprep.subr.mxu0 0.0
    %2371 = vmatpush1.msra.mxu0 %v495
    %2372 = vmatprep.subr.mxu0 0.0
    %2373 = vmatpush1.msra.mxu0 %v496
    %2374 = vmatprep.subr.mxu0 0.0
    %2375 = vmatpush1.msra.mxu0 %v497
    %2376 = vmatprep.subr.mxu0 0.0
    %2377 = vmatpush1.msra.mxu0 %v498
    %2378 = vmatprep.subr.mxu0 0.0
    %2379 = vmatpush1.msra.mxu0 %v499
    %2380 = vmatprep.subr.mxu0 0.0
    %2381 = vmatpush1.msra.mxu0 %v500
    %2382 = vmatprep.subr.mxu0 0.0
    %2383 = vmatpush1.msra.mxu0 %v501
    %2384 = vmatprep.subr.mxu0 0.0
    %2385 = vmatpush1.msra.mxu0 %v502
    %2386 = vmatprep.subr.mxu0 0.0
    %2387 = vmatpush1.msra.mxu0 %v503
    %2388 = vmatprep.subr.mxu0 0.0
    %2389 = vmatpush1.msra.mxu0 %v504
    %2390 = vmatprep.subr.mxu0 0.0
    %2391 = vmatpush1.msra.mxu0 %v505
    %2392 = vmatprep.subr.mxu0 0.0
    %2393 = vmatpush1.msra.mxu0 %v506
    %2394 = vmatprep.subr.mxu0 0.0
    %2395 = vmatpush1.msra.mxu0 %v507
    %2396 = vmatprep.subr.mxu0 0.0
    %2397 = vmatpush1.msra.mxu0 %v508
    %2398 = vmatprep.subr.mxu0 0.0
    %2399 = vmatpush1.msra.mxu0 %v509
    %2400 = vmatprep.subr.mxu0 0.0
    %2401 = vmatpush1.msra.mxu0 %v510
    %2402 = vmatprep.subr.mxu0 0.0
    %2403 = vmatpush1.msra.mxu0 %v511
    %2404 = vmatprep.subr.mxu0 0.0
    %2405 = vmatpush1.msra.mxu0 %v512
    %2406 = vmatprep.subr.mxu0 0.0
    %2407 = vmatpush1.msra.mxu0 %v513
    %2408 = vmatprep.subr.mxu0 0.0
    %2409 = vmatpush1.msra.mxu0 %v514
    %2410 = vmatprep.subr.mxu0 0.0
    %2411 = vmatpush1.msra.mxu0 %v515
    %2412 = vmatprep.subr.mxu0 0.0
    %2413 = vmatpush1.msra.mxu0 %v516
    %2414 = vmatprep.subr.mxu0 0.0
    %2415 = vmatpush1.msra.mxu0 %v517
    %2416 = vmatprep.subr.mxu0 0.0
    %2417 = vmatpush1.msra.mxu0 %v518
    %2418 = vmatprep.subr.mxu0 0.0
    %2419 = vmatpush1.msra.mxu0 %v519
    %2420 = vmatprep.subr.mxu0 0.0
    %2421 = vmatpush1.msra.mxu0 %v520
    %2422 = vmatprep.subr.mxu0 0.0
    %2423 = vmatpush1.msra.mxu0 %v521
    %2424 = vmatprep.mubr.f32.mxu0 %v1232
    %2425 = vmatmul.mubr.f32.gmra.mrb[0].mxu0 %v1230
    %v2426 = vpop.f32.mrb[0].mxu0
    %v2427 = vadd.f32 %v2357, %v2426
    %v2428 = vpop.f32.mrb[0].mxu0
    %2429 = vdwg.mxu0
    %2430 = vmatprep.subr.mxu0 0.0
    %2431 = vmatpush1.msra.mxu0 %v522
    %2432 = vmatprep.subr.mxu0 0.0
    %2433 = vmatpush1.msra.mxu0 %v523
    %2434 = vmatprep.subr.mxu0 0.0
    %2435 = vmatpush1.msra.mxu0 %v524
    %2436 = vmatprep.subr.mxu0 0.0
    %2437 = vmatpush1.msra.mxu0 %v525
    %2438 = vmatprep.subr.mxu0 0.0
    %2439 = vmatpush1.msra.mxu0 %v526
    %2440 = vmatprep.subr.mxu0 0.0
    %2441 = vmatpush1.msra.mxu0 %v527
    %2442 = vmatprep.subr.mxu0 0.0
    %2443 = vmatpush1.msra.mxu0 %v528
    %2444 = vmatprep.subr.mxu0 0.0
    %2445 = vmatpush1.msra.mxu0 %v529
    %2446 = vmatprep.subr.mxu0 0.0
    %2447 = vmatpush1.msra.mxu0 %v530
    %2448 = vmatprep.subr.mxu0 0.0
    %2449 = vmatpush1.msra.mxu0 %v531
    %2450 = vmatprep.subr.mxu0 0.0
    %2451 = vmatpush1.msra.mxu0 %v532
    %2452 = vmatprep.subr.mxu0 0.0
    %2453 = vmatpush1.msra.mxu0 %v533
    %2454 = vmatprep.subr.mxu0 0.0
    %2455 = vmatpush1.msra.mxu0 %v534
    %2456 = vmatprep.subr.mxu0 0.0
    %2457 = vmatpush1.msra.mxu0 %v535
    %2458 = vmatprep.subr.mxu0 0.0
    %2459 = vmatpush1.msra.mxu0 %v536
    %2460 = vmatprep.subr.mxu0 0.0
    %2461 = vmatpush1.msra.mxu0 %v537
    %2462 = vmatprep.subr.mxu0 0.0
    %2463 = vmatpush1.msra.mxu0 %v538
    %2464 = vmatprep.subr.mxu0 0.0
    %2465 = vmatpush1.msra.mxu0 %v539
    %2466 = vmatprep.subr.mxu0 0.0
    %2467 = vmatpush1.msra.mxu0 %v540
    %2468 = vmatprep.subr.mxu0 0.0
    %2469 = vmatpush1.msra.mxu0 %v541
    %2470 = vmatprep.subr.mxu0 0.0
    %2471 = vmatpush1.msra.mxu0 %v542
    %2472 = vmatprep.subr.mxu0 0.0
    %2473 = vmatpush1.msra.mxu0 %v543
    %2474 = vmatprep.subr.mxu0 0.0
    %2475 = vmatpush1.msra.mxu0 %v544
    %2476 = vmatprep.subr.mxu0 0.0
    %2477 = vmatpush1.msra.mxu0 %v545
    %2478 = vmatprep.subr.mxu0 0.0
    %2479 = vmatpush1.msra.mxu0 %v546
    %2480 = vmatprep.subr.mxu0 0.0
    %2481 = vmatpush1.msra.mxu0 %v547
    %2482 = vmatprep.subr.mxu0 0.0
    %2483 = vmatpush1.msra.mxu0 %v548
    %2484 = vmatprep.subr.mxu0 0.0
    %2485 = vmatpush1.msra.mxu0 %v549
    %2486 = vmatprep.subr.mxu0 0.0
    %2487 = vmatpush1.msra.mxu0 %v550
    %2488 = vmatprep.subr.mxu0 0.0
    %2489 = vmatpush1.msra.mxu0 %v551
    %2490 = vmatprep.subr.mxu0 0.0
    %2491 = vmatpush1.msra.mxu0 %v552
    %2492 = vmatprep.subr.mxu0 0.0
    %2493 = vmatpush1.msra.mxu0 %v553
    %2494 = vmatprep.mubr.f32.mxu0 %v1248
    %2495 = vmatmul.mubr.f32.gmra.mrb[0].mxu0 %v1240
    %v2496 = vpop.f32.mrb[0].mxu0
    %v2497 = vadd.f32 %v2427, %v2496
    %v2498 = vpop.f32.mrb[0].mxu0
    %2499 = vdwg.mxu0
    %2500 = vmatprep.subr.mxu0 0.0
    %2501 = vmatpush1.msra.mxu0 %v554
    %2502 = vmatprep.subr.mxu0 0.0
    %2503 = vmatpush1.msra.mxu0 %v555
    %2504 = vmatprep.subr.mxu0 0.0
    %2505 = vmatpush1.msra.mxu0 %v556
    %2506 = vmatprep.subr.mxu0 0.0
    %2507 = vmatpush1.msra.mxu0 %v557
    %2508 = vmatprep.subr.mxu0 0.0
    %2509 = vmatpush1.msra.mxu0 %v558
    %2510 = vmatprep.subr.mxu0 0.0
    %2511 = vmatpush1.msra.mxu0 %v559
    %2512 = vmatprep.subr.mxu0 0.0
    %2513 = vmatpush1.msra.mxu0 %v560
    %2514 = vmatprep.subr.mxu0 0.0
    %2515 = vmatpush1.msra.mxu0 %v561
    %2516 = vmatprep.subr.mxu0 0.0
    %2517 = vmatpush1.msra.mxu0 %v562
    %2518 = vmatprep.subr.mxu0 0.0
    %2519 = vmatpush1.msra.mxu0 %v563
    %2520 = vmatprep.subr.mxu0 0.0
    %2521 = vmatpush1.msra.mxu0 %v564
    %2522 = vmatprep.subr.mxu0 0.0
    %2523 = vmatpush1.msra.mxu0 %v565
    %2524 = vmatprep.subr.mxu0 0.0
    %2525 = vmatpush1.msra.mxu0 %v566
    %2526 = vmatprep.subr.mxu0 0.0
    %2527 = vmatpush1.msra.mxu0 %v567
    %2528 = vmatprep.subr.mxu0 0.0
    %2529 = vmatpush1.msra.mxu0 %v568
    %2530 = vmatprep.subr.mxu0 0.0
    %2531 = vmatpush1.msra.mxu0 %v569
    %2532 = vmatprep.subr.mxu0 0.0
    %2533 = vmatpush1.msra.mxu0 %v570
    %2534 = vmatprep.subr.mxu0 0.0
    %2535 = vmatpush1.msra.mxu0 %v571
    %2536 = vmatprep.subr.mxu0 0.0
    %2537 = vmatpush1.msra.mxu0 %v572
    %2538 = vmatprep.subr.mxu0 0.0
    %2539 = vmatpush1.msra.mxu0 %v573
    %2540 = vmatprep.subr.mxu0 0.0
    %2541 = vmatpush1.msra.mxu0 %v574
    %2542 = vmatprep.subr.mxu0 0.0
    %2543 = vmatpush1.msra.mxu0 %v575
    %2544 = vmatprep.subr.mxu0 0.0
    %2545 = vmatpush1.msra.mxu0 %v576
    %2546 = vmatprep.subr.mxu0 0.0
    %2547 = vmatpush1.msra.mxu0 %v577
    %2548 = vmatprep.subr.mxu0 0.0
    %2549 = vmatpush1.msra.mxu0 %v578
    %2550 = vmatprep.subr.mxu0 0.0
    %2551 = vmatpush1.msra.mxu0 %v579
    %2552 = vmatprep.subr.mxu0 0.0
    %2553 = vmatpush1.msra.mxu0 %v580
    %2554 = vmatprep.subr.mxu0 0.0
    %2555 = vmatpush1.msra.mxu0 %v581
    %2556 = vmatprep.subr.mxu0 0.0
    %2557 = vmatpush1.msra.mxu0 %v582
    %2558 = vmatprep.subr.mxu0 0.0
    %2559 = vmatpush1.msra.mxu0 %v583
    %2560 = vmatprep.subr.mxu0 0.0
    %2561 = vmatpush1.msra.mxu0 %v584
    %2562 = vmatprep.subr.mxu0 0.0
    %2563 = vmatpush1.msra.mxu0 %v585
    %2564 = vmatprep.mubr.f32.mxu0 %v1249
    %2565 = vmatmul.mubr.f32.gmra.mrb[0].mxu0 %v1247
    %v2566 = vpop.f32.mrb[0].mxu0
    %v2567 = vadd.f32 %v2497, %v2566
    %v2568 = vpop.f32.mrb[0].mxu0
    %2569 = vdwg.mxu0
    %2570 = vmatprep.subr.mxu0 0.0
    %2571 = vmatpush1.msra.mxu0 %v586
    %2572 = vmatprep.subr.mxu0 0.0
    %2573 = vmatpush1.msra.mxu0 %v587
    %2574 = vmatprep.subr.mxu0 0.0
    %2575 = vmatpush1.msra.mxu0 %v588
    %2576 = vmatprep.subr.mxu0 0.0
    %2577 = vmatpush1.msra.mxu0 %v589
    %2578 = vmatprep.subr.mxu0 0.0
    %2579 = vmatpush1.msra.mxu0 %v590
    %2580 = vmatprep.subr.mxu0 0.0
    %2581 = vmatpush1.msra.mxu0 %v591
    %2582 = vmatprep.subr.mxu0 0.0
    %2583 = vmatpush1.msra.mxu0 %v592
    %2584 = vmatprep.subr.mxu0 0.0
    %2585 = vmatpush1.msra.mxu0 %v593
    %2586 = vmatprep.subr.mxu0 0.0
    %2587 = vmatpush1.msra.mxu0 %v594
    %2588 = vmatprep.subr.mxu0 0.0
    %2589 = vmatpush1.msra.mxu0 %v595
    %2590 = vmatprep.subr.mxu0 0.0
    %2591 = vmatpush1.msra.mxu0 %v596
    %2592 = vmatprep.subr.mxu0 0.0
    %2593 = vmatpush1.msra.mxu0 %v597
    %2594 = vmatprep.subr.mxu0 0.0
    %2595 = vmatpush1.msra.mxu0 %v598
    %2596 = vmatprep.subr.mxu0 0.0
    %2597 = vmatpush1.msra.mxu0 %v599
    %2598 = vmatprep.subr.mxu0 0.0
    %2599 = vmatpush1.msra.mxu0 %v600
    %2600 = vmatprep.subr.mxu0 0.0
    %2601 = vmatpush1.msra.mxu0 %v601
    %2602 = vmatprep.subr.mxu0 0.0
    %2603 = vmatpush1.msra.mxu0 %v602
    %2604 = vmatprep.subr.mxu0 0.0
    %2605 = vmatpush1.msra.mxu0 %v603
    %2606 = vmatprep.subr.mxu0 0.0
    %2607 = vmatpush1.msra.mxu0 %v604
    %2608 = vmatprep.subr.mxu0 0.0
    %2609 = vmatpush1.msra.mxu0 %v605
    %2610 = vmatprep.subr.mxu0 0.0
    %2611 = vmatpush1.msra.mxu0 %v606
    %2612 = vmatprep.subr.mxu0 0.0
    %2613 = vmatpush1.msra.mxu0 %v607
    %2614 = vmatprep.subr.mxu0 0.0
    %2615 = vmatpush1.msra.mxu0 %v608
    %2616 = vmatprep.subr.mxu0 0.0
    %2617 = vmatpush1.msra.mxu0 %v609
    %2618 = vmatprep.subr.mxu0 0.0
    %2619 = vmatpush1.msra.mxu0 %v610
    %2620 = vmatprep.subr.mxu0 0.0
    %2621 = vmatpush1.msra.mxu0 %v611
    %2622 = vmatprep.subr.mxu0 0.0
    %2623 = vmatpush1.msra.mxu0 %v612
    %2624 = vmatprep.subr.mxu0 0.0
    %2625 = vmatpush1.msra.mxu0 %v613
    %2626 = vmatprep.subr.mxu0 0.0
    %2627 = vmatpush1.msra.mxu0 %v614
    %2628 = vmatprep.subr.mxu0 0.0
    %2629 = vmatpush1.msra.mxu0 %v615
    %2630 = vmatprep.subr.mxu0 0.0
    %2631 = vmatpush1.msra.mxu0 %v616
    %2632 = vmatprep.subr.mxu0 0.0
    %2633 = vmatpush1.msra.mxu0 %v617
    %2634 = vmatprep.mubr.f32.mxu0 %v1265
    %2635 = vmatmul.mubr.f32.gmra.mrb[0].mxu0 %v1257
    %v2636 = vpop.f32.mrb[0].mxu0
    %v2637 = vadd.f32 %v2567, %v2636
    %v2638 = vpop.f32.mrb[0].mxu0
    %2639 = vdwg.mxu0
    %2640 = vmatprep.subr.mxu0 0.0
    %2641 = vmatpush1.msra.mxu0 %v618
    %2642 = vmatprep.subr.mxu0 0.0
    %2643 = vmatpush1.msra.mxu0 %v619
    %2644 = vmatprep.subr.mxu0 0.0
    %2645 = vmatpush1.msra.mxu0 %v620
    %2646 = vmatprep.subr.mxu0 0.0
    %2647 = vmatpush1.msra.mxu0 %v621
    %2648 = vmatprep.subr.mxu0 0.0
    %2649 = vmatpush1.msra.mxu0 %v622
    %2650 = vmatprep.subr.mxu0 0.0
    %2651 = vmatpush1.msra.mxu0 %v623
    %2652 = vmatprep.subr.mxu0 0.0
    %2653 = vmatpush1.msra.mxu0 %v624
    %2654 = vmatprep.subr.mxu0 0.0
    %2655 = vmatpush1.msra.mxu0 %v625
    %2656 = vmatprep.subr.mxu0 0.0
    %2657 = vmatpush1.msra.mxu0 %v626
    %2658 = vmatprep.subr.mxu0 0.0
    %2659 = vmatpush1.msra.mxu0 %v627
    %2660 = vmatprep.subr.mxu0 0.0
    %2661 = vmatpush1.msra.mxu0 %v628
    %2662 = vmatprep.subr.mxu0 0.0
    %2663 = vmatpush1.msra.mxu0 %v629
    %2664 = vmatprep.subr.mxu0 0.0
    %2665 = vmatpush1.msra.mxu0 %v630
    %2666 = vmatprep.subr.mxu0 0.0
    %2667 = vmatpush1.msra.mxu0 %v631
    %2668 = vmatprep.subr.mxu0 0.0
    %2669 = vmatpush1.msra.mxu0 %v632
    %2670 = vmatprep.subr.mxu0 0.0
    %2671 = vmatpush1.msra.mxu0 %v633
    %2672 = vmatprep.subr.mxu0 0.0
    %2673 = vmatpush1.msra.mxu0 %v634
    %2674 = vmatprep.subr.mxu0 0.0
    %2675 = vmatpush1.msra.mxu0 %v635
    %2676 = vmatprep.subr.mxu0 0.0
    %2677 = vmatpush1.msra.mxu0 %v636
    %2678 = vmatprep.subr.mxu0 0.0
    %2679 = vmatpush1.msra.mxu0 %v637
    %2680 = vmatprep.subr.mxu0 0.0
    %2681 = vmatpush1.msra.mxu0 %v638
    %2682 = vmatprep.subr.mxu0 0.0
    %2683 = vmatpush1.msra.mxu0 %v639
    %2684 = vmatprep.subr.mxu0 0.0
    %2685 = vmatpush1.msra.mxu0 %v640
    %2686 = vmatprep.subr.mxu0 0.0
    %2687 = vmatpush1.msra.mxu0 %v641
    %2688 = vmatprep.subr.mxu0 0.0
    %2689 = vmatpush1.msra.mxu0 %v642
    %2690 = vmatprep.subr.mxu0 0.0
    %2691 = vmatpush1.msra.mxu0 %v643
    %2692 = vmatprep.subr.mxu0 0.0
    %2693 = vmatpush1.msra.mxu0 %v644
    %2694 = vmatprep.subr.mxu0 0.0
    %2695 = vmatpush1.msra.mxu0 %v645
    %2696 = vmatprep.subr.mxu0 0.0
    %2697 = vmatpush1.msra.mxu0 %v646
    %2698 = vmatprep.subr.mxu0 0.0
    %2699 = vmatpush1.msra.mxu0 %v647
    %2700 = vmatprep.subr.mxu0 0.0
    %2701 = vmatpush1.msra.mxu0 %v648
    %2702 = vmatprep.subr.mxu0 0.0
    %2703 = vmatpush1.msra.mxu0 %v649
    %2704 = vmatprep.mubr.f32.mxu0 %v1266
    %2705 = vmatmul.mubr.f32.gmra.mrb[0].mxu0 %v1264
    %v2706 = vpop.f32.mrb[0].mxu0
    %v2707 = vadd.f32 %v2637, %v2706
    %v2708 = vpop.f32.mrb[0].mxu0
    %2709 = vdwg.mxu0
    %2710 = vmatprep.subr.mxu0 0.0
    %2711 = vmatpush1.msra.mxu0 %v650
    %2712 = vmatprep.subr.mxu0 0.0
    %2713 = vmatpush1.msra.mxu0 %v651
    %2714 = vmatprep.subr.mxu0 0.0
    %2715 = vmatpush1.msra.mxu0 %v652
    %2716 = vmatprep.subr.mxu0 0.0
    %2717 = vmatpush1.msra.mxu0 %v653
    %2718 = vmatprep.subr.mxu0 0.0
    %2719 = vmatpush1.msra.mxu0 %v654
    %2720 = vmatprep.subr.mxu0 0.0
    %2721 = vmatpush1.msra.mxu0 %v655
    %2722 = vmatprep.subr.mxu0 0.0
    %2723 = vmatpush1.msra.mxu0 %v656
    %2724 = vmatprep.subr.mxu0 0.0
    %2725 = vmatpush1.msra.mxu0 %v657
    %2726 = vmatprep.subr.mxu0 0.0
    %2727 = vmatpush1.msra.mxu0 %v658
    %2728 = vmatprep.subr.mxu0 0.0
    %2729 = vmatpush1.msra.mxu0 %v659
    %2730 = vmatprep.subr.mxu0 0.0
    %2731 = vmatpush1.msra.mxu0 %v660
    %2732 = vmatprep.subr.mxu0 0.0
    %2733 = vmatpush1.msra.mxu0 %v661
    %2734 = vmatprep.subr.mxu0 0.0
    %2735 = vmatpush1.msra.mxu0 %v662
    %2736 = vmatprep.subr.mxu0 0.0
    %2737 = vmatpush1.msra.mxu0 %v663
    %2738 = vmatprep.subr.mxu0 0.0
    %2739 = vmatpush1.msra.mxu0 %v664
    %2740 = vmatprep.subr.mxu0 0.0
    %2741 = vmatpush1.msra.mxu0 %v665
    %2742 = vmatprep.subr.mxu0 0.0
    %2743 = vmatpush1.msra.mxu0 %v666
    %2744 = vmatprep.subr.mxu0 0.0
    %2745 = vmatpush1.msra.mxu0 %v667
    %2746 = vmatprep.subr.mxu0 0.0
    %2747 = vmatpush1.msra.mxu0 %v668
    %2748 = vmatprep.subr.mxu0 0.0
    %2749 = vmatpush1.msra.mxu0 %v669
    %2750 = vmatprep.subr.mxu0 0.0
    %2751 = vmatpush1.msra.mxu0 %v670
    %2752 = vmatprep.subr.mxu0 0.0
    %2753 = vmatpush1.msra.mxu0 %v671
    %2754 = vmatprep.subr.mxu0 0.0
    %2755 = vmatpush1.msra.mxu0 %v672
    %2756 = vmatprep.subr.mxu0 0.0
    %2757 = vmatpush1.msra.mxu0 %v673
    %2758 = vmatprep.subr.mxu0 0.0
    %2759 = vmatpush1.msra.mxu0 %v674
    %2760 = vmatprep.subr.mxu0 0.0
    %2761 = vmatpush1.msra.mxu0 %v675
    %2762 = vmatprep.subr.mxu0 0.0
    %2763 = vmatpush1.msra.mxu0 %v676
    %2764 = vmatprep.subr.mxu0 0.0
    %2765 = vmatpush1.msra.mxu0 %v677
    %2766 = vmatprep.subr.mxu0 0.0
    %2767 = vmatpush1.msra.mxu0 %v678
    %2768 = vmatprep.subr.mxu0 0.0
    %2769 = vmatpush1.msra.mxu0 %v679
    %2770 = vmatprep.subr.mxu0 0.0
    %2771 = vmatpush1.msra.mxu0 %v680
    %2772 = vmatprep.subr.mxu0 0.0
    %2773 = vmatpush1.msra.mxu0 %v681
    %2774 = vmatprep.mubr.f32.mxu0 %v1282
    %2775 = vmatmul.mubr.f32.gmra.mrb[0].mxu0 %v1274
    %v2776 = vpop.f32.mrb[0].mxu0
    %v2777 = vadd.f32 %v2707, %v2776
    %v2778 = vpop.f32.mrb[0].mxu0
    %2779 = vdwg.mxu0
    %2780 = vmatprep.subr.mxu0 0.0
    %2781 = vmatpush1.msra.mxu0 %v682
    %2782 = vmatprep.subr.mxu0 0.0
    %2783 = vmatpush1.msra.mxu0 %v683
    %2784 = vmatprep.subr.mxu0 0.0
    %2785 = vmatpush1.msra.mxu0 %v684
    %2786 = vmatprep.subr.mxu0 0.0
    %2787 = vmatpush1.msra.mxu0 %v685
    %2788 = vmatprep.subr.mxu0 0.0
    %2789 = vmatpush1.msra.mxu0 %v686
    %2790 = vmatprep.subr.mxu0 0.0
    %2791 = vmatpush1.msra.mxu0 %v687
    %2792 = vmatprep.subr.mxu0 0.0
    %2793 = vmatpush1.msra.mxu0 %v688
    %2794 = vmatprep.subr.mxu0 0.0
    %2795 = vmatpush1.msra.mxu0 %v689
    %2796 = vmatprep.subr.mxu0 0.0
    %2797 = vmatpush1.msra.mxu0 %v690
    %2798 = vmatprep.subr.mxu0 0.0
    %2799 = vmatpush1.msra.mxu0 %v691
    %2800 = vmatprep.subr.mxu0 0.0
    %2801 = vmatpush1.msra.mxu0 %v692
    %2802 = vmatprep.subr.mxu0 0.0
    %2803 = vmatpush1.msra.mxu0 %v693
    %2804 = vmatprep.subr.mxu0 0.0
    %2805 = vmatpush1.msra.mxu0 %v694
    %2806 = vmatprep.subr.mxu0 0.0
    %2807 = vmatpush1.msra.mxu0 %v695
    %2808 = vmatprep.subr.mxu0 0.0
    %2809 = vmatpush1.msra.mxu0 %v696
    %2810 = vmatprep.subr.mxu0 0.0
    %2811 = vmatpush1.msra.mxu0 %v697
    %2812 = vmatprep.subr.mxu0 0.0
    %2813 = vmatpush1.msra.mxu0 %v698
    %2814 = vmatprep.subr.mxu0 0.0
    %2815 = vmatpush1.msra.mxu0 %v699
    %2816 = vmatprep.subr.mxu0 0.0
    %2817 = vmatpush1.msra.mxu0 %v700
    %2818 = vmatprep.subr.mxu0 0.0
    %2819 = vmatpush1.msra.mxu0 %v701
    %2820 = vmatprep.subr.mxu0 0.0
    %2821 = vmatpush1.msra.mxu0 %v702
    %2822 = vmatprep.subr.mxu0 0.0
    %2823 = vmatpush1.msra.mxu0 %v703
    %2824 = vmatprep.subr.mxu0 0.0
    %2825 = vmatpush1.msra.mxu0 %v704
    %2826 = vmatprep.subr.mxu0 0.0
    %2827 = vmatpush1.msra.mxu0 %v705
    %2828 = vmatprep.subr.mxu0 0.0
    %2829 = vmatpush1.msra.mxu0 %v706
    %2830 = vmatprep.subr.mxu0 0.0
    %2831 = vmatpush1.msra.mxu0 %v707
    %2832 = vmatprep.subr.mxu0 0.0
    %2833 = vmatpush1.msra.mxu0 %v708
    %2834 = vmatprep.subr.mxu0 0.0
    %2835 = vmatpush1.msra.mxu0 %v709
    %2836 = vmatprep.subr.mxu0 0.0
    %2837 = vmatpush1.msra.mxu0 %v710
    %2838 = vmatprep.subr.mxu0 0.0
    %2839 = vmatpush1.msra.mxu0 %v711
    %2840 = vmatprep.subr.mxu0 0.0
    %2841 = vmatpush1.msra.mxu0 %v712
    %2842 = vmatprep.subr.mxu0 0.0
    %2843 = vmatpush1.msra.mxu0 %v713
    %2844 = vmatprep.mubr.f32.mxu0 %v1283
    %2845 = vmatmul.mubr.f32.gmra.mrb[0].mxu0 %v1281
    %v2846 = vpop.f32.mrb[0].mxu0
    %v2847 = vadd.f32 %v2777, %v2846
    %v2848 = vpop.f32.mrb[0].mxu0
    %2849 = vdwg.mxu0
    %2850 = vmatprep.subr.mxu0 0.0
    %2851 = vmatpush1.msra.mxu0 %v714
    %2852 = vmatprep.subr.mxu0 0.0
    %2853 = vmatpush1.msra.mxu0 %v715
    %2854 = vmatprep.subr.mxu0 0.0
    %2855 = vmatpush1.msra.mxu0 %v716
    %2856 = vmatprep.subr.mxu0 0.0
    %2857 = vmatpush1.msra.mxu0 %v717
    %2858 = vmatprep.subr.mxu0 0.0
    %2859 = vmatpush1.msra.mxu0 %v718
    %2860 = vmatprep.subr.mxu0 0.0
    %2861 = vmatpush1.msra.mxu0 %v719
    %2862 = vmatprep.subr.mxu0 0.0
    %2863 = vmatpush1.msra.mxu0 %v720
    %2864 = vmatprep.subr.mxu0 0.0
    %2865 = vmatpush1.msra.mxu0 %v721
    %2866 = vmatprep.subr.mxu0 0.0
    %2867 = vmatpush1.msra.mxu0 %v722
    %2868 = vmatprep.subr.mxu0 0.0
    %2869 = vmatpush1.msra.mxu0 %v723
    %2870 = vmatprep.subr.mxu0 0.0
    %2871 = vmatpush1.msra.mxu0 %v724
    %2872 = vmatprep.subr.mxu0 0.0
    %2873 = vmatpush1.msra.mxu0 %v725
    %2874 = vmatprep.subr.mxu0 0.0
    %2875 = vmatpush1.msra.mxu0 %v726
    %2876 = vmatprep.subr.mxu0 0.0
    %2877 = vmatpush1.msra.mxu0 %v727
    %2878 = vmatprep.subr.mxu0 0.0
    %2879 = vmatpush1.msra.mxu0 %v728
    %2880 = vmatprep.subr.mxu0 0.0
    %2881 = vmatpush1.msra.mxu0 %v729
    %2882 = vmatprep.subr.mxu0 0.0
    %2883 = vmatpush1.msra.mxu0 %v730
    %2884 = vmatprep.subr.mxu0 0.0
    %2885 = vmatpush1.msra.mxu0 %v731
    %2886 = vmatprep.subr.mxu0 0.0
    %2887 = vmatpush1.msra.mxu0 %v732
    %2888 = vmatprep.subr.mxu0 0.0
    %2889 = vmatpush1.msra.mxu0 %v733
    %2890 = vmatprep.subr.mxu0 0.0
    %2891 = vmatpush1.msra.mxu0 %v734
    %2892 = vmatprep.subr.mxu0 0.0
    %2893 = vmatpush1.msra.mxu0 %v735
    %2894 = vmatprep.subr.mxu0 0.0
    %2895 = vmatpush1.msra.mxu0 %v736
    %2896 = vmatprep.subr.mxu0 0.0
    %2897 = vmatpush1.msra.mxu0 %v737
    %2898 = vmatprep.subr.mxu0 0.0
    %2899 = vmatpush1.msra.mxu0 %v738
    %2900 = vmatprep.subr.mxu0 0.0
    %2901 = vmatpush1.msra.mxu0 %v739
    %2902 = vmatprep.subr.mxu0 0.0
    %2903 = vmatpush1.msra.mxu0 %v740
    %2904 = vmatprep.subr.mxu0 0.0
    %2905 = vmatpush1.msra.mxu0 %v741
    %2906 = vmatprep.subr.mxu0 0.0
    %2907 = vmatpush1.msra.mxu0 %v742
    %2908 = vmatprep.subr.mxu0 0.0
    %2909 = vmatpush1.msra.mxu0 %v743
    %2910 = vmatprep.subr.mxu0 0.0
    %2911 = vmatpush1.msra.mxu0 %v744
    %2912 = vmatprep.subr.mxu0 0.0
    %2913 = vmatpush1.msra.mxu0 %v745
    %2914 = vmatprep.mubr.f32.mxu0 %v1299
    %2915 = vmatmul.mubr.f32.gmra.mrb[0].mxu0 %v1291
    %v2916 = vpop.f32.mrb[0].mxu0
    %v2917 = vadd.f32 %v2847, %v2916
    %v2918 = vpop.f32.mrb[0].mxu0
    %2919 = vdwg.mxu0
    %2920 = vmatprep.subr.mxu0 0.0
    %2921 = vmatpush1.msra.mxu0 %v746
    %2922 = vmatprep.subr.mxu0 0.0
    %2923 = vmatpush1.msra.mxu0 %v747
    %2924 = vmatprep.subr.mxu0 0.0
    %2925 = vmatpush1.msra.mxu0 %v748
    %2926 = vmatprep.subr.mxu0 0.0
    %2927 = vmatpush1.msra.mxu0 %v749
    %2928 = vmatprep.subr.mxu0 0.0
    %2929 = vmatpush1.msra.mxu0 %v750
    %2930 = vmatprep.subr.mxu0 0.0
    %2931 = vmatpush1.msra.mxu0 %v751
    %2932 = vmatprep.subr.mxu0 0.0
    %2933 = vmatpush1.msra.mxu0 %v752
    %2934 = vmatprep.subr.mxu0 0.0
    %2935 = vmatpush1.msra.mxu0 %v753
    %2936 = vmatprep.subr.mxu0 0.0
    %2937 = vmatpush1.msra.mxu0 %v754
    %2938 = vmatprep.subr.mxu0 0.0
    %2939 = vmatpush1.msra.mxu0 %v755
    %2940 = vmatprep.subr.mxu0 0.0
    %2941 = vmatpush1.msra.mxu0 %v756
    %2942 = vmatprep.subr.mxu0 0.0
    %2943 = vmatpush1.msra.mxu0 %v757
    %2944 = vmatprep.subr.mxu0 0.0
    %2945 = vmatpush1.msra.mxu0 %v758
    %2946 = vmatprep.subr.mxu0 0.0
    %2947 = vmatpush1.msra.mxu0 %v759
    %2948 = vmatprep.subr.mxu0 0.0
    %2949 = vmatpush1.msra.mxu0 %v760
    %2950 = vmatprep.subr.mxu0 0.0
    %2951 = vmatpush1.msra.mxu0 %v761
    %2952 = vmatprep.subr.mxu0 0.0
    %2953 = vmatpush1.msra.mxu0 %v762
    %2954 = vmatprep.subr.mxu0 0.0
    %2955 = vmatpush1.msra.mxu0 %v763
    %2956 = vmatprep.subr.mxu0 0.0
    %2957 = vmatpush1.msra.mxu0 %v764
    %2958 = vmatprep.subr.mxu0 0.0
    %2959 = vmatpush1.msra.mxu0 %v765
    %2960 = vmatprep.subr.mxu0 0.0
    %2961 = vmatpush1.msra.mxu0 %v766
    %2962 = vmatprep.subr.mxu0 0.0
    %2963 = vmatpush1.msra.mxu0 %v767
    %2964 = vmatprep.subr.mxu0 0.0
    %2965 = vmatpush1.msra.mxu0 %v768
    %2966 = vmatprep.subr.mxu0 0.0
    %2967 = vmatpush1.msra.mxu0 %v769
    %2968 = vmatprep.subr.mxu0 0.0
    %2969 = vmatpush1.msra.mxu0 %v770
    %2970 = vmatprep.subr.mxu0 0.0
    %2971 = vmatpush1.msra.mxu0 %v771
    %2972 = vmatprep.subr.mxu0 0.0
    %2973 = vmatpush1.msra.mxu0 %v772
    %2974 = vmatprep.subr.mxu0 0.0
    %2975 = vmatpush1.msra.mxu0 %v773
    %2976 = vmatprep.subr.mxu0 0.0
    %2977 = vmatpush1.msra.mxu0 %v774
    %2978 = vmatprep.subr.mxu0 0.0
    %2979 = vmatpush1.msra.mxu0 %v775
    %2980 = vmatprep.subr.mxu0 0.0
    %2981 = vmatpush1.msra.mxu0 %v776
    %2982 = vmatprep.subr.mxu0 0.0
    %2983 = vmatpush1.msra.mxu0 %v777
    %2984 = vmatprep.mubr.f32.mxu0 %v1300
    %2985 = vmatmul.mubr.f32.gmra.mrb[0].mxu0 %v1298
    %v2986 = vpop.f32.mrb[0].mxu0
    %v2987 = vadd.f32 %v2917, %v2986
    %v2988 = vpop.f32.mrb[0].mxu0
    %2989 = vdwg.mxu0
    %2990 = vmatprep.subr.mxu0 0.0
    %2991 = vmatpush1.msra.mxu0 %v778
    %2992 = vmatprep.subr.mxu0 0.0
    %2993 = vmatpush1.msra.mxu0 %v779
    %2994 = vmatprep.subr.mxu0 0.0
    %2995 = vmatpush1.msra.mxu0 %v780
    %2996 = vmatprep.subr.mxu0 0.0
    %2997 = vmatpush1.msra.mxu0 %v781
    %2998 = vmatprep.subr.mxu0 0.0
    %2999 = vmatpush1.msra.mxu0 %v782
    %3000 = vmatprep.subr.mxu0 0.0
    %3001 = vmatpush1.msra.mxu0 %v783
    %3002 = vmatprep.subr.mxu0 0.0
    %3003 = vmatpush1.msra.mxu0 %v784
    %3004 = vmatprep.subr.mxu0 0.0
    %3005 = vmatpush1.msra.mxu0 %v785
    %3006 = vmatprep.subr.mxu0 0.0
    %3007 = vmatpush1.msra.mxu0 %v786
    %3008 = vmatprep.subr.mxu0 0.0
    %3009 = vmatpush1.msra.mxu0 %v787
    %3010 = vmatprep.subr.mxu0 0.0
    %3011 = vmatpush1.msra.mxu0 %v788
    %3012 = vmatprep.subr.mxu0 0.0
    %3013 = vmatpush1.msra.mxu0 %v789
    %3014 = vmatprep.subr.mxu0 0.0
    %3015 = vmatpush1.msra.mxu0 %v790
    %3016 = vmatprep.subr.mxu0 0.0
    %3017 = vmatpush1.msra.mxu0 %v791
    %3018 = vmatprep.subr.mxu0 0.0
    %3019 = vmatpush1.msra.mxu0 %v792
    %3020 = vmatprep.subr.mxu0 0.0
    %3021 = vmatpush1.msra.mxu0 %v793
    %3022 = vmatprep.subr.mxu0 0.0
    %3023 = vmatpush1.msra.mxu0 %v794
    %3024 = vmatprep.subr.mxu0 0.0
    %3025 = vmatpush1.msra.mxu0 %v795
    %3026 = vmatprep.subr.mxu0 0.0
    %3027 = vmatpush1.msra.mxu0 %v796
    %3028 = vmatprep.subr.mxu0 0.0
    %3029 = vmatpush1.msra.mxu0 %v797
    %3030 = vmatprep.subr.mxu0 0.0
    %3031 = vmatpush1.msra.mxu0 %v798
    %3032 = vmatprep.subr.mxu0 0.0
    %3033 = vmatpush1.msra.mxu0 %v799
    %3034 = vmatprep.subr.mxu0 0.0
    %3035 = vmatpush1.msra.mxu0 %v800
    %3036 = vmatprep.subr.mxu0 0.0
    %3037 = vmatpush1.msra.mxu0 %v801
    %3038 = vmatprep.subr.mxu0 0.0
    %3039 = vmatpush1.msra.mxu0 %v802
    %3040 = vmatprep.subr.mxu0 0.0
    %3041 = vmatpush1.msra.mxu0 %v803
    %3042 = vmatprep.subr.mxu0 0.0
    %3043 = vmatpush1.msra.mxu0 %v804
    %3044 = vmatprep.subr.mxu0 0.0
    %3045 = vmatpush1.msra.mxu0 %v805
    %3046 = vmatprep.subr.mxu0 0.0
    %3047 = vmatpush1.msra.mxu0 %v806
    %3048 = vmatprep.subr.mxu0 0.0
    %3049 = vmatpush1.msra.mxu0 %v807
    %3050 = vmatprep.subr.mxu0 0.0
    %3051 = vmatpush1.msra.mxu0 %v808
    %3052 = vmatprep.subr.mxu0 0.0
    %3053 = vmatpush1.msra.mxu0 %v809
    %3054 = vmatprep.mubr.f32.mxu0 %v1316
    %3055 = vmatmul.mubr.f32.gmra.mrb[0].mxu0 %v1308
    %v3056 = vpop.f32.mrb[0].mxu0
    %v3057 = vadd.f32 %v2987, %v3056
    %v3058 = vpop.f32.mrb[0].mxu0
    %3059 = vdwg.mxu0
    %3060 = vmatprep.subr.mxu0 0.0
    %3061 = vmatpush1.msra.mxu0 %v810
    %3062 = vmatprep.subr.mxu0 0.0
    %3063 = vmatpush1.msra.mxu0 %v811
    %3064 = vmatprep.subr.mxu0 0.0
    %3065 = vmatpush1.msra.mxu0 %v812
    %3066 = vmatprep.subr.mxu0 0.0
    %3067 = vmatpush1.msra.mxu0 %v813
    %3068 = vmatprep.subr.mxu0 0.0
    %3069 = vmatpush1.msra.mxu0 %v814
    %3070 = vmatprep.subr.mxu0 0.0
    %3071 = vmatpush1.msra.mxu0 %v815
    %3072 = vmatprep.subr.mxu0 0.0
    %3073 = vmatpush1.msra.mxu0 %v816
    %3074 = vmatprep.subr.mxu0 0.0
    %3075 = vmatpush1.msra.mxu0 %v817
    %3076 = vmatprep.subr.mxu0 0.0
    %3077 = vmatpush1.msra.mxu0 %v818
    %3078 = vmatprep.subr.mxu0 0.0
    %3079 = vmatpush1.msra.mxu0 %v819
    %3080 = vmatprep.subr.mxu0 0.0
    %3081 = vmatpush1.msra.mxu0 %v820
    %3082 = vmatprep.subr.mxu0 0.0
    %3083 = vmatpush1.msra.mxu0 %v821
    %3084 = vmatprep.subr.mxu0 0.0
    %3085 = vmatpush1.msra.mxu0 %v822
    %3086 = vmatprep.subr.mxu0 0.0
    %3087 = vmatpush1.msra.mxu0 %v823
    %3088 = vmatprep.subr.mxu0 0.0
    %3089 = vmatpush1.msra.mxu0 %v824
    %3090 = vmatprep.subr.mxu0 0.0
    %3091 = vmatpush1.msra.mxu0 %v825
    %3092 = vmatprep.subr.mxu0 0.0
    %3093 = vmatpush1.msra.mxu0 %v826
    %3094 = vmatprep.subr.mxu0 0.0
    %3095 = vmatpush1.msra.mxu0 %v827
    %3096 = vmatprep.subr.mxu0 0.0
    %3097 = vmatpush1.msra.mxu0 %v828
    %3098 = vmatprep.subr.mxu0 0.0
    %3099 = vmatpush1.msra.mxu0 %v829
    %3100 = vmatprep.subr.mxu0 0.0
    %3101 = vmatpush1.msra.mxu0 %v830
    %3102 = vmatprep.subr.mxu0 0.0
    %3103 = vmatpush1.msra.mxu0 %v831
    %3104 = vmatprep.subr.mxu0 0.0
    %3105 = vmatpush1.msra.mxu0 %v832
    %3106 = vmatprep.subr.mxu0 0.0
    %3107 = vmatpush1.msra.mxu0 %v833
    %3108 = vmatprep.subr.mxu0 0.0
    %3109 = vmatpush1.msra.mxu0 %v834
    %3110 = vmatprep.subr.mxu0 0.0
    %3111 = vmatpush1.msra.mxu0 %v835
    %3112 = vmatprep.subr.mxu0 0.0
    %3113 = vmatpush1.msra.mxu0 %v836
    %3114 = vmatprep.subr.mxu0 0.0
    %3115 = vmatpush1.msra.mxu0 %v837
    %3116 = vmatprep.subr.mxu0 0.0
    %3117 = vmatpush1.msra.mxu0 %v838
    %3118 = vmatprep.subr.mxu0 0.0
    %3119 = vmatpush1.msra.mxu0 %v839
    %3120 = vmatprep.subr.mxu0 0.0
    %3121 = vmatpush1.msra.mxu0 %v840
    %3122 = vmatprep.subr.mxu0 0.0
    %3123 = vmatpush1.msra.mxu0 %v841
    %3124 = vmatprep.mubr.f32.mxu0 %v1317
    %3125 = vmatmul.mubr.f32.gmra.mrb[0].mxu0 %v1315
    %v3126 = vpop.f32.mrb[0].mxu0
    %v3127 = vadd.f32 %v3057, %v3126
    %v3128 = vpop.f32.mrb[0].mxu0
    %3129 = vdwg.mxu0
    %3130 = vmatprep.subr.mxu0 0.0
    %3131 = vmatpush1.msra.mxu0 %v842
    %3132 = vmatprep.subr.mxu0 0.0
    %3133 = vmatpush1.msra.mxu0 %v843
    %3134 = vmatprep.subr.mxu0 0.0
    %3135 = vmatpush1.msra.mxu0 %v844
    %3136 = vmatprep.subr.mxu0 0.0
    %3137 = vmatpush1.msra.mxu0 %v845
    %3138 = vmatprep.subr.mxu0 0.0
    %3139 = vmatpush1.msra.mxu0 %v846
    %3140 = vmatprep.subr.mxu0 0.0
    %3141 = vmatpush1.msra.mxu0 %v847
    %3142 = vmatprep.subr.mxu0 0.0
    %3143 = vmatpush1.msra.mxu0 %v848
    %3144 = vmatprep.subr.mxu0 0.0
    %3145 = vmatpush1.msra.mxu0 %v849
    %3146 = vmatprep.subr.mxu0 0.0
    %3147 = vmatpush1.msra.mxu0 %v850
    %3148 = vmatprep.subr.mxu0 0.0
    %3149 = vmatpush1.msra.mxu0 %v851
    %3150 = vmatprep.subr.mxu0 0.0
    %3151 = vmatpush1.msra.mxu0 %v852
    %3152 = vmatprep.subr.mxu0 0.0
    %3153 = vmatpush1.msra.mxu0 %v853
    %3154 = vmatprep.subr.mxu0 0.0
    %3155 = vmatpush1.msra.mxu0 %v854
    %3156 = vmatprep.subr.mxu0 0.0
    %3157 = vmatpush1.msra.mxu0 %v855
    %3158 = vmatprep.subr.mxu0 0.0
    %3159 = vmatpush1.msra.mxu0 %v856
    %3160 = vmatprep.subr.mxu0 0.0
    %3161 = vmatpush1.msra.mxu0 %v857
    %3162 = vmatprep.subr.mxu0 0.0
    %3163 = vmatpush1.msra.mxu0 %v858
    %3164 = vmatprep.subr.mxu0 0.0
    %3165 = vmatpush1.msra.mxu0 %v859
    %3166 = vmatprep.subr.mxu0 0.0
    %3167 = vmatpush1.msra.mxu0 %v860
    %3168 = vmatprep.subr.mxu0 0.0
    %3169 = vmatpush1.msra.mxu0 %v861
    %3170 = vmatprep.subr.mxu0 0.0
    %3171 = vmatpush1.msra.mxu0 %v862
    %3172 = vmatprep.subr.mxu0 0.0
    %3173 = vmatpush1.msra.mxu0 %v863
    %3174 = vmatprep.subr.mxu0 0.0
    %3175 = vmatpush1.msra.mxu0 %v864
    %3176 = vmatprep.subr.mxu0 0.0
    %3177 = vmatpush1.msra.mxu0 %v865
    %3178 = vmatprep.subr.mxu0 0.0
    %3179 = vmatpush1.msra.mxu0 %v866
    %3180 = vmatprep.subr.mxu0 0.0
    %3181 = vmatpush1.msra.mxu0 %v867
    %3182 = vmatprep.subr.mxu0 0.0
    %3183 = vmatpush1.msra.mxu0 %v868
    %3184 = vmatprep.subr.mxu0 0.0
    %3185 = vmatpush1.msra.mxu0 %v869
    %3186 = vmatprep.subr.mxu0 0.0
    %3187 = vmatpush1.msra.mxu0 %v870
    %3188 = vmatprep.subr.mxu0 0.0
    %3189 = vmatpush1.msra.mxu0 %v871
    %3190 = vmatprep.subr.mxu0 0.0
    %3191 = vmatpush1.msra.mxu0 %v872
    %3192 = vmatprep.subr.mxu0 0.0
    %3193 = vmatpush1.msra.mxu0 %v873
    %3194 = vmatprep.mubr.f32.mxu0 %v1333
    %3195 = vmatmul.mubr.f32.gmra.mrb[0].mxu0 %v1325
    %v3196 = vpop.f32.mrb[0].mxu0
    %v3197 = vadd.f32 %v3127, %v3196
    %v3198 = vpop.f32.mrb[0].mxu0
    %3199 = vdwg.mxu0
    %3200 = vmatprep.subr.mxu0 0.0
    %3201 = vmatpush1.msra.mxu0 %v874
    %3202 = vmatprep.subr.mxu0 0.0
    %3203 = vmatpush1.msra.mxu0 %v875
    %3204 = vmatprep.subr.mxu0 0.0
    %3205 = vmatpush1.msra.mxu0 %v876
    %3206 = vmatprep.subr.mxu0 0.0
    %3207 = vmatpush1.msra.mxu0 %v877
    %3208 = vmatprep.subr.mxu0 0.0
    %3209 = vmatpush1.msra.mxu0 %v878
    %3210 = vmatprep.subr.mxu0 0.0
    %3211 = vmatpush1.msra.mxu0 %v879
    %3212 = vmatprep.subr.mxu0 0.0
    %3213 = vmatpush1.msra.mxu0 %v880
    %3214 = vmatprep.subr.mxu0 0.0
    %3215 = vmatpush1.msra.mxu0 %v881
    %3216 = vmatprep.subr.mxu0 0.0
    %3217 = vmatpush1.msra.mxu0 %v882
    %3218 = vmatprep.subr.mxu0 0.0
    %3219 = vmatpush1.msra.mxu0 %v883
    %3220 = vmatprep.subr.mxu0 0.0
    %3221 = vmatpush1.msra.mxu0 %v884
    %3222 = vmatprep.subr.mxu0 0.0
    %3223 = vmatpush1.msra.mxu0 %v885
    %3224 = vmatprep.subr.mxu0 0.0
    %3225 = vmatpush1.msra.mxu0 %v886
    %3226 = vmatprep.subr.mxu0 0.0
    %3227 = vmatpush1.msra.mxu0 %v887
    %3228 = vmatprep.subr.mxu0 0.0
    %3229 = vmatpush1.msra.mxu0 %v888
    %3230 = vmatprep.subr.mxu0 0.0
    %3231 = vmatpush1.msra.mxu0 %v889
    %3232 = vmatprep.subr.mxu0 0.0
    %3233 = vmatpush1.msra.mxu0 %v890
    %3234 = vmatprep.subr.mxu0 0.0
    %3235 = vmatpush1.msra.mxu0 %v891
    %3236 = vmatprep.subr.mxu0 0.0
    %3237 = vmatpush1.msra.mxu0 %v892
    %3238 = vmatprep.subr.mxu0 0.0
    %3239 = vmatpush1.msra.mxu0 %v893
    %3240 = vmatprep.subr.mxu0 0.0
    %3241 = vmatpush1.msra.mxu0 %v894
    %3242 = vmatprep.subr.mxu0 0.0
    %3243 = vmatpush1.msra.mxu0 %v895
    %3244 = vmatprep.subr.mxu0 0.0
    %3245 = vmatpush1.msra.mxu0 %v896
    %3246 = vmatprep.subr.mxu0 0.0
    %3247 = vmatpush1.msra.mxu0 %v897
    %3248 = vmatprep.subr.mxu0 0.0
    %3249 = vmatpush1.msra.mxu0 %v898
    %3250 = vmatprep.subr.mxu0 0.0
    %3251 = vmatpush1.msra.mxu0 %v899
    %3252 = vmatprep.subr.mxu0 0.0
    %3253 = vmatpush1.msra.mxu0 %v900
    %3254 = vmatprep.subr.mxu0 0.0
    %3255 = vmatpush1.msra.mxu0 %v901
    %3256 = vmatprep.subr.mxu0 0.0
    %3257 = vmatpush1.msra.mxu0 %v902
    %3258 = vmatprep.subr.mxu0 0.0
    %3259 = vmatpush1.msra.mxu0 %v903
    %3260 = vmatprep.subr.mxu0 0.0
    %3261 = vmatpush1.msra.mxu0 %v904
    %3262 = vmatprep.subr.mxu0 0.0
    %3263 = vmatpush1.msra.mxu0 %v905
    %3264 = vmatprep.mubr.f32.mxu0 %v1334
    %3265 = vmatmul.mubr.f32.gmra.mrb[0].mxu0 %v1332
    %v3266 = vpop.f32.mrb[0].mxu0
    %v3267 = vadd.f32 %v3197, %v3266
    %v3268 = vpop.f32.mrb[0].mxu0
    %3269 = vdwg.mxu0
    %3270 = vmatprep.subr.mxu0 0.0
    %3271 = vmatpush1.msra.mxu0 %v906
    %3272 = vmatprep.subr.mxu0 0.0
    %3273 = vmatpush1.msra.mxu0 %v907
    %3274 = vmatprep.subr.mxu0 0.0
    %3275 = vmatpush1.msra.mxu0 %v908
    %3276 = vmatprep.subr.mxu0 0.0
    %3277 = vmatpush1.msra.mxu0 %v909
    %3278 = vmatprep.subr.mxu0 0.0
    %3279 = vmatpush1.msra.mxu0 %v910
    %3280 = vmatprep.subr.mxu0 0.0
    %3281 = vmatpush1.msra.mxu0 %v911
    %3282 = vmatprep.subr.mxu0 0.0
    %3283 = vmatpush1.msra.mxu0 %v912
    %3284 = vmatprep.subr.mxu0 0.0
    %3285 = vmatpush1.msra.mxu0 %v913
    %3286 = vmatprep.subr.mxu0 0.0
    %3287 = vmatpush1.msra.mxu0 %v914
    %3288 = vmatprep.subr.mxu0 0.0
    %3289 = vmatpush1.msra.mxu0 %v915
    %3290 = vmatprep.subr.mxu0 0.0
    %3291 = vmatpush1.msra.mxu0 %v916
    %3292 = vmatprep.subr.mxu0 0.0
    %3293 = vmatpush1.msra.mxu0 %v917
    %3294 = vmatprep.subr.mxu0 0.0
    %3295 = vmatpush1.msra.mxu0 %v918
    %3296 = vmatprep.subr.mxu0 0.0
    %3297 = vmatpush1.msra.mxu0 %v919
    %3298 = vmatprep.subr.mxu0 0.0
    %3299 = vmatpush1.msra.mxu0 %v920
    %3300 = vmatprep.subr.mxu0 0.0
    %3301 = vmatpush1.msra.mxu0 %v921
    %3302 = vmatprep.subr.mxu0 0.0
    %3303 = vmatpush1.msra.mxu0 %v922
    %3304 = vmatprep.subr.mxu0 0.0
    %3305 = vmatpush1.msra.mxu0 %v923
    %3306 = vmatprep.subr.mxu0 0.0
    %3307 = vmatpush1.msra.mxu0 %v924
    %3308 = vmatprep.subr.mxu0 0.0
    %3309 = vmatpush1.msra.mxu0 %v925
    %3310 = vmatprep.subr.mxu0 0.0
    %3311 = vmatpush1.msra.mxu0 %v926
    %3312 = vmatprep.subr.mxu0 0.0
    %3313 = vmatpush1.msra.mxu0 %v927
    %3314 = vmatprep.subr.mxu0 0.0
    %3315 = vmatpush1.msra.mxu0 %v928
    %3316 = vmatprep.subr.mxu0 0.0
    %3317 = vmatpush1.msra.mxu0 %v929
    %3318 = vmatprep.subr.mxu0 0.0
    %3319 = vmatpush1.msra.mxu0 %v930
    %3320 = vmatprep.subr.mxu0 0.0
    %3321 = vmatpush1.msra.mxu0 %v931
    %3322 = vmatprep.subr.mxu0 0.0
    %3323 = vmatpush1.msra.mxu0 %v932
    %3324 = vmatprep.subr.mxu0 0.0
    %3325 = vmatpush1.msra.mxu0 %v933
    %3326 = vmatprep.subr.mxu0 0.0
    %3327 = vmatpush1.msra.mxu0 %v934
    %3328 = vmatprep.subr.mxu0 0.0
    %3329 = vmatpush1.msra.mxu0 %v935
    %3330 = vmatprep.subr.mxu0 0.0
    %3331 = vmatpush1.msra.mxu0 %v936
    %3332 = vmatprep.subr.mxu0 0.0
    %3333 = vmatpush1.msra.mxu0 %v937
    %3334 = vmatprep.mubr.f32.mxu0 %v1350
    %3335 = vmatmul.mubr.f32.gmra.mrb[0].mxu0 %v1342
    %v3336 = vpop.f32.mrb[0].mxu0
    %v3337 = vadd.f32 %v3267, %v3336
    %v3338 = vpop.f32.mrb[0].mxu0
    %3339 = vdwg.mxu0
    %3340 = vmatprep.subr.mxu0 0.0
    %3341 = vmatpush1.msra.mxu0 %v938
    %3342 = vmatprep.subr.mxu0 0.0
    %3343 = vmatpush1.msra.mxu0 %v939
    %3344 = vmatprep.subr.mxu0 0.0
    %3345 = vmatpush1.msra.mxu0 %v940
    %3346 = vmatprep.subr.mxu0 0.0
    %3347 = vmatpush1.msra.mxu0 %v941
    %3348 = vmatprep.subr.mxu0 0.0
    %3349 = vmatpush1.msra.mxu0 %v942
    %3350 = vmatprep.subr.mxu0 0.0
    %3351 = vmatpush1.msra.mxu0 %v943
    %3352 = vmatprep.subr.mxu0 0.0
    %3353 = vmatpush1.msra.mxu0 %v944
    %3354 = vmatprep.subr.mxu0 0.0
    %3355 = vmatpush1.msra.mxu0 %v945
    %3356 = vmatprep.subr.mxu0 0.0
    %3357 = vmatpush1.msra.mxu0 %v946
    %3358 = vmatprep.subr.mxu0 0.0
    %3359 = vmatpush1.msra.mxu0 %v947
    %3360 = vmatprep.subr.mxu0 0.0
    %3361 = vmatpush1.msra.mxu0 %v948
    %3362 = vmatprep.subr.mxu0 0.0
    %3363 = vmatpush1.msra.mxu0 %v949
    %3364 = vmatprep.subr.mxu0 0.0
    %3365 = vmatpush1.msra.mxu0 %v950
    %3366 = vmatprep.subr.mxu0 0.0
    %3367 = vmatpush1.msra.mxu0 %v951
    %3368 = vmatprep.subr.mxu0 0.0
    %3369 = vmatpush1.msra.mxu0 %v952
    %3370 = vmatprep.subr.mxu0 0.0
    %3371 = vmatpush1.msra.mxu0 %v953
    %3372 = vmatprep.subr.mxu0 0.0
    %3373 = vmatpush1.msra.mxu0 %v954
    %3374 = vmatprep.subr.mxu0 0.0
    %3375 = vmatpush1.msra.mxu0 %v955
    %3376 = vmatprep.subr.mxu0 0.0
    %3377 = vmatpush1.msra.mxu0 %v956
    %3378 = vmatprep.subr.mxu0 0.0
    %3379 = vmatpush1.msra.mxu0 %v957
    %3380 = vmatprep.subr.mxu0 0.0
    %3381 = vmatpush1.msra.mxu0 %v958
    %3382 = vmatprep.subr.mxu0 0.0
    %3383 = vmatpush1.msra.mxu0 %v959
    %3384 = vmatprep.subr.mxu0 0.0
    %3385 = vmatpush1.msra.mxu0 %v960
    %3386 = vmatprep.subr.mxu0 0.0
    %3387 = vmatpush1.msra.mxu0 %v961
    %3388 = vmatprep.subr.mxu0 0.0
    %3389 = vmatpush1.msra.mxu0 %v962
    %3390 = vmatprep.subr.mxu0 0.0
    %3391 = vmatpush1.msra.mxu0 %v963
    %3392 = vmatprep.subr.mxu0 0.0
    %3393 = vmatpush1.msra.mxu0 %v964
    %3394 = vmatprep.subr.mxu0 0.0
    %3395 = vmatpush1.msra.mxu0 %v965
    %3396 = vmatprep.subr.mxu0 0.0
    %3397 = vmatpush1.msra.mxu0 %v966
    %3398 = vmatprep.subr.mxu0 0.0
    %3399 = vmatpush1.msra.mxu0 %v967
    %3400 = vmatprep.subr.mxu0 0.0
    %3401 = vmatpush1.msra.mxu0 %v968
    %3402 = vmatprep.subr.mxu0 0.0
    %3403 = vmatpush1.msra.mxu0 %v969
    %3404 = vmatprep.mubr.f32.mxu0 %v1351
    %3405 = vmatmul.mubr.f32.gmra.mrb[0].mxu0 %v1349
    %v3406 = vpop.f32.mrb[0].mxu0
    %v3407 = vadd.f32 %v3337, %v3406
    %v3408 = vpop.f32.mrb[0].mxu0
    %3409 = vdwg.mxu0
    %3410 = vmatprep.subr.mxu0 0.0
    %3411 = vmatpush1.msra.mxu0 %v970
    %3412 = vmatprep.subr.mxu0 0.0
    %3413 = vmatpush1.msra.mxu0 %v971
    %3414 = vmatprep.subr.mxu0 0.0
    %3415 = vmatpush1.msra.mxu0 %v972
    %3416 = vmatprep.subr.mxu0 0.0
    %3417 = vmatpush1.msra.mxu0 %v973
    %3418 = vmatprep.subr.mxu0 0.0
    %3419 = vmatpush1.msra.mxu0 %v974
    %3420 = vmatprep.subr.mxu0 0.0
    %3421 = vmatpush1.msra.mxu0 %v975
    %3422 = vmatprep.subr.mxu0 0.0
    %3423 = vmatpush1.msra.mxu0 %v976
    %3424 = vmatprep.subr.mxu0 0.0
    %3425 = vmatpush1.msra.mxu0 %v977
    %3426 = vmatprep.subr.mxu0 0.0
    %3427 = vmatpush1.msra.mxu0 %v978
    %3428 = vmatprep.subr.mxu0 0.0
    %3429 = vmatpush1.msra.mxu0 %v979
    %3430 = vmatprep.subr.mxu0 0.0
    %3431 = vmatpush1.msra.mxu0 %v980
    %3432 = vmatprep.subr.mxu0 0.0
    %3433 = vmatpush1.msra.mxu0 %v981
    %3434 = vmatprep.subr.mxu0 0.0
    %3435 = vmatpush1.msra.mxu0 %v982
    %3436 = vmatprep.subr.mxu0 0.0
    %3437 = vmatpush1.msra.mxu0 %v983
    %3438 = vmatprep.subr.mxu0 0.0
    %3439 = vmatpush1.msra.mxu0 %v984
    %3440 = vmatprep.subr.mxu0 0.0
    %3441 = vmatpush1.msra.mxu0 %v985
    %3442 = vmatprep.subr.mxu0 0.0
    %3443 = vmatpush1.msra.mxu0 %v986
    %3444 = vmatprep.subr.mxu0 0.0
    %3445 = vmatpush1.msra.mxu0 %v987
    %3446 = vmatprep.subr.mxu0 0.0
    %3447 = vmatpush1.msra.mxu0 %v988
    %3448 = vmatprep.subr.mxu0 0.0
    %3449 = vmatpush1.msra.mxu0 %v989
    %3450 = vmatprep.subr.mxu0 0.0
    %3451 = vmatpush1.msra.mxu0 %v990
    %3452 = vmatprep.subr.mxu0 0.0
    %3453 = vmatpush1.msra.mxu0 %v991
    %3454 = vmatprep.subr.mxu0 0.0
    %3455 = vmatpush1.msra.mxu0 %v992
    %3456 = vmatprep.subr.mxu0 0.0
    %3457 = vmatpush1.msra.mxu0 %v993
    %3458 = vmatprep.subr.mxu0 0.0
    %3459 = vmatpush1.msra.mxu0 %v994
    %3460 = vmatprep.subr.mxu0 0.0
    %3461 = vmatpush1.msra.mxu0 %v995
    %3462 = vmatprep.subr.mxu0 0.0
    %3463 = vmatpush1.msra.mxu0 %v996
    %3464 = vmatprep.subr.mxu0 0.0
    %3465 = vmatpush1.msra.mxu0 %v997
    %3466 = vmatprep.subr.mxu0 0.0
    %3467 = vmatpush1.msra.mxu0 %v998
    %3468 = vmatprep.subr.mxu0 0.0
    %3469 = vmatpush1.msra.mxu0 %v999
    %3470 = vmatprep.subr.mxu0 0.0
    %3471 = vmatpush1.msra.mxu0 %v1000
    %3472 = vmatprep.subr.mxu0 0.0
    %3473 = vmatpush1.msra.mxu0 %v1001
    %3474 = vmatprep.mubr.f32.mxu0 %v1367
    %3475 = vmatmul.mubr.f32.gmra.mrb[0].mxu0 %v1359
    %v3476 = vpop.f32.mrb[0].mxu0
    %v3477 = vadd.f32 %v3407, %v3476
    %v3478 = vpop.f32.mrb[0].mxu0
    %3479 = vdwg.mxu0
    %3480 = vmatprep.subr.mxu0 0.0
    %3481 = vmatpush1.msra.mxu0 %v1002
    %3482 = vmatprep.subr.mxu0 0.0
    %3483 = vmatpush1.msra.mxu0 %v1003
    %3484 = vmatprep.subr.mxu0 0.0
    %3485 = vmatpush1.msra.mxu0 %v1004
    %3486 = vmatprep.subr.mxu0 0.0
    %3487 = vmatpush1.msra.mxu0 %v1005
    %3488 = vmatprep.subr.mxu0 0.0
    %3489 = vmatpush1.msra.mxu0 %v1006
    %3490 = vmatprep.subr.mxu0 0.0
    %3491 = vmatpush1.msra.mxu0 %v1007
    %3492 = vmatprep.subr.mxu0 0.0
    %3493 = vmatpush1.msra.mxu0 %v1008
    %3494 = vmatprep.subr.mxu0 0.0
    %3495 = vmatpush1.msra.mxu0 %v1009
    %3496 = vmatprep.subr.mxu0 0.0
    %3497 = vmatpush1.msra.mxu0 %v1010
    %3498 = vmatprep.subr.mxu0 0.0
    %3499 = vmatpush1.msra.mxu0 %v1011
    %3500 = vmatprep.subr.mxu0 0.0
    %3501 = vmatpush1.msra.mxu0 %v1012
    %3502 = vmatprep.subr.mxu0 0.0
    %3503 = vmatpush1.msra.mxu0 %v1013
    %3504 = vmatprep.subr.mxu0 0.0
    %3505 = vmatpush1.msra.mxu0 %v1014
    %3506 = vmatprep.subr.mxu0 0.0
    %3507 = vmatpush1.msra.mxu0 %v1015
    %3508 = vmatprep.subr.mxu0 0.0
    %3509 = vmatpush1.msra.mxu0 %v1016
    %3510 = vmatprep.subr.mxu0 0.0
    %3511 = vmatpush1.msra.mxu0 %v1017
    %3512 = vmatprep.subr.mxu0 0.0
    %3513 = vmatpush1.msra.mxu0 %v1018
    %3514 = vmatprep.subr.mxu0 0.0
    %3515 = vmatpush1.msra.mxu0 %v1019
    %3516 = vmatprep.subr.mxu0 0.0
    %3517 = vmatpush1.msra.mxu0 %v1020
    %3518 = vmatprep.subr.mxu0 0.0
    %3519 = vmatpush1.msra.mxu0 %v1021
    %3520 = vmatprep.subr.mxu0 0.0
    %3521 = vmatpush1.msra.mxu0 %v1022
    %3522 = vmatprep.subr.mxu0 0.0
    %3523 = vmatpush1.msra.mxu0 %v1023
    %3524 = vmatprep.subr.mxu0 0.0
    %3525 = vmatpush1.msra.mxu0 %v1024
    %3526 = vmatprep.subr.mxu0 0.0
    %3527 = vmatpush1.msra.mxu0 %v1025
    %3528 = vmatprep.subr.mxu0 0.0
    %3529 = vmatpush1.msra.mxu0 %v1026
    %3530 = vmatprep.subr.mxu0 0.0
    %3531 = vmatpush1.msra.mxu0 %v1027
    %3532 = vmatprep.subr.mxu0 0.0
    %3533 = vmatpush1.msra.mxu0 %v1028
    %3534 = vmatprep.subr.mxu0 0.0
    %3535 = vmatpush1.msra.mxu0 %v1029
    %3536 = vmatprep.subr.mxu0 0.0
    %3537 = vmatpush1.msra.mxu0 %v1030
    %3538 = vmatprep.subr.mxu0 0.0
    %3539 = vmatpush1.msra.mxu0 %v1031
    %3540 = vmatprep.subr.mxu0 0.0
    %3541 = vmatpush1.msra.mxu0 %v1032
    %3542 = vmatprep.subr.mxu0 0.0
    %3543 = vmatpush1.msra.mxu0 %v1033
    %3544 = vmatprep.mubr.f32.mxu0 %v1368
    %3545 = vmatmul.mubr.f32.gmra.mrb[0].mxu0 %v1366
    %v3546 = vpop.f32.mrb[0].mxu0
    %v3547 = vadd.f32 %v3477, %v3546
    %v3548 = vpop.f32.mrb[0].mxu0
    %3549 = vdwg.mxu0
    %3550 = vmatprep.subr.mxu0 0.0
    %3551 = vmatpush1.msra.mxu0 %v1034
    %3552 = vmatprep.subr.mxu0 0.0
    %3553 = vmatpush1.msra.mxu0 %v1035
    %3554 = vmatprep.subr.mxu0 0.0
    %3555 = vmatpush1.msra.mxu0 %v1036
    %3556 = vmatprep.subr.mxu0 0.0
    %3557 = vmatpush1.msra.mxu0 %v1037
    %3558 = vmatprep.subr.mxu0 0.0
    %3559 = vmatpush1.msra.mxu0 %v1038
    %3560 = vmatprep.subr.mxu0 0.0
    %3561 = vmatpush1.msra.mxu0 %v1039
    %3562 = vmatprep.subr.mxu0 0.0
    %3563 = vmatpush1.msra.mxu0 %v1040
    %3564 = vmatprep.subr.mxu0 0.0
    %3565 = vmatpush1.msra.mxu0 %v1041
    %3566 = vmatprep.subr.mxu0 0.0
    %3567 = vmatpush1.msra.mxu0 %v1042
    %3568 = vmatprep.subr.mxu0 0.0
    %3569 = vmatpush1.msra.mxu0 %v1043
    %3570 = vmatprep.subr.mxu0 0.0
    %3571 = vmatpush1.msra.mxu0 %v1044
    %3572 = vmatprep.subr.mxu0 0.0
    %3573 = vmatpush1.msra.mxu0 %v1045
    %3574 = vmatprep.subr.mxu0 0.0
    %3575 = vmatpush1.msra.mxu0 %v1046
    %3576 = vmatprep.subr.mxu0 0.0
    %3577 = vmatpush1.msra.mxu0 %v1047
    %3578 = vmatprep.subr.mxu0 0.0
    %3579 = vmatpush1.msra.mxu0 %v1048
    %3580 = vmatprep.subr.mxu0 0.0
    %3581 = vmatpush1.msra.mxu0 %v1049
    %3582 = vmatprep.subr.mxu0 0.0
    %3583 = vmatpush1.msra.mxu0 %v1050
    %3584 = vmatprep.subr.mxu0 0.0
    %3585 = vmatpush1.msra.mxu0 %v1051
    %3586 = vmatprep.subr.mxu0 0.0
    %3587 = vmatpush1.msra.mxu0 %v1052
    %3588 = vmatprep.subr.mxu0 0.0
    %3589 = vmatpush1.msra.mxu0 %v1053
    %3590 = vmatprep.subr.mxu0 0.0
    %3591 = vmatpush1.msra.mxu0 %v1054
    %3592 = vmatprep.subr.mxu0 0.0
    %3593 = vmatpush1.msra.mxu0 %v1055
    %3594 = vmatprep.subr.mxu0 0.0
    %3595 = vmatpush1.msra.mxu0 %v1056
    %3596 = vmatprep.subr.mxu0 0.0
    %3597 = vmatpush1.msra.mxu0 %v1057
    %3598 = vmatprep.subr.mxu0 0.0
    %3599 = vmatpush1.msra.mxu0 %v1058
    %3600 = vmatprep.subr.mxu0 0.0
    %3601 = vmatpush1.msra.mxu0 %v1059
    %3602 = vmatprep.subr.mxu0 0.0
    %3603 = vmatpush1.msra.mxu0 %v1060
    %3604 = vmatprep.subr.mxu0 0.0
    %3605 = vmatpush1.msra.mxu0 %v1061
    %3606 = vmatprep.subr.mxu0 0.0
    %3607 = vmatpush1.msra.mxu0 %v1062
    %3608 = vmatprep.subr.mxu0 0.0
    %3609 = vmatpush1.msra.mxu0 %v1063
    %3610 = vmatprep.subr.mxu0 0.0
    %3611 = vmatpush1.msra.mxu0 %v1064
    %3612 = vmatprep.subr.mxu0 0.0
    %3613 = vmatpush1.msra.mxu0 %v1065
    %3614 = vmatprep.mubr.f32.mxu0 %v1384
    %3615 = vmatmul.mubr.f32.gmra.mrb[0].mxu0 %v1376
    %v3616 = vpop.f32.mrb[0].mxu0
    %v3617 = vadd.f32 %v3547, %v3616
    %v3618 = vpop.f32.mrb[0].mxu0
    %3619 = vdwg.mxu0
    %3620 = vmatprep.subr.mxu0 0.0
    %3621 = vmatpush1.msra.mxu0 %v1066
    %3622 = vmatprep.subr.mxu0 0.0
    %3623 = vmatpush1.msra.mxu0 %v1067
    %3624 = vmatprep.subr.mxu0 0.0
    %3625 = vmatpush1.msra.mxu0 %v1068
    %3626 = vmatprep.subr.mxu0 0.0
    %3627 = vmatpush1.msra.mxu0 %v1069
    %3628 = vmatprep.subr.mxu0 0.0
    %3629 = vmatpush1.msra.mxu0 %v1070
    %3630 = vmatprep.subr.mxu0 0.0
    %3631 = vmatpush1.msra.mxu0 %v1071
    %3632 = vmatprep.subr.mxu0 0.0
    %3633 = vmatpush1.msra.mxu0 %v1072
    %3634 = vmatprep.subr.mxu0 0.0
    %3635 = vmatpush1.msra.mxu0 %v1073
    %3636 = vmatprep.subr.mxu0 0.0
    %3637 = vmatpush1.msra.mxu0 %v1074
    %3638 = vmatprep.subr.mxu0 0.0
    %3639 = vmatpush1.msra.mxu0 %v1075
    %3640 = vmatprep.subr.mxu0 0.0
    %3641 = vmatpush1.msra.mxu0 %v1076
    %3642 = vmatprep.subr.mxu0 0.0
    %3643 = vmatpush1.msra.mxu0 %v1077
    %3644 = vmatprep.subr.mxu0 0.0
    %3645 = vmatpush1.msra.mxu0 %v1078
    %3646 = vmatprep.subr.mxu0 0.0
    %3647 = vmatpush1.msra.mxu0 %v1079
    %3648 = vmatprep.subr.mxu0 0.0
    %3649 = vmatpush1.msra.mxu0 %v1080
    %3650 = vmatprep.subr.mxu0 0.0
    %3651 = vmatpush1.msra.mxu0 %v1081
    %3652 = vmatprep.subr.mxu0 0.0
    %3653 = vmatpush1.msra.mxu0 %v1082
    %3654 = vmatprep.subr.mxu0 0.0
    %3655 = vmatpush1.msra.mxu0 %v1083
    %3656 = vmatprep.subr.mxu0 0.0
    %3657 = vmatpush1.msra.mxu0 %v1084
    %3658 = vmatprep.subr.mxu0 0.0
    %3659 = vmatpush1.msra.mxu0 %v1085
    %3660 = vmatprep.subr.mxu0 0.0
    %3661 = vmatpush1.msra.mxu0 %v1086
    %3662 = vmatprep.subr.mxu0 0.0
    %3663 = vmatpush1.msra.mxu0 %v1087
    %3664 = vmatprep.subr.mxu0 0.0
    %3665 = vmatpush1.msra.mxu0 %v1088
    %3666 = vmatprep.subr.mxu0 0.0
    %3667 = vmatpush1.msra.mxu0 %v1089
    %3668 = vmatprep.subr.mxu0 0.0
    %3669 = vmatpush1.msra.mxu0 %v1090
    %3670 = vmatprep.subr.mxu0 0.0
    %3671 = vmatpush1.msra.mxu0 %v1091
    %3672 = vmatprep.subr.mxu0 0.0
    %3673 = vmatpush1.msra.mxu0 %v1092
    %3674 = vmatprep.subr.mxu0 0.0
    %3675 = vmatpush1.msra.mxu0 %v1093
    %3676 = vmatprep.subr.mxu0 0.0
    %3677 = vmatpush1.msra.mxu0 %v1094
    %3678 = vmatprep.subr.mxu0 0.0
    %3679 = vmatpush1.msra.mxu0 %v1095
    %3680 = vmatprep.subr.mxu0 0.0
    %3681 = vmatpush1.msra.mxu0 %v1096
    %3682 = vmatprep.subr.mxu0 0.0
    %3683 = vmatpush1.msra.mxu0 %v1097
    %3684 = vmatprep.mubr.f32.mxu0 %v1385
    %3685 = vmatmul.mubr.f32.gmra.mrb[0].mxu0 %v1383
    %v3686 = vpop.f32.mrb[0].mxu0
    %v3687 = vadd.f32 %v3617, %v3686
    %v3688 = vpop.f32.mrb[0].mxu0
    %3689 = vdwg.mxu0
    %v3690 = vadd.f32 %v57, %v3687
    %3691 = vst [vmem:[#allocation2] sm:$0x3] %v3690
    // Predicated region
    $region30: #{tpu_custom_call.1} parent=1 // pred_check
      %p3692 = pneg %p52
    $region31: #{tpu_custom_call.1} parent=1 // pred_check_branch
      %3694 = sbr.rel (%p3692) target = $region33
    $region32: #{tpu_custom_call.1} parent=1 // pred_region
      %v3695 = vld [vmem:[#allocation2] sm:$0x3]
      %v3696 = vld [vmem:[#allocation8] sm:$0x1]
      %v3698 = vlaneseq
      %v3699 = vshrl.u32 %v3698, 7
      %v3700 = vsub.s32 0, %v3699
      %v3701 = vrot.slane %v3696, %v3700
      %v3703 = vadd.f32 %v3695, %v3701
      %3704 = vst [vmem:[#allocation9] sm:$0x3] %v3703
    $region33: #{tpu_custom_call.1} parent=1 // pred_fallthru
      _
    // Predicated region
    $region34: #{tpu_custom_call.1} parent=1 // pred_check
      _
    $region35: #{tpu_custom_call.1} parent=1 // pred_check_branch
      %3706 = sbr.rel (0) target = $region37
    $region36: #{tpu_custom_call.1} parent=1 // pred_region
      %s3708 = ssub.s32 32, 32
      %3709 = vsyncadd [#allocation5], %s3708
      %s3711 = sshll.u32 [#allocation9], 4
      %s3712 = int_to_ptr.vmem [resolvable:$true] %s3711
      %3714 = dma.vmem_to_hbm [thread:$0]  %s3712, 32, %s3, [#allocation5]
    $region37: #{tpu_custom_call.1} parent=1 // pred_fallthru
      _
    // Predicated region
    $region38: #{tpu_custom_call.1} parent=1 // pred_check
      _
    $region39: #{tpu_custom_call.1} parent=1 // pred_check_branch
      %3716 = sbr.rel (0) target = $region41
    $region40: #{tpu_custom_call.1} parent=1 // pred_region
      %3717 = dma.done [#allocation5], 32
    $region41: #{tpu_custom_call.1} parent=1 // pred_fallthru
      _
    %3718 = vsyncpa [#allocation4], 1
    %3719 = vsyncpa [#allocation7], 1
    %3720 = vsyncpa [#allocation5], 1

</llo_original>
